<compile_context>
chip_gen: v7x
topology: tpu7x:2x2x1
jax: 0.10.0
libtpu: 0.0.40
codegen_flags: <defaults>
</compile_context>

<pallas_src>
import functools

import numpy as np
import jax
import jax.numpy as jnp
from jax.experimental import pallas as pl
from jax.experimental.pallas import tpu as pltpu


def encoder_kernel(x_ref, w1_ref, b1_ref, w2_ref, b2_ref,
                   mask_dx0_ref, mask_dx2_ref, band_ref, sel_ref, o_ref, *, W):
    # x_ref        : (1, Cin, L)         bf16  flattened, zero-framed input block
    # w1_ref       : (9, Cout, Cin)      f32   conv1 weights, tap-major (dy*3+dx)
    # b1_ref       : (Cout, 1)           f32
    # w2_ref       : (9, Cout, Cout)     f32
    # b2_ref       : (Cout, 1)           f32
    # mask_dx0_ref : (1, L)              f32   0 at columns w == W-1 (left-tap halo)
    # mask_dx2_ref : (1, L)              f32   0 at columns w == 0   (right-tap halo)
    # band_ref     : (1, L)              f32   1 only on interior rows of the frame
    # sel_ref      : (L, bt*Ho*Wo)       f32   0/1 maxpool selection matrix
    # o_ref        : (1, Cout, bt*Ho*Wo) f32   lane-dense pooled output
    x = x_ref[0].astype(jnp.float32)                     # (Cin, L)
    m0 = mask_dx0_ref[...]
    m2 = mask_dx2_ref[...]
    band = band_ref[...]
    L = x.shape[-1]

    def conv3x3_relu(inp, w_ref, b_ref):
        # inp: (C_in, L) in the padded-frame layout; returns relu(conv + b): (C_out, L).
        src = (inp * m0, inp, inp * m2)                  # per-dx column-halo masking
        acc = None
        for dy in range(3):
            for dx in range(3):
                s = dy * W + dx - 1                      # tap[q] = src[q + s]
                tap = src[dx] if s == 0 else pltpu.roll(src[dx], (-s) % L, 1)
                part = jnp.dot(w_ref[dy * 3 + dx], tap,
                               preferred_element_type=jnp.float32)
                acc = part if acc is None else acc + part
        return jnp.maximum(acc + b_ref[...], 0.0)

    y1 = conv3x3_relu(x, w1_ref, b1_ref)                 # (Cout, L)
    # Re-embed conv1 output in the padded frame: shift down one row, zero the halo band.
    y1p = pltpu.roll(y1, W, 1) * band                    # (Cout, L)
    y2 = conv3x3_relu(y1p, w2_ref, b2_ref)               # (Cout, L)

    # 2x2 / stride-2 maxpool: max over the 4 in-window lanes, then compact the
    # (h even, w even) lanes into a dense slab via the 0/1 selection matmul.
    m = jnp.maximum(y2, pltpu.roll(y2, L - 1, 1))
    m = jnp.maximum(m, pltpu.roll(m, L - W, 1))
    o_ref[0] = jnp.dot(m, sel_ref[...], preferred_element_type=jnp.float32)


@jax.jit
def encoder_forward(x_nchw, w1, b1, w2, b2):
    B, Cin, H, W = x_nchw.shape
    Cout = w1.shape[-1]
    assert H % 2 == 0 and W % 2 == 0, "maxpool(2,2) path assumes even H and W"
    Ho, Wo = H // 2, W // 2
    HoWo = Ho * Wo

    frame = (H + 2) * W                                  # per-image frame (with H halo)
    Lp = ((frame + 127) // 128) * 128                    # 128-aligned per-image lanes

    # Batch block: keep >=2 grid steps when B allows (v7x megacore), lane budget ~2048.
    bt = max(1, min(B // 2 if B > 1 else 1, max(1, 2048 // Lp)))
    while B % bt:
        bt -= 1
    nblk = B // bt
    L = bt * Lp

    # ---- input prep: zero H-halo, flatten per image, pad to Lp, fold bt into lanes ----
    x_pad = jnp.pad(x_nchw.astype(jnp.float32), ((0, 0), (0, 0), (1, 1), (0, 0)))
    x_flat = x_pad.reshape(B, Cin, frame)
    x_flat = jnp.pad(x_flat, ((0, 0), (0, 0), (0, Lp - frame)))
    x_blk = (x_flat.reshape(nblk, bt, Cin, Lp)
             .transpose(0, 2, 1, 3)
             .reshape(nblk, Cin, L)
             .astype(jnp.bfloat16))                      # bf16 halves the input DMA

    # ---- weights: HWIO (3,3,Ci,Co) -> tap-major (9, Co, Ci) ----
    w1_k = jnp.transpose(w1.reshape(9, Cin, Cout), (0, 2, 1)).astype(jnp.float32)
    w2_k = jnp.transpose(w2.reshape(9, Cout, Cout), (0, 2, 1)).astype(jnp.float32)
    b1_k = b1.reshape(Cout, 1).astype(jnp.float32)
    b2_k = b2.reshape(Cout, 1).astype(jnp.float32)

    # ---- host-built lane masks and maxpool selection matrix (trace-time constants) ----
    lane = np.arange(L)
    l_img = lane % Lp
    w_col = l_img % W
    mask_dx0 = (w_col != W - 1).astype(np.float32)[None, :]
    mask_dx2 = (w_col != 0).astype(np.float32)[None, :]
    band = ((l_img >= W) & (l_img < (H + 1) * W)).astype(np.float32)[None, :]

    sel = np.zeros((L, bt * HoWo), np.float32)
    n = np.arange(bt * HoWo)
    b_l, r = n // HoWo, n % HoWo
    ho, wo = r // Wo, r % Wo
    sel[b_l * Lp + (2 * ho) * W + 2 * wo, n] = 1.0

    out_blk = pl.pallas_call(
        functools.partial(encoder_kernel, W=W),
        out_shape=jax.ShapeDtypeStruct((nblk, Cout, bt * HoWo), jnp.float32),
        grid_spec=pltpu.PrefetchScalarGridSpec(
            num_scalar_prefetch=0,
            grid=(nblk,),
            in_specs=[
                pl.BlockSpec((1, Cin, L), lambda i: (i, 0, 0)),
                pl.BlockSpec((9, Cout, Cin), lambda i: (0, 0, 0)),
                pl.BlockSpec((Cout, 1), lambda i: (0, 0)),
                pl.BlockSpec((9, Cout, Cout), lambda i: (0, 0, 0)),
                pl.BlockSpec((Cout, 1), lambda i: (0, 0)),
                pl.BlockSpec((1, L), lambda i: (0, 0)),
                pl.BlockSpec((1, L), lambda i: (0, 0)),
                pl.BlockSpec((1, L), lambda i: (0, 0)),
                pl.BlockSpec((L, bt * HoWo), lambda i: (0, 0)),
            ],
            out_specs=pl.BlockSpec((1, Cout, bt * HoWo), lambda i: (i, 0, 0)),
        ),
        compiler_params=pltpu.CompilerParams(
            dimension_semantics=("parallel",)),
    )(x_blk, w1_k, b1_k, w2_k, b2_k,
      jnp.asarray(mask_dx0), jnp.asarray(mask_dx2), jnp.asarray(band),
      jnp.asarray(sel))

    # (nblk, Cout, bt*Ho*Wo) -> PyTorch NCHW (B, Cout, Ho, Wo).
    out = (out_blk.reshape(nblk, Cout, bt, Ho, Wo)
           .transpose(0, 2, 1, 3, 4)
           .reshape(B, Cout, Ho, Wo))
    return out


def encoder_reference(x_nchw, w1, b1, w2, b2):
    """Pure-JAX f32 reference matching the PyTorch Encoder.forward."""
    dn = ('NCHW', 'HWIO', 'NCHW')
    y = jax.lax.conv_general_dilated(
        x_nchw, w1, window_strides=(1, 1), padding='SAME',
        dimension_numbers=jax.lax.conv_dimension_numbers(
            x_nchw.shape, w1.shape, dn))
    y = jax.nn.relu(y + b1.reshape(1, -1, 1, 1))
    y = jax.lax.conv_general_dilated(
        y, w2, window_strides=(1, 1), padding='SAME',
        dimension_numbers=jax.lax.conv_dimension_numbers(
            y.shape, w2.shape, dn))
    y = jax.nn.relu(y + b2.reshape(1, -1, 1, 1))
    y = jax.lax.reduce_window(
        y, -jnp.inf, jax.lax.max,
        window_dimensions=(1, 1, 2, 2), window_strides=(1, 1, 2, 2),
        padding='VALID')
    return y


if __name__ == "__main__":
    # Small deterministic setup: batch=2, in_channels=4, spatial=16, num_filters=8.
    B, Cin, H, W = 2, 4, 16, 16
    Cout = 8

    key = jax.random.PRNGKey(0)
    kx, kw1, kb1, kw2, kb2 = jax.random.split(key, 5)

    x = jax.random.normal(kx, (B, Cin, H, W), jnp.float32)
    # Deterministic synthetic parameters (HWIO weight layout).
    w1 = 0.1 * jax.random.normal(kw1, (3, 3, Cin, Cout), jnp.float32)
    b1 = 0.1 * jax.random.normal(kb1, (1, Cout), jnp.float32)
    w2 = 0.1 * jax.random.normal(kw2, (3, 3, Cout, Cout), jnp.float32)
    b2 = 0.1 * jax.random.normal(kb2, (1, Cout), jnp.float32)

    out = jax.block_until_ready(encoder_forward(x, w1, b1, w2, b2))
    ref = encoder_reference(x, w1, b1, w2, b2)

    assert out.shape == (B, Cout, H // 2, W // 2), out.shape
    # bf16 input DMA + MXU default precision -> loosen tolerance vs the f32 reference.
    max_err = float(jnp.max(jnp.abs(out - ref)))
    assert jnp.allclose(out, ref, atol=5e-2, rtol=5e-2), max_err

    print("KERNEL_OK")
</pallas_src>

<mosaic_0001>
module attributes {stable_mosaic.version = 11 : i64} {
  func.func @encoder_kernel(%arg0: i32, %arg1: memref<1x4x384xbf16, #tpu.memory_space<vmem>>, %arg2: memref<9x8x4xf32, #tpu.memory_space<vmem>>, %arg3: memref<8x1xf32, #tpu.memory_space<vmem>>, %arg4: memref<9x8x8xf32, #tpu.memory_space<vmem>>, %arg5: memref<8x1xf32, #tpu.memory_space<vmem>>, %arg6: memref<1x384xf32, #tpu.memory_space<vmem>>, %arg7: memref<1x384xf32, #tpu.memory_space<vmem>>, %arg8: memref<1x384xf32, #tpu.memory_space<vmem>>, %arg9: memref<384x64xf32, #tpu.memory_space<vmem>>, %arg10: memref<1x8x64xf32, #tpu.memory_space<vmem>>) attributes {dimension_semantics = [#tpu.dimension_semantics<parallel>], iteration_bounds = array<i64: 2>, scalar_prefetch = 0 : i64, scratch_operands = 0 : i64, tpu.core_type = #tpu.core_type<tc>, window_params = [{transform_indices = @transform_0, window_bounds = array<i64: 1, 4, 384>}, {pipeline_mode = #tpu.pipeline_mode<synchronous>, transform_indices = @transform_1, window_bounds = array<i64: 9, 8, 4>}, {pipeline_mode = #tpu.pipeline_mode<synchronous>, transform_indices = @transform_2, window_bounds = array<i64: 8, 1>}, {pipeline_mode = #tpu.pipeline_mode<synchronous>, transform_indices = @transform_3, window_bounds = array<i64: 9, 8, 8>}, {pipeline_mode = #tpu.pipeline_mode<synchronous>, transform_indices = @transform_4, window_bounds = array<i64: 8, 1>}, {pipeline_mode = #tpu.pipeline_mode<synchronous>, transform_indices = @transform_5, window_bounds = array<i64: 1, 384>}, {pipeline_mode = #tpu.pipeline_mode<synchronous>, transform_indices = @transform_6, window_bounds = array<i64: 1, 384>}, {pipeline_mode = #tpu.pipeline_mode<synchronous>, transform_indices = @transform_7, window_bounds = array<i64: 1, 384>}, {pipeline_mode = #tpu.pipeline_mode<synchronous>, transform_indices = @transform_8, window_bounds = array<i64: 384, 64>}, {transform_indices = @transform_9, window_bounds = array<i64: 1, 8, 64>}]} {
    %c0 = arith.constant 0 : index
    %c0_0 = arith.constant 0 : index
    %c0_1 = arith.constant 0 : index
    %0 = vector.load %arg1[%c0, %c0_0, %c0_1] : memref<1x4x384xbf16, #tpu.memory_space<vmem>>, vector<1x4x384xbf16>
    %1 = vector.shape_cast %0 : vector<1x4x384xbf16> to vector<4x384xbf16>
    %2 = arith.extf %1 : vector<4x384xbf16> to vector<4x384xf32>
    %c0_2 = arith.constant 0 : index
    %c0_3 = arith.constant 0 : index
    %3 = vector.load %arg6[%c0_2, %c0_3] : memref<1x384xf32, #tpu.memory_space<vmem>>, vector<1x384xf32>
    %c0_4 = arith.constant 0 : index
    %c0_5 = arith.constant 0 : index
    %4 = vector.load %arg7[%c0_4, %c0_5] : memref<1x384xf32, #tpu.memory_space<vmem>>, vector<1x384xf32>
    %c0_6 = arith.constant 0 : index
    %c0_7 = arith.constant 0 : index
    %5 = vector.load %arg8[%c0_6, %c0_7] : memref<1x384xf32, #tpu.memory_space<vmem>>, vector<1x384xf32>
    %6 = vector.broadcast %3 : vector<1x384xf32> to vector<4x384xf32>
    %7 = arith.mulf %2, %6 : vector<4x384xf32>
    %8 = vector.broadcast %4 : vector<1x384xf32> to vector<4x384xf32>
    %9 = arith.mulf %2, %8 : vector<4x384xf32>
    %c1_i32 = arith.constant 1 : i32
    %10 = tpu.dynamic_rotate %7 by %c1_i32 dim 1 : vector<4x384xf32>, i32 -> vector<4x384xf32>
    %c0_8 = arith.constant 0 : index
    %c0_9 = arith.constant 0 : index
    %c0_10 = arith.constant 0 : index
    %11 = vector.load %arg2[%c0_8, %c0_9, %c0_10] : memref<9x8x4xf32, #tpu.memory_space<vmem>>, vector<1x8x4xf32>
    %12 = vector.shape_cast %11 : vector<1x8x4xf32> to vector<8x4xf32>
    %cst = arith.constant dense<0.000000e+00> : vector<8x384xf32>
    %13 = tpu.matmul %12, %10, %cst {dimension_numbers = #tpu.dot_dimension_numbers<[1], [0], [0], [1], [0, 0, 1, 1], [], []>} : vector<8x4xf32>, vector<4x384xf32>, vector<8x384xf32> -> vector<8x384xf32>
    %c1 = arith.constant 1 : index
    %c0_11 = arith.constant 0 : index
    %c0_12 = arith.constant 0 : index
    %14 = vector.load %arg2[%c1, %c0_11, %c0_12] : memref<9x8x4xf32, #tpu.memory_space<vmem>>, vector<1x8x4xf32>
    %15 = vector.shape_cast %14 : vector<1x8x4xf32> to vector<8x4xf32>
    %cst_13 = arith.constant dense<0.000000e+00> : vector<8x384xf32>
    %16 = tpu.matmul %15, %2, %cst_13 {dimension_numbers = #tpu.dot_dimension_numbers<[1], [0], [0], [1], [0, 0, 1, 1], [], []>} : vector<8x4xf32>, vector<4x384xf32>, vector<8x384xf32> -> vector<8x384xf32>
    %17 = arith.addf %13, %16 : vector<8x384xf32>
    %c383_i32 = arith.constant 383 : i32
    %18 = tpu.dynamic_rotate %9 by %c383_i32 dim 1 : vector<4x384xf32>, i32 -> vector<4x384xf32>
    %c2 = arith.constant 2 : index
    %c0_14 = arith.constant 0 : index
    %c0_15 = arith.constant 0 : index
    %19 = vector.load %arg2[%c2, %c0_14, %c0_15] : memref<9x8x4xf32, #tpu.memory_space<vmem>>, vector<1x8x4xf32>
    %20 = vector.shape_cast %19 : vector<1x8x4xf32> to vector<8x4xf32>
    %cst_16 = arith.constant dense<0.000000e+00> : vector<8x384xf32>
    %21 = tpu.matmul %20, %18, %cst_16 {dimension_numbers = #tpu.dot_dimension_numbers<[1], [0], [0], [1], [0, 0, 1, 1], [], []>} : vector<8x4xf32>, vector<4x384xf32>, vector<8x384xf32> -> vector<8x384xf32>
    %22 = arith.addf %17, %21 : vector<8x384xf32>
    %c369_i32 = arith.constant 369 : i32
    %23 = tpu.dynamic_rotate %7 by %c369_i32 dim 1 : vector<4x384xf32>, i32 -> vector<4x384xf32>
    %c3 = arith.constant 3 : index
    %c0_17 = arith.constant 0 : index
    %c0_18 = arith.constant 0 : index
    %24 = vector.load %arg2[%c3, %c0_17, %c0_18] : memref<9x8x4xf32, #tpu.memory_space<vmem>>, vector<1x8x4xf32>
    %25 = vector.shape_cast %24 : vector<1x8x4xf32> to vector<8x4xf32>
    %cst_19 = arith.constant dense<0.000000e+00> : vector<8x384xf32>
    %26 = tpu.matmul %25, %23, %cst_19 {dimension_numbers = #tpu.dot_dimension_numbers<[1], [0], [0], [1], [0, 0, 1, 1], [], []>} : vector<8x4xf32>, vector<4x384xf32>, vector<8x384xf32> -> vector<8x384xf32>
    %27 = arith.addf %22, %26 : vector<8x384xf32>
    %c368_i32 = arith.constant 368 : i32
    %28 = tpu.dynamic_rotate %2 by %c368_i32 dim 1 : vector<4x384xf32>, i32 -> vector<4x384xf32>
    %c4 = arith.constant 4 : index
    %c0_20 = arith.constant 0 : index
    %c0_21 = arith.constant 0 : index
    %29 = vector.load %arg2[%c4, %c0_20, %c0_21] : memref<9x8x4xf32, #tpu.memory_space<vmem>>, vector<1x8x4xf32>
    %30 = vector.shape_cast %29 : vector<1x8x4xf32> to vector<8x4xf32>
    %cst_22 = arith.constant dense<0.000000e+00> : vector<8x384xf32>
    %31 = tpu.matmul %30, %28, %cst_22 {dimension_numbers = #tpu.dot_dimension_numbers<[1], [0], [0], [1], [0, 0, 1, 1], [], []>} : vector<8x4xf32>, vector<4x384xf32>, vector<8x384xf32> -> vector<8x384xf32>
    %32 = arith.addf %27, %31 : vector<8x384xf32>
    %c367_i32 = arith.constant 367 : i32
    %33 = tpu.dynamic_rotate %9 by %c367_i32 dim 1 : vector<4x384xf32>, i32 -> vector<4x384xf32>
    %c5 = arith.constant 5 : index
    %c0_23 = arith.constant 0 : index
    %c0_24 = arith.constant 0 : index
    %34 = vector.load %arg2[%c5, %c0_23, %c0_24] : memref<9x8x4xf32, #tpu.memory_space<vmem>>, vector<1x8x4xf32>
    %35 = vector.shape_cast %34 : vector<1x8x4xf32> to vector<8x4xf32>
    %cst_25 = arith.constant dense<0.000000e+00> : vector<8x384xf32>
    %36 = tpu.matmul %35, %33, %cst_25 {dimension_numbers = #tpu.dot_dimension_numbers<[1], [0], [0], [1], [0, 0, 1, 1], [], []>} : vector<8x4xf32>, vector<4x384xf32>, vector<8x384xf32> -> vector<8x384xf32>
    %37 = arith.addf %32, %36 : vector<8x384xf32>
    %c353_i32 = arith.constant 353 : i32
    %38 = tpu.dynamic_rotate %7 by %c353_i32 dim 1 : vector<4x384xf32>, i32 -> vector<4x384xf32>
    %c6 = arith.constant 6 : index
    %c0_26 = arith.constant 0 : index
    %c0_27 = arith.constant 0 : index
    %39 = vector.load %arg2[%c6, %c0_26, %c0_27] : memref<9x8x4xf32, #tpu.memory_space<vmem>>, vector<1x8x4xf32>
    %40 = vector.shape_cast %39 : vector<1x8x4xf32> to vector<8x4xf32>
    %cst_28 = arith.constant dense<0.000000e+00> : vector<8x384xf32>
    %41 = tpu.matmul %40, %38, %cst_28 {dimension_numbers = #tpu.dot_dimension_numbers<[1], [0], [0], [1], [0, 0, 1, 1], [], []>} : vector<8x4xf32>, vector<4x384xf32>, vector<8x384xf32> -> vector<8x384xf32>
    %42 = arith.addf %37, %41 : vector<8x384xf32>
    %c352_i32 = arith.constant 352 : i32
    %43 = tpu.dynamic_rotate %2 by %c352_i32 dim 1 : vector<4x384xf32>, i32 -> vector<4x384xf32>
    %c7 = arith.constant 7 : index
    %c0_29 = arith.constant 0 : index
    %c0_30 = arith.constant 0 : index
    %44 = vector.load %arg2[%c7, %c0_29, %c0_30] : memref<9x8x4xf32, #tpu.memory_space<vmem>>, vector<1x8x4xf32>
    %45 = vector.shape_cast %44 : vector<1x8x4xf32> to vector<8x4xf32>
    %cst_31 = arith.constant dense<0.000000e+00> : vector<8x384xf32>
    %46 = tpu.matmul %45, %43, %cst_31 {dimension_numbers = #tpu.dot_dimension_numbers<[1], [0], [0], [1], [0, 0, 1, 1], [], []>} : vector<8x4xf32>, vector<4x384xf32>, vector<8x384xf32> -> vector<8x384xf32>
    %47 = arith.addf %42, %46 : vector<8x384xf32>
    %c351_i32 = arith.constant 351 : i32
    %48 = tpu.dynamic_rotate %9 by %c351_i32 dim 1 : vector<4x384xf32>, i32 -> vector<4x384xf32>
    %c8 = arith.constant 8 : index
    %c0_32 = arith.constant 0 : index
    %c0_33 = arith.constant 0 : index
    %49 = vector.load %arg2[%c8, %c0_32, %c0_33] : memref<9x8x4xf32, #tpu.memory_space<vmem>>, vector<1x8x4xf32>
    %50 = vector.shape_cast %49 : vector<1x8x4xf32> to vector<8x4xf32>
    %cst_34 = arith.constant dense<0.000000e+00> : vector<8x384xf32>
    %51 = tpu.matmul %50, %48, %cst_34 {dimension_numbers = #tpu.dot_dimension_numbers<[1], [0], [0], [1], [0, 0, 1, 1], [], []>} : vector<8x4xf32>, vector<4x384xf32>, vector<8x384xf32> -> vector<8x384xf32>
    %52 = arith.addf %47, %51 : vector<8x384xf32>
    %c0_35 = arith.constant 0 : index
    %c0_36 = arith.constant 0 : index
    %53 = vector.load %arg3[%c0_35, %c0_36] : memref<8x1xf32, #tpu.memory_space<vmem>>, vector<8x1xf32>
    %54 = vector.broadcast %53 : vector<8x1xf32> to vector<8x384xf32>
    %55 = arith.addf %52, %54 : vector<8x384xf32>
    %cst_37 = arith.constant 0.000000e+00 : f32
    %56 = vector.broadcast %cst_37 : f32 to vector<8x384xf32>
    %57 = arith.maximumf %55, %56 : vector<8x384xf32>
    %c16_i32 = arith.constant 16 : i32
    %58 = tpu.dynamic_rotate %57 by %c16_i32 dim 1 : vector<8x384xf32>, i32 -> vector<8x384xf32>
    %59 = vector.broadcast %5 : vector<1x384xf32> to vector<8x384xf32>
    %60 = arith.mulf %58, %59 : vector<8x384xf32>
    %61 = vector.broadcast %3 : vector<1x384xf32> to vector<8x384xf32>
    %62 = arith.mulf %60, %61 : vector<8x384xf32>
    %63 = vector.broadcast %4 : vector<1x384xf32> to vector<8x384xf32>
    %64 = arith.mulf %60, %63 : vector<8x384xf32>
    %c1_i32_38 = arith.constant 1 : i32
    %65 = tpu.dynamic_rotate %62 by %c1_i32_38 dim 1 : vector<8x384xf32>, i32 -> vector<8x384xf32>
    %c0_39 = arith.constant 0 : index
    %c0_40 = arith.constant 0 : index
    %c0_41 = arith.constant 0 : index
    %66 = vector.load %arg4[%c0_39, %c0_40, %c0_41] : memref<9x8x8xf32, #tpu.memory_space<vmem>>, vector<1x8x8xf32>
    %67 = vector.shape_cast %66 : vector<1x8x8xf32> to vector<8x8xf32>
    %cst_42 = arith.constant dense<0.000000e+00> : vector<8x384xf32>
    %68 = tpu.matmul %67, %65, %cst_42 {dimension_numbers = #tpu.dot_dimension_numbers<[1], [0], [0], [1], [0, 0, 1, 1], [], []>} : vector<8x8xf32>, vector<8x384xf32>, vector<8x384xf32> -> vector<8x384xf32>
    %c1_43 = arith.constant 1 : index
    %c0_44 = arith.constant 0 : index
    %c0_45 = arith.constant 0 : index
    %69 = vector.load %arg4[%c1_43, %c0_44, %c0_45] : memref<9x8x8xf32, #tpu.memory_space<vmem>>, vector<1x8x8xf32>
    %70 = vector.shape_cast %69 : vector<1x8x8xf32> to vector<8x8xf32>
    %cst_46 = arith.constant dense<0.000000e+00> : vector<8x384xf32>
    %71 = tpu.matmul %70, %60, %cst_46 {dimension_numbers = #tpu.dot_dimension_numbers<[1], [0], [0], [1], [0, 0, 1, 1], [], []>} : vector<8x8xf32>, vector<8x384xf32>, vector<8x384xf32> -> vector<8x384xf32>
    %72 = arith.addf %68, %71 : vector<8x384xf32>
    %c383_i32_47 = arith.constant 383 : i32
    %73 = tpu.dynamic_rotate %64 by %c383_i32_47 dim 1 : vector<8x384xf32>, i32 -> vector<8x384xf32>
    %c2_48 = arith.constant 2 : index
    %c0_49 = arith.constant 0 : index
    %c0_50 = arith.constant 0 : index
    %74 = vector.load %arg4[%c2_48, %c0_49, %c0_50] : memref<9x8x8xf32, #tpu.memory_space<vmem>>, vector<1x8x8xf32>
    %75 = vector.shape_cast %74 : vector<1x8x8xf32> to vector<8x8xf32>
    %cst_51 = arith.constant dense<0.000000e+00> : vector<8x384xf32>
    %76 = tpu.matmul %75, %73, %cst_51 {dimension_numbers = #tpu.dot_dimension_numbers<[1], [0], [0], [1], [0, 0, 1, 1], [], []>} : vector<8x8xf32>, vector<8x384xf32>, vector<8x384xf32> -> vector<8x384xf32>
    %77 = arith.addf %72, %76 : vector<8x384xf32>
    %c369_i32_52 = arith.constant 369 : i32
    %78 = tpu.dynamic_rotate %62 by %c369_i32_52 dim 1 : vector<8x384xf32>, i32 -> vector<8x384xf32>
    %c3_53 = arith.constant 3 : index
    %c0_54 = arith.constant 0 : index
    %c0_55 = arith.constant 0 : index
    %79 = vector.load %arg4[%c3_53, %c0_54, %c0_55] : memref<9x8x8xf32, #tpu.memory_space<vmem>>, vector<1x8x8xf32>
    %80 = vector.shape_cast %79 : vector<1x8x8xf32> to vector<8x8xf32>
    %cst_56 = arith.constant dense<0.000000e+00> : vector<8x384xf32>
    %81 = tpu.matmul %80, %78, %cst_56 {dimension_numbers = #tpu.dot_dimension_numbers<[1], [0], [0], [1], [0, 0, 1, 1], [], []>} : vector<8x8xf32>, vector<8x384xf32>, vector<8x384xf32> -> vector<8x384xf32>
    %82 = arith.addf %77, %81 : vector<8x384xf32>
    %c368_i32_57 = arith.constant 368 : i32
    %83 = tpu.dynamic_rotate %60 by %c368_i32_57 dim 1 : vector<8x384xf32>, i32 -> vector<8x384xf32>
    %c4_58 = arith.constant 4 : index
    %c0_59 = arith.constant 0 : index
    %c0_60 = arith.constant 0 : index
    %84 = vector.load %arg4[%c4_58, %c0_59, %c0_60] : memref<9x8x8xf32, #tpu.memory_space<vmem>>, vector<1x8x8xf32>
    %85 = vector.shape_cast %84 : vector<1x8x8xf32> to vector<8x8xf32>
    %cst_61 = arith.constant dense<0.000000e+00> : vector<8x384xf32>
    %86 = tpu.matmul %85, %83, %cst_61 {dimension_numbers = #tpu.dot_dimension_numbers<[1], [0], [0], [1], [0, 0, 1, 1], [], []>} : vector<8x8xf32>, vector<8x384xf32>, vector<8x384xf32> -> vector<8x384xf32>
    %87 = arith.addf %82, %86 : vector<8x384xf32>
    %c367_i32_62 = arith.constant 367 : i32
    %88 = tpu.dynamic_rotate %64 by %c367_i32_62 dim 1 : vector<8x384xf32>, i32 -> vector<8x384xf32>
    %c5_63 = arith.constant 5 : index
    %c0_64 = arith.constant 0 : index
    %c0_65 = arith.constant 0 : index
    %89 = vector.load %arg4[%c5_63, %c0_64, %c0_65] : memref<9x8x8xf32, #tpu.memory_space<vmem>>, vector<1x8x8xf32>
    %90 = vector.shape_cast %89 : vector<1x8x8xf32> to vector<8x8xf32>
    %cst_66 = arith.constant dense<0.000000e+00> : vector<8x384xf32>
    %91 = tpu.matmul %90, %88, %cst_66 {dimension_numbers = #tpu.dot_dimension_numbers<[1], [0], [0], [1], [0, 0, 1, 1], [], []>} : vector<8x8xf32>, vector<8x384xf32>, vector<8x384xf32> -> vector<8x384xf32>
    %92 = arith.addf %87, %91 : vector<8x384xf32>
    %c353_i32_67 = arith.constant 353 : i32
    %93 = tpu.dynamic_rotate %62 by %c353_i32_67 dim 1 : vector<8x384xf32>, i32 -> vector<8x384xf32>
    %c6_68 = arith.constant 6 : index
    %c0_69 = arith.constant 0 : index
    %c0_70 = arith.constant 0 : index
    %94 = vector.load %arg4[%c6_68, %c0_69, %c0_70] : memref<9x8x8xf32, #tpu.memory_space<vmem>>, vector<1x8x8xf32>
    %95 = vector.shape_cast %94 : vector<1x8x8xf32> to vector<8x8xf32>
    %cst_71 = arith.constant dense<0.000000e+00> : vector<8x384xf32>
    %96 = tpu.matmul %95, %93, %cst_71 {dimension_numbers = #tpu.dot_dimension_numbers<[1], [0], [0], [1], [0, 0, 1, 1], [], []>} : vector<8x8xf32>, vector<8x384xf32>, vector<8x384xf32> -> vector<8x384xf32>
    %97 = arith.addf %92, %96 : vector<8x384xf32>
    %c352_i32_72 = arith.constant 352 : i32
    %98 = tpu.dynamic_rotate %60 by %c352_i32_72 dim 1 : vector<8x384xf32>, i32 -> vector<8x384xf32>
    %c7_73 = arith.constant 7 : index
    %c0_74 = arith.constant 0 : index
    %c0_75 = arith.constant 0 : index
    %99 = vector.load %arg4[%c7_73, %c0_74, %c0_75] : memref<9x8x8xf32, #tpu.memory_space<vmem>>, vector<1x8x8xf32>
    %100 = vector.shape_cast %99 : vector<1x8x8xf32> to vector<8x8xf32>
    %cst_76 = arith.constant dense<0.000000e+00> : vector<8x384xf32>
    %101 = tpu.matmul %100, %98, %cst_76 {dimension_numbers = #tpu.dot_dimension_numbers<[1], [0], [0], [1], [0, 0, 1, 1], [], []>} : vector<8x8xf32>, vector<8x384xf32>, vector<8x384xf32> -> vector<8x384xf32>
    %102 = arith.addf %97, %101 : vector<8x384xf32>
    %c351_i32_77 = arith.constant 351 : i32
    %103 = tpu.dynamic_rotate %64 by %c351_i32_77 dim 1 : vector<8x384xf32>, i32 -> vector<8x384xf32>
    %c8_78 = arith.constant 8 : index
    %c0_79 = arith.constant 0 : index
    %c0_80 = arith.constant 0 : index
    %104 = vector.load %arg4[%c8_78, %c0_79, %c0_80] : memref<9x8x8xf32, #tpu.memory_space<vmem>>, vector<1x8x8xf32>
    %105 = vector.shape_cast %104 : vector<1x8x8xf32> to vector<8x8xf32>
    %cst_81 = arith.constant dense<0.000000e+00> : vector<8x384xf32>
    %106 = tpu.matmul %105, %103, %cst_81 {dimension_numbers = #tpu.dot_dimension_numbers<[1], [0], [0], [1], [0, 0, 1, 1], [], []>} : vector<8x8xf32>, vector<8x384xf32>, vector<8x384xf32> -> vector<8x384xf32>
    %107 = arith.addf %102, %106 : vector<8x384xf32>
    %c0_82 = arith.constant 0 : index
    %c0_83 = arith.constant 0 : index
    %108 = vector.load %arg5[%c0_82, %c0_83] : memref<8x1xf32, #tpu.memory_space<vmem>>, vector<8x1xf32>
    %109 = vector.broadcast %108 : vector<8x1xf32> to vector<8x384xf32>
    %110 = arith.addf %107, %109 : vector<8x384xf32>
    %cst_84 = arith.constant 0.000000e+00 : f32
    %111 = vector.broadcast %cst_84 : f32 to vector<8x384xf32>
    %112 = arith.maximumf %110, %111 : vector<8x384xf32>
    %c383_i32_85 = arith.constant 383 : i32
    %113 = tpu.dynamic_rotate %112 by %c383_i32_85 dim 1 : vector<8x384xf32>, i32 -> vector<8x384xf32>
    %114 = arith.maximumf %112, %113 : vector<8x384xf32>
    %c368_i32_86 = arith.constant 368 : i32
    %115 = tpu.dynamic_rotate %114 by %c368_i32_86 dim 1 : vector<8x384xf32>, i32 -> vector<8x384xf32>
    %116 = arith.maximumf %114, %115 : vector<8x384xf32>
    %c0_87 = arith.constant 0 : index
    %c0_88 = arith.constant 0 : index
    %117 = vector.load %arg9[%c0_87, %c0_88] : memref<384x64xf32, #tpu.memory_space<vmem>>, vector<384x64xf32>
    %cst_89 = arith.constant dense<0.000000e+00> : vector<8x64xf32>
    %118 = tpu.matmul %116, %117, %cst_89 {dimension_numbers = #tpu.dot_dimension_numbers<[1], [0], [0], [1], [0, 0, 1, 1], [], []>} : vector<8x384xf32>, vector<384x64xf32>, vector<8x64xf32> -> vector<8x64xf32>
    %c0_90 = arith.constant 0 : index
    %c0_91 = arith.constant 0 : index
    %c0_92 = arith.constant 0 : index
    %119 = vector.load %arg10[%c0_90, %c0_91, %c0_92] : memref<1x8x64xf32, #tpu.memory_space<vmem>>, vector<1x8x64xf32>
    %120 = vector.shape_cast %119 : vector<1x8x64xf32> to vector<8x64xf32>
    %121 = vector.shape_cast %118 : vector<8x64xf32> to vector<1x8x64xf32>
    tpu.vector_store %arg10[%c0_90, %c0_91, %c0_92], %121 {strides = array<i32>} : memref<1x8x64xf32, #tpu.memory_space<vmem>>, vector<1x8x64xf32>,
    return
  }
  func.func @transform_0(%arg0: i32) -> (i32, i32, i32) {
    %c0_i32 = arith.constant 0 : i32
    %c0_i32_0 = arith.constant 0 : i32
    %c0_i32_1 = arith.constant 0 : i32
    return %arg0, %c0_i32, %c0_i32_0 : i32, i32, i32
  }
  func.func @transform_1(%arg0: i32) -> (i32, i32, i32) {
    %c0_i32 = arith.constant 0 : i32
    %c0_i32_0 = arith.constant 0 : i32
    %c0_i32_1 = arith.constant 0 : i32
    %c0_i32_2 = arith.constant 0 : i32
    return %c0_i32, %c0_i32_0, %c0_i32_1 : i32, i32, i32
  }
  func.func @transform_2(%arg0: i32) -> (i32, i32) {
    %c0_i32 = arith.constant 0 : i32
    %c0_i32_0 = arith.constant 0 : i32
    %c0_i32_1 = arith.constant 0 : i32
    return %c0_i32, %c0_i32_0 : i32, i32
  }
  func.func @transform_3(%arg0: i32) -> (i32, i32, i32) {
    %c0_i32 = arith.constant 0 : i32
    %c0_i32_0 = arith.constant 0 : i32
    %c0_i32_1 = arith.constant 0 : i32
    %c0_i32_2 = arith.constant 0 : i32
    return %c0_i32, %c0_i32_0, %c0_i32_1 : i32, i32, i32
  }
  func.func @transform_4(%arg0: i32) -> (i32, i32) {
    %c0_i32 = arith.constant 0 : i32
    %c0_i32_0 = arith.constant 0 : i32
    %c0_i32_1 = arith.constant 0 : i32
    return %c0_i32, %c0_i32_0 : i32, i32
  }
  func.func @transform_5(%arg0: i32) -> (i32, i32) {
    %c0_i32 = arith.constant 0 : i32
    %c0_i32_0 = arith.constant 0 : i32
    %c0_i32_1 = arith.constant 0 : i32
    return %c0_i32, %c0_i32_0 : i32, i32
  }
  func.func @transform_6(%arg0: i32) -> (i32, i32) {
    %c0_i32 = arith.constant 0 : i32
    %c0_i32_0 = arith.constant 0 : i32
    %c0_i32_1 = arith.constant 0 : i32
    return %c0_i32, %c0_i32_0 : i32, i32
  }
  func.func @transform_7(%arg0: i32) -> (i32, i32) {
    %c0_i32 = arith.constant 0 : i32
    %c0_i32_0 = arith.constant 0 : i32
    %c0_i32_1 = arith.constant 0 : i32
    return %c0_i32, %c0_i32_0 : i32, i32
  }
  func.func @transform_8(%arg0: i32) -> (i32, i32) {
    %c0_i32 = arith.constant 0 : i32
    %c0_i32_0 = arith.constant 0 : i32
    %c0_i32_1 = arith.constant 0 : i32
    return %c0_i32, %c0_i32_0 : i32, i32
  }
  func.func @transform_9(%arg0: i32) -> (i32, i32, i32) {
    %c0_i32 = arith.constant 0 : i32
    %c0_i32_0 = arith.constant 0 : i32
    %c0_i32_1 = arith.constant 0 : i32
    return %arg0, %c0_i32, %c0_i32_0 : i32, i32, i32
  }
}

</mosaic_0001>

<llo_original>
// kernel: encoder_forward.1
$region0: #{encoder_forward.1}
  #allocation0 [shape = 'u32[]', space=smem, size = 0x4, offset = 0x4, fixed_abs, tag = 'smem constant byte address 0x4 - core index']
  #allocation1 [shape = 'u32[144,128]{1,0:T(1,128)}', space=vmem, size = 0x12000, scoped, tag = 'internal scratch']
  %s0 = inlined_call_operand.vmem [shape: bf16[2,4,384], index: 0, kind: input, shape index: {}]
  %s1 = inlined_call_operand.vmem [shape: f32[9,8,4], index: 1, kind: input, shape index: {}]
  %s2 = inlined_call_operand.vmem [shape: f32[8,1], index: 2, kind: input, shape index: {}]
  %s3 = inlined_call_operand.vmem [shape: f32[9,8,8], index: 3, kind: input, shape index: {}]
  %s4 = inlined_call_operand.vmem [shape: f32[8,1], index: 4, kind: input, shape index: {}]
  %s5 = inlined_call_operand.vmem [shape: f32[1,384], index: 5, kind: input, shape index: {}]
  %s6 = inlined_call_operand.vmem [shape: f32[1,384], index: 6, kind: input, shape index: {}]
  %s7 = inlined_call_operand.vmem [shape: f32[1,384], index: 7, kind: input, shape index: {}]
  %s8 = inlined_call_operand.vmem [shape: f32[384,64], index: 8, kind: input, shape index: {}]
  %s9 = inlined_call_operand.vmem [shape: f32[2,8,64], index: 9, kind: output, shape index: {}]
  %s10 = sld [smem:[#allocation0]]
  $region69: #{encoder_forward.1} parent=0
    _
  %s12 = ssub.s32 1, %s10
  %s13 = scalar_select 0, %s12, %s10
  loop: start=0, step=1, limit=4
  $region2: #{encoder_forward.1} parent=0 // loop_pre_header
    _
  $region3: #{encoder_forward.1} parent=0 // loop_header
    %s15 = sphi 0, %s19
    %p16 = scmp.ge.s32.totalorder %s15, 4
    %s25 = sphi 0, %s27
    %s28 = sphi 0, %s25
    %s29 = sphi 0, %s28
    %s45 = sphi 0, %s29
    %s49 = sphi 0, %s49
    %s51 = sphi 0, %s49
    %s52 = sphi 0, %s51
    %s66 = sphi 0, %s52
    %s70 = sphi 0, %s70
    %s72 = sphi 0, %s70
    %s73 = sphi 0, %s72
    %s87 = sphi 0, %s73
    %s91 = sphi 0, %s91
    %s93 = sphi 0, %s91
    %s94 = sphi 0, %s93
    %s108 = sphi 0, %s94
    %s112 = sphi 0, %s112
    %s114 = sphi 0, %s112
    %s115 = sphi 0, %s114
    %s129 = sphi 0, %s115
    %s133 = sphi 0, %s133
    %s135 = sphi 0, %s133
    %s136 = sphi 0, %s135
    %s150 = sphi 0, %s136
    %s154 = sphi 0, %s154
    %s156 = sphi 0, %s154
    %s157 = sphi 0, %s156
    %s171 = sphi 0, %s157
    %s175 = sphi 0, %s175
    %s177 = sphi 0, %s175
    %s178 = sphi 0, %s177
    %s192 = sphi 0, %s178
    %s196 = sphi 0, %s196
    %s198 = sphi 0, %s196
    %s199 = sphi 0, %s198
    %s213 = sphi 0, %s199
    %s219 = sphi 0, %s221
    %s222 = sphi 0, %s219
    %s223 = sphi 0, %s222
    %s239 = sphi 0, %s223
  $region4: #{encoder_forward.1} parent=0 // loop_header_branch
    %18 = sbr.rel (%p16) target = $region8
  $region5: #{encoder_forward.1} parent=0 // loop_body
    %s20 = ssub.s32 %s15, 1
    %s21 = ssub.s32 %s15, 2
    %s22 = sadd.s32 %s15, 1
    %s23 = ssub.s32 %s15, %s22
    %p24 = scmp.eq.s32.totalorder %s23, 0
    %s26 = sadd.s32 %s25, 1
    %s27 = scalar_select %p24, %s25, %s26
    %p30 = pneg %p24
    %p31 = scmp.eq.s32.totalorder %s15, 1
    %p32 = por %p30, %p31
    %p33 = scmp.ne.s32.totalorder %s25, %s28
    %p34 = scmp.eq.s32.totalorder %s15, 0
    %p35 = por %p33, %p34
    %p36 = scmp.ne.s32.totalorder %s25, %s28
    %p37 = scmp.eq.s32.totalorder %s20, 1
    %p38 = por %p36, %p37
    %p39 = scmp.ne.s32.totalorder %s28, %s29
    %p40 = scmp.eq.s32.totalorder %s20, 0
    %p41 = por %p39, %p40
    %p42 = scmp.ne.s32.totalorder %s28, %s29
    %p43 = scmp.eq.s32.totalorder %s21, 1
    %p44 = por %p42, %p43
    %p46 = scmp.ne.s32.totalorder %s29, %s45
    %p47 = scmp.eq.s32.totalorder %s21, 0
    %p48 = por %p46, %p47
    %s50 = sadd.s32 %s49, 1
    %p53 = scmp.eq.s32.totalorder %s15, 1
    %p54 = scmp.ne.s32.totalorder %s49, %s51
    %p55 = scmp.eq.s32.totalorder %s15, 0
    %p56 = por %p54, %p55
    %p57 = scmp.ne.s32.totalorder %s49, %s51
    %p58 = scmp.eq.s32.totalorder %s20, 1
    %p59 = por %p57, %p58
    %p60 = scmp.ne.s32.totalorder %s51, %s52
    %p61 = scmp.eq.s32.totalorder %s20, 0
    %p62 = por %p60, %p61
    %p63 = scmp.ne.s32.totalorder %s51, %s52
    %p64 = scmp.eq.s32.totalorder %s21, 1
    %p65 = por %p63, %p64
    %p67 = scmp.ne.s32.totalorder %s52, %s66
    %p68 = scmp.eq.s32.totalorder %s21, 0
    %p69 = por %p67, %p68
    %s71 = sadd.s32 %s70, 1
    %p74 = scmp.eq.s32.totalorder %s15, 1
    %p75 = scmp.ne.s32.totalorder %s70, %s72
    %p76 = scmp.eq.s32.totalorder %s15, 0
    %p77 = por %p75, %p76
    %p78 = scmp.ne.s32.totalorder %s70, %s72
    %p79 = scmp.eq.s32.totalorder %s20, 1
    %p80 = por %p78, %p79
    %p81 = scmp.ne.s32.totalorder %s72, %s73
    %p82 = scmp.eq.s32.totalorder %s20, 0
    %p83 = por %p81, %p82
    %p84 = scmp.ne.s32.totalorder %s72, %s73
    %p85 = scmp.eq.s32.totalorder %s21, 1
    %p86 = por %p84, %p85
    %p88 = scmp.ne.s32.totalorder %s73, %s87
    %p89 = scmp.eq.s32.totalorder %s21, 0
    %p90 = por %p88, %p89
    %s92 = sadd.s32 %s91, 1
    %p95 = scmp.eq.s32.totalorder %s15, 1
    %p96 = scmp.ne.s32.totalorder %s91, %s93
    %p97 = scmp.eq.s32.totalorder %s15, 0
    %p98 = por %p96, %p97
    %p99 = scmp.ne.s32.totalorder %s91, %s93
    %p100 = scmp.eq.s32.totalorder %s20, 1
    %p101 = por %p99, %p100
    %p102 = scmp.ne.s32.totalorder %s93, %s94
    %p103 = scmp.eq.s32.totalorder %s20, 0
    %p104 = por %p102, %p103
    %p105 = scmp.ne.s32.totalorder %s93, %s94
    %p106 = scmp.eq.s32.totalorder %s21, 1
    %p107 = por %p105, %p106
    %p109 = scmp.ne.s32.totalorder %s94, %s108
    %p110 = scmp.eq.s32.totalorder %s21, 0
    %p111 = por %p109, %p110
    %s113 = sadd.s32 %s112, 1
    %p116 = scmp.eq.s32.totalorder %s15, 1
    %p117 = scmp.ne.s32.totalorder %s112, %s114
    %p118 = scmp.eq.s32.totalorder %s15, 0
    %p119 = por %p117, %p118
    %p120 = scmp.ne.s32.totalorder %s112, %s114
    %p121 = scmp.eq.s32.totalorder %s20, 1
    %p122 = por %p120, %p121
    %p123 = scmp.ne.s32.totalorder %s114, %s115
    %p124 = scmp.eq.s32.totalorder %s20, 0
    %p125 = por %p123, %p124
    %p126 = scmp.ne.s32.totalorder %s114, %s115
    %p127 = scmp.eq.s32.totalorder %s21, 1
    %p128 = por %p126, %p127
    %p130 = scmp.ne.s32.totalorder %s115, %s129
    %p131 = scmp.eq.s32.totalorder %s21, 0
    %p132 = por %p130, %p131
    %s134 = sadd.s32 %s133, 1
    %p137 = scmp.eq.s32.totalorder %s15, 1
    %p138 = scmp.ne.s32.totalorder %s133, %s135
    %p139 = scmp.eq.s32.totalorder %s15, 0
    %p140 = por %p138, %p139
    %p141 = scmp.ne.s32.totalorder %s133, %s135
    %p142 = scmp.eq.s32.totalorder %s20, 1
    %p143 = por %p141, %p142
    %p144 = scmp.ne.s32.totalorder %s135, %s136
    %p145 = scmp.eq.s32.totalorder %s20, 0
    %p146 = por %p144, %p145
    %p147 = scmp.ne.s32.totalorder %s135, %s136
    %p148 = scmp.eq.s32.totalorder %s21, 1
    %p149 = por %p147, %p148
    %p151 = scmp.ne.s32.totalorder %s136, %s150
    %p152 = scmp.eq.s32.totalorder %s21, 0
    %p153 = por %p151, %p152
    %s155 = sadd.s32 %s154, 1
    %p158 = scmp.eq.s32.totalorder %s15, 1
    %p159 = scmp.ne.s32.totalorder %s154, %s156
    %p160 = scmp.eq.s32.totalorder %s15, 0
    %p161 = por %p159, %p160
    %p162 = scmp.ne.s32.totalorder %s154, %s156
    %p163 = scmp.eq.s32.totalorder %s20, 1
    %p164 = por %p162, %p163
    %p165 = scmp.ne.s32.totalorder %s156, %s157
    %p166 = scmp.eq.s32.totalorder %s20, 0
    %p167 = por %p165, %p166
    %p168 = scmp.ne.s32.totalorder %s156, %s157
    %p169 = scmp.eq.s32.totalorder %s21, 1
    %p170 = por %p168, %p169
    %p172 = scmp.ne.s32.totalorder %s157, %s171
    %p173 = scmp.eq.s32.totalorder %s21, 0
    %p174 = por %p172, %p173
    %s176 = sadd.s32 %s175, 1
    %p179 = scmp.eq.s32.totalorder %s15, 1
    %p180 = scmp.ne.s32.totalorder %s175, %s177
    %p181 = scmp.eq.s32.totalorder %s15, 0
    %p182 = por %p180, %p181
    %p183 = scmp.ne.s32.totalorder %s175, %s177
    %p184 = scmp.eq.s32.totalorder %s20, 1
    %p185 = por %p183, %p184
    %p186 = scmp.ne.s32.totalorder %s177, %s178
    %p187 = scmp.eq.s32.totalorder %s20, 0
    %p188 = por %p186, %p187
    %p189 = scmp.ne.s32.totalorder %s177, %s178
    %p190 = scmp.eq.s32.totalorder %s21, 1
    %p191 = por %p189, %p190
    %p193 = scmp.ne.s32.totalorder %s178, %s192
    %p194 = scmp.eq.s32.totalorder %s21, 0
    %p195 = por %p193, %p194
    %s197 = sadd.s32 %s196, 1
    %p200 = scmp.eq.s32.totalorder %s15, 1
    %p201 = scmp.ne.s32.totalorder %s196, %s198
    %p202 = scmp.eq.s32.totalorder %s15, 0
    %p203 = por %p201, %p202
    %p204 = scmp.ne.s32.totalorder %s196, %s198
    %p205 = scmp.eq.s32.totalorder %s20, 1
    %p206 = por %p204, %p205
    %p207 = scmp.ne.s32.totalorder %s198, %s199
    %p208 = scmp.eq.s32.totalorder %s20, 0
    %p209 = por %p207, %p208
    %p210 = scmp.ne.s32.totalorder %s198, %s199
    %p211 = scmp.eq.s32.totalorder %s21, 1
    %p212 = por %p210, %p211
    %p214 = scmp.ne.s32.totalorder %s199, %s213
    %p215 = scmp.eq.s32.totalorder %s21, 0
    %p216 = por %p214, %p215
    %s217 = ssub.s32 %s15, %s22
    %p218 = scmp.eq.s32.totalorder %s217, 0
    %s220 = sadd.s32 %s219, 1
    %s221 = scalar_select %p218, %s219, %s220
    %p224 = pneg %p218
    %p225 = scmp.eq.s32.totalorder %s15, 1
    %p226 = por %p224, %p225
    %p227 = scmp.ne.s32.totalorder %s219, %s222
    %p228 = scmp.eq.s32.totalorder %s15, 0
    %p229 = por %p227, %p228
    %p230 = scmp.ne.s32.totalorder %s219, %s222
    %p231 = scmp.eq.s32.totalorder %s20, 1
    %p232 = por %p230, %p231
    %p233 = scmp.ne.s32.totalorder %s222, %s223
    %p234 = scmp.eq.s32.totalorder %s20, 0
    %p235 = por %p233, %p234
    %p236 = scmp.ne.s32.totalorder %s222, %s223
    %p237 = scmp.eq.s32.totalorder %s21, 1
    %p238 = por %p236, %p237
    %p240 = scmp.ne.s32.totalorder %s223, %s239
    %p241 = scmp.eq.s32.totalorder %s21, 0
    %p242 = por %p240, %p241
    %p243 = scmp.le.s32.totalorder 1, %s15
    %p244 = scmp.lt.s32.totalorder %s15, 3
    %p245 = pnand %p243, %p244
    %p246 = pneg %p245
    // Predicated region
    $region9: #{encoder_forward.1} parent=5 // pred_check
      _
    $region10: #{encoder_forward.1} parent=5 // pred_check_branch
      %248 = sbr.rel (%p245) target = $region12
    $region11: #{encoder_forward.1} parent=5 // pred_region
      %s249 = ssub.s32 %s15, 1
      // Predicated region
      $region13: #{encoder_forward.1} parent=11 // pred_check
        %p250 = pneg %p62
      $region14: #{encoder_forward.1} parent=11 // pred_check_branch
        %252 = sbr.rel (%p250) target = $region16
      $region15: #{encoder_forward.1} parent=11 // pred_region
        _
      $region16: #{encoder_forward.1} parent=11 // pred_fallthru
        _
      // Predicated region
      $region17: #{encoder_forward.1} parent=11 // pred_check
        %p253 = pneg %p83
      $region18: #{encoder_forward.1} parent=11 // pred_check_branch
        %255 = sbr.rel (%p253) target = $region20
      $region19: #{encoder_forward.1} parent=11 // pred_region
        _
      $region20: #{encoder_forward.1} parent=11 // pred_fallthru
        _
      // Predicated region
      $region21: #{encoder_forward.1} parent=11 // pred_check
        %p256 = pneg %p104
      $region22: #{encoder_forward.1} parent=11 // pred_check_branch
        %258 = sbr.rel (%p256) target = $region24
      $region23: #{encoder_forward.1} parent=11 // pred_region
        _
      $region24: #{encoder_forward.1} parent=11 // pred_fallthru
        _
      // Predicated region
      $region25: #{encoder_forward.1} parent=11 // pred_check
        %p259 = pneg %p125
      $region26: #{encoder_forward.1} parent=11 // pred_check_branch
        %261 = sbr.rel (%p259) target = $region28
      $region27: #{encoder_forward.1} parent=11 // pred_region
        _
      $region28: #{encoder_forward.1} parent=11 // pred_fallthru
        _
      // Predicated region
      $region29: #{encoder_forward.1} parent=11 // pred_check
        %p262 = pneg %p146
      $region30: #{encoder_forward.1} parent=11 // pred_check_branch
        %264 = sbr.rel (%p262) target = $region32
      $region31: #{encoder_forward.1} parent=11 // pred_region
        _
      $region32: #{encoder_forward.1} parent=11 // pred_fallthru
        _
      // Predicated region
      $region33: #{encoder_forward.1} parent=11 // pred_check
        %p265 = pneg %p167
      $region34: #{encoder_forward.1} parent=11 // pred_check_branch
        %267 = sbr.rel (%p265) target = $region36
      $region35: #{encoder_forward.1} parent=11 // pred_region
        _
      $region36: #{encoder_forward.1} parent=11 // pred_fallthru
        _
      // Predicated region
      $region37: #{encoder_forward.1} parent=11 // pred_check
        %p268 = pneg %p188
      $region38: #{encoder_forward.1} parent=11 // pred_check_branch
        %270 = sbr.rel (%p268) target = $region40
      $region39: #{encoder_forward.1} parent=11 // pred_region
        _
      $region40: #{encoder_forward.1} parent=11 // pred_fallthru
        _
      // Predicated region
      $region41: #{encoder_forward.1} parent=11 // pred_check
        %p271 = pneg %p209
      $region42: #{encoder_forward.1} parent=11 // pred_check_branch
        %273 = sbr.rel (%p271) target = $region44
      $region43: #{encoder_forward.1} parent=11 // pred_region
        _
      $region44: #{encoder_forward.1} parent=11 // pred_fallthru
        _
    $region12: #{encoder_forward.1} parent=5 // pred_fallthru
      _
    %p274 = scmp.lt.s32.totalorder %s15, 2
    // Predicated region
    $region45: #{encoder_forward.1} parent=5 // pred_check
      %p275 = pneg %p274
    $region46: #{encoder_forward.1} parent=5 // pred_check_branch
      %277 = sbr.rel (%p275) target = $region48
    $region47: #{encoder_forward.1} parent=5 // pred_region
      // Predicated region
      $region49: #{encoder_forward.1} parent=47 // pred_check
        %p278 = pneg %p35
      $region50: #{encoder_forward.1} parent=47 // pred_check_branch
        %280 = sbr.rel (%p278) target = $region52
      $region51: #{encoder_forward.1} parent=47 // pred_region
        %p281 = scmp.lt.s32.totalorder %s15, 1
        %s282 = scalar_select %p281, %s15, 1
        %s283 = smul.addr %s282, 3
        %s284 = smul.addr %s283, 2
        %s285 = scalar_lea.vmem %s0, %s284
      $region52: #{encoder_forward.1} parent=47 // pred_fallthru
        _
    $region48: #{encoder_forward.1} parent=5 // pred_fallthru
      _
    %p286 = scmp.le.s32.totalorder 1, %s15
    %p287 = scmp.lt.s32.totalorder %s15, 3
    %p288 = pnand %p286, %p287
    %p289 = pneg %p288
    // Predicated region
    $region53: #{encoder_forward.1} parent=5 // pred_check
      _
    $region54: #{encoder_forward.1} parent=5 // pred_check_branch
      %291 = sbr.rel (%p288) target = $region56
    $region55: #{encoder_forward.1} parent=5 // pred_region
      %s292 = ssub.s32 %s15, 1
      %p293 = scmp.lt.s32.totalorder %s20, 1
      %s294 = scalar_select %p293, %s20, 1
      %s295 = smul.addr %s294, 3
      %s296 = smul.addr %s295, 2
      %s297 = scalar_lea.vmem %s0, %s296
      %p298 = pneg %p41
      %p299 = pneg %p38
      %p300 = pneg %p62
      %p301 = pneg %p59
      %p302 = pneg %p83
      %p303 = pneg %p80
      %p304 = pneg %p104
      %p305 = pneg %p101
      %p306 = pneg %p125
      %p307 = pneg %p122
      %p308 = pneg %p146
      %p309 = pneg %p143
      %p310 = pneg %p167
      %p311 = pneg %p164
      %p312 = pneg %p188
      %p313 = pneg %p185
      %p314 = pneg %p209
      %p315 = pneg %p206
      %p316 = pneg %p235
      %p317 = pneg %p232
      %p318 = scmp.lt.s32.totalorder %s20, 1
      %s319 = scalar_select %p318, %s20, 1
      %s320 = smul.addr %s319, 8
      %s321 = scalar_lea.vmem %s9, %s320
      %p322 = scmp.lt.s32.totalorder %s20, 1
      %s323 = scalar_select %p322, %s20, 1
      %s324 = smul.addr %s323, 3
      %s325 = smul.addr %s324, 2
      %s326 = scalar_lea.vmem %s0, %s325
      %p327 = scmp.lt.s32.totalorder %s20, 1
      %s328 = scalar_select %p327, %s20, 1
      %s329 = smul.addr %s328, 8
      %s330 = scalar_lea.vmem %s9, %s329
      %v331 = vld [vmem:[%s326] sm:$0x3f]
      %v332 = vunpack.c.l.bf16 %v331
      %v333 = vunpack.c.h.bf16 %v331
      %v334 = vld [vmem:[%s5] sm:$0x7]
      %v335 = vld [vmem:[%s6] sm:$0x7]
      %v336 = vld [vmem:[%s7] sm:$0x7]
      %v338 = vlaneseq
      %v339 = vshrl.u32 %v338, 7
      %v340 = vsub.s32 0, %v339
      %v341 = vrot.slane %v334, %v340
      %v342 = vlaneseq
      %v343 = vshrl.u32 %v342, 7
      %v344 = vsub.s32 1, %v343
      %v345 = vrot.slane %v334, %v344
      %v346 = vlaneseq
      %v347 = vshrl.u32 %v346, 7
      %v348 = vsub.s32 2, %v347
      %v349 = vrot.slane %v334, %v348
      %v351 = vcombine.low %v341, %v345
      %v353 = vmul.f32 %v332, %v351
      %v354 = vmul.f32 %v333, %v349
      %v356 = vlaneseq
      %v357 = vshrl.u32 %v356, 7
      %v358 = vsub.s32 0, %v357
      %v359 = vrot.slane %v335, %v358
      %v360 = vlaneseq
      %v361 = vshrl.u32 %v360, 7
      %v362 = vsub.s32 1, %v361
      %v363 = vrot.slane %v335, %v362
      %v364 = vlaneseq
      %v365 = vshrl.u32 %v364, 7
      %v366 = vsub.s32 2, %v365
      %v367 = vrot.slane %v335, %v366
      %v369 = vcombine.low %v359, %v363
      %v371 = vmul.f32 %v332, %v369
      %v372 = vmul.f32 %v333, %v367
      %v374 = vcombine.high %v353, %v353
      %376 = vrot.lane.b32.xlu0 %v353, 1
      %v377 = vpop.permute.xlu0 %376
      %378 = vrot.lane.b32.xlu0 %v374, 1
      %v379 = vpop.permute.xlu0 %378
      %380 = vrot.lane.b32.xlu0 %v354, 1
      %v381 = vpop.permute.xlu0 %380
      %v382 = vlaneseq
      %v383 = vand.u32 %v382, 127
      %vm384 = vcmp.lt.s32.totalorder %v383, 1
      %v385 = vsel %vm384, %v379, %v381
      %v386 = vsel %vm384, %v377, %v379
      %v387 = vsel %vm384, %v381, %v377
      %v388 = vld [vmem:[%s1] sm:$0xff]
      %s389 = scalar_lea.vmem %s1, 8
      %v390 = vld [vmem:[%s389] sm:$0xff]
      %v393 = vcombine.high %v332, %v332
      %vm394 = vcmask 31744
      %v396 = vsel %vm394, %v390, 0
      %vm398 = vcmask 1043456
      %v399 = vsel %vm398, %v332, 0
      %v401 = vsel %vm398, %v393, 0
      %v403 = vsel %vm398, %v333, 0
      %405 = vmatprep.subr.mxu0 %v401
      %406 = vmatpush1.msra.mxu0 %v399
      %407 = vmatprep.subr.mxu0 0.0
      %408 = vmatpush1.msra.mxu0 0.0
      %409 = vmatprep.subr.mxu0 0.0
      %410 = vmatpush1.msra.mxu0 0.0
      %411 = vmatprep.subr.mxu0 0.0
      %412 = vmatpush1.msra.mxu0 0.0
      %413 = vmatprep.subr.mxu0 0.0
      %414 = vmatpush1.msra.mxu0 0.0
      %415 = vmatprep.subr.mxu0 0.0
      %416 = vmatpush1.msra.mxu0 0.0
      %417 = vmatprep.subr.mxu0 0.0
      %418 = vmatpush1.msra.mxu0 0.0
      %419 = vmatprep.subr.mxu0 0.0
      %420 = vmatpush1.msra.mxu0 0.0
      %421 = vmatprep.subr.mxu0 0.0
      %422 = vmatpush1.msra.mxu0 0.0
      %423 = vmatprep.subr.mxu0 0.0
      %424 = vmatpush1.msra.mxu0 0.0
      %425 = vmatprep.subr.mxu0 0.0
      %426 = vmatpush1.msra.mxu0 0.0
      %427 = vmatprep.subr.mxu0 0.0
      %428 = vmatpush1.msra.mxu0 0.0
      %429 = vmatprep.subr.mxu0 0.0
      %430 = vmatpush1.msra.mxu0 0.0
      %431 = vmatprep.subr.mxu0 0.0
      %432 = vmatpush1.msra.mxu0 0.0
      %433 = vmatprep.subr.mxu0 0.0
      %434 = vmatpush1.msra.mxu0 0.0
      %435 = vmatprep.subr.mxu0 0.0
      %436 = vmatpush1.msra.mxu0 0.0
      %437 = vmatprep.subr.mxu0 0.0
      %438 = vmatpush1.msra.mxu0 0.0
      %439 = vmatprep.subr.mxu0 0.0
      %440 = vmatpush1.msra.mxu0 0.0
      %441 = vmatprep.subr.mxu0 0.0
      %442 = vmatpush1.msra.mxu0 0.0
      %443 = vmatprep.subr.mxu0 0.0
      %444 = vmatpush1.msra.mxu0 0.0
      %445 = vmatprep.subr.mxu0 0.0
      %446 = vmatpush1.msra.mxu0 0.0
      %447 = vmatprep.subr.mxu0 0.0
      %448 = vmatpush1.msra.mxu0 0.0
      %449 = vmatprep.subr.mxu0 0.0
      %450 = vmatpush1.msra.mxu0 0.0
      %451 = vmatprep.subr.mxu0 0.0
      %452 = vmatpush1.msra.mxu0 0.0
      %453 = vmatprep.subr.mxu0 0.0
      %454 = vmatpush1.msra.mxu0 0.0
      %455 = vmatprep.subr.mxu0 0.0
      %456 = vmatpush1.msra.mxu0 0.0
      %457 = vmatprep.subr.mxu0 0.0
      %458 = vmatpush1.msra.mxu0 0.0
      %459 = vmatprep.subr.mxu0 0.0
      %460 = vmatpush1.msra.mxu0 0.0
      %461 = vmatprep.subr.mxu0 0.0
      %462 = vmatpush1.msra.mxu0 0.0
      %463 = vmatprep.subr.mxu0 0.0
      %464 = vmatpush1.msra.mxu0 0.0
      %465 = vmatprep.subr.mxu0 0.0
      %466 = vmatpush1.msra.mxu0 0.0
      %467 = vmatprep.subr.mxu0 0.0
      %468 = vmatpush1.msra.mxu0 0.0
      %469 = vmatprep.mubr.f32.mxu0 0.0
      %470 = vmatmul.mubr.f32.gmra.mrb[0].mxu0 %v396
      %v471 = vpop.f32.mrb[0].mxu0
      %v472 = vadd.f32 0.0, %v471
      %v473 = vpop.f32.mrb[0].mxu0
      %v474 = vadd.f32 0.0, %v473
      %475 = vdwg.mxu0
      %476 = vmatprep.subr.mxu0 0.0
      %477 = vmatpush1.msra.mxu0 %v403
      %478 = vmatprep.subr.mxu0 0.0
      %479 = vmatpush1.msra.mxu0 0.0
      %480 = vmatprep.subr.mxu0 0.0
      %481 = vmatpush1.msra.mxu0 0.0
      %482 = vmatprep.subr.mxu0 0.0
      %483 = vmatpush1.msra.mxu0 0.0
      %484 = vmatprep.subr.mxu0 0.0
      %485 = vmatpush1.msra.mxu0 0.0
      %486 = vmatprep.subr.mxu0 0.0
      %487 = vmatpush1.msra.mxu0 0.0
      %488 = vmatprep.subr.mxu0 0.0
      %489 = vmatpush1.msra.mxu0 0.0
      %490 = vmatprep.subr.mxu0 0.0
      %491 = vmatpush1.msra.mxu0 0.0
      %492 = vmatprep.subr.mxu0 0.0
      %493 = vmatpush1.msra.mxu0 0.0
      %494 = vmatprep.subr.mxu0 0.0
      %495 = vmatpush1.msra.mxu0 0.0
      %496 = vmatprep.subr.mxu0 0.0
      %497 = vmatpush1.msra.mxu0 0.0
      %498 = vmatprep.subr.mxu0 0.0
      %499 = vmatpush1.msra.mxu0 0.0
      %500 = vmatprep.subr.mxu0 0.0
      %501 = vmatpush1.msra.mxu0 0.0
      %502 = vmatprep.subr.mxu0 0.0
      %503 = vmatpush1.msra.mxu0 0.0
      %504 = vmatprep.subr.mxu0 0.0
      %505 = vmatpush1.msra.mxu0 0.0
      %506 = vmatprep.subr.mxu0 0.0
      %507 = vmatpush1.msra.mxu0 0.0
      %508 = vmatprep.subr.mxu0 0.0
      %509 = vmatpush1.msra.mxu0 0.0
      %510 = vmatprep.subr.mxu0 0.0
      %511 = vmatpush1.msra.mxu0 0.0
      %512 = vmatprep.subr.mxu0 0.0
      %513 = vmatpush1.msra.mxu0 0.0
      %514 = vmatprep.subr.mxu0 0.0
      %515 = vmatpush1.msra.mxu0 0.0
      %516 = vmatprep.subr.mxu0 0.0
      %517 = vmatpush1.msra.mxu0 0.0
      %518 = vmatprep.subr.mxu0 0.0
      %519 = vmatpush1.msra.mxu0 0.0
      %520 = vmatprep.subr.mxu0 0.0
      %521 = vmatpush1.msra.mxu0 0.0
      %522 = vmatprep.subr.mxu0 0.0
      %523 = vmatpush1.msra.mxu0 0.0
      %524 = vmatprep.subr.mxu0 0.0
      %525 = vmatpush1.msra.mxu0 0.0
      %526 = vmatprep.subr.mxu0 0.0
      %527 = vmatpush1.msra.mxu0 0.0
      %528 = vmatprep.subr.mxu0 0.0
      %529 = vmatpush1.msra.mxu0 0.0
      %530 = vmatprep.subr.mxu0 0.0
      %531 = vmatpush1.msra.mxu0 0.0
      %532 = vmatprep.subr.mxu0 0.0
      %533 = vmatpush1.msra.mxu0 0.0
      %534 = vmatprep.subr.mxu0 0.0
      %535 = vmatpush1.msra.mxu0 0.0
      %536 = vmatprep.subr.mxu0 0.0
      %537 = vmatpush1.msra.mxu0 0.0
      %538 = vmatprep.subr.mxu0 0.0
      %539 = vmatpush1.msra.mxu0 0.0
      %540 = vmatprep.mubr.f32.mxu0 0.0
      %541 = vmatmul.mubr.f32.gmra.mrb[0].mxu0 %v396
      %v542 = vpop.f32.mrb[0].mxu0
      %v543 = vadd.f32 0.0, %v542
      %v544 = vpop.f32.mrb[0].mxu0
      %545 = vdwg.mxu0
      %v547 = vsel %vm394, %v388, 0
      %v550 = vsel %vm398, %v387, 0
      %v553 = vsel %vm398, %v386, 0
      %v556 = vsel %vm398, %v385, 0
      %558 = vmatprep.subr.mxu0 %v553
      %559 = vmatpush1.msra.mxu0 %v550
      %560 = vmatprep.subr.mxu0 0.0
      %561 = vmatpush1.msra.mxu0 0.0
      %562 = vmatprep.subr.mxu0 0.0
      %563 = vmatpush1.msra.mxu0 0.0
      %564 = vmatprep.subr.mxu0 0.0
      %565 = vmatpush1.msra.mxu0 0.0
      %566 = vmatprep.subr.mxu0 0.0
      %567 = vmatpush1.msra.mxu0 0.0
      %568 = vmatprep.subr.mxu0 0.0
      %569 = vmatpush1.msra.mxu0 0.0
      %570 = vmatprep.subr.mxu0 0.0
      %571 = vmatpush1.msra.mxu0 0.0
      %572 = vmatprep.subr.mxu0 0.0
      %573 = vmatpush1.msra.mxu0 0.0
      %574 = vmatprep.subr.mxu0 0.0
      %575 = vmatpush1.msra.mxu0 0.0
      %576 = vmatprep.subr.mxu0 0.0
      %577 = vmatpush1.msra.mxu0 0.0
      %578 = vmatprep.subr.mxu0 0.0
      %579 = vmatpush1.msra.mxu0 0.0
      %580 = vmatprep.subr.mxu0 0.0
      %581 = vmatpush1.msra.mxu0 0.0
      %582 = vmatprep.subr.mxu0 0.0
      %583 = vmatpush1.msra.mxu0 0.0
      %584 = vmatprep.subr.mxu0 0.0
      %585 = vmatpush1.msra.mxu0 0.0
      %586 = vmatprep.subr.mxu0 0.0
      %587 = vmatpush1.msra.mxu0 0.0
      %588 = vmatprep.subr.mxu0 0.0
      %589 = vmatpush1.msra.mxu0 0.0
      %590 = vmatprep.subr.mxu0 0.0
      %591 = vmatpush1.msra.mxu0 0.0
      %592 = vmatprep.subr.mxu0 0.0
      %593 = vmatpush1.msra.mxu0 0.0
      %594 = vmatprep.subr.mxu0 0.0
      %595 = vmatpush1.msra.mxu0 0.0
      %596 = vmatprep.subr.mxu0 0.0
      %597 = vmatpush1.msra.mxu0 0.0
      %598 = vmatprep.subr.mxu0 0.0
      %599 = vmatpush1.msra.mxu0 0.0
      %600 = vmatprep.subr.mxu0 0.0
      %601 = vmatpush1.msra.mxu0 0.0
      %602 = vmatprep.subr.mxu0 0.0
      %603 = vmatpush1.msra.mxu0 0.0
      %604 = vmatprep.subr.mxu0 0.0
      %605 = vmatpush1.msra.mxu0 0.0
      %606 = vmatprep.subr.mxu0 0.0
      %607 = vmatpush1.msra.mxu0 0.0
      %608 = vmatprep.subr.mxu0 0.0
      %609 = vmatpush1.msra.mxu0 0.0
      %610 = vmatprep.subr.mxu0 0.0
      %611 = vmatpush1.msra.mxu0 0.0
      %612 = vmatprep.subr.mxu0 0.0
      %613 = vmatpush1.msra.mxu0 0.0
      %614 = vmatprep.subr.mxu0 0.0
      %615 = vmatpush1.msra.mxu0 0.0
      %616 = vmatprep.subr.mxu0 0.0
      %617 = vmatpush1.msra.mxu0 0.0
      %618 = vmatprep.subr.mxu0 0.0
      %619 = vmatpush1.msra.mxu0 0.0
      %620 = vmatprep.subr.mxu0 0.0
      %621 = vmatpush1.msra.mxu0 0.0
      %622 = vmatprep.mubr.f32.mxu0 0.0
      %623 = vmatmul.mubr.f32.gmra.mrb[0].mxu0 %v547
      %v624 = vpop.f32.mrb[0].mxu0
      %v625 = vadd.f32 %v472, %v624
      %v626 = vpop.f32.mrb[0].mxu0
      %v627 = vadd.f32 %v474, %v626
      %628 = vdwg.mxu0
      %629 = vmatprep.subr.mxu0 0.0
      %630 = vmatpush1.msra.mxu0 %v556
      %631 = vmatprep.subr.mxu0 0.0
      %632 = vmatpush1.msra.mxu0 0.0
      %633 = vmatprep.subr.mxu0 0.0
      %634 = vmatpush1.msra.mxu0 0.0
      %635 = vmatprep.subr.mxu0 0.0
      %636 = vmatpush1.msra.mxu0 0.0
      %637 = vmatprep.subr.mxu0 0.0
      %638 = vmatpush1.msra.mxu0 0.0
      %639 = vmatprep.subr.mxu0 0.0
      %640 = vmatpush1.msra.mxu0 0.0
      %641 = vmatprep.subr.mxu0 0.0
      %642 = vmatpush1.msra.mxu0 0.0
      %643 = vmatprep.subr.mxu0 0.0
      %644 = vmatpush1.msra.mxu0 0.0
      %645 = vmatprep.subr.mxu0 0.0
      %646 = vmatpush1.msra.mxu0 0.0
      %647 = vmatprep.subr.mxu0 0.0
      %648 = vmatpush1.msra.mxu0 0.0
      %649 = vmatprep.subr.mxu0 0.0
      %650 = vmatpush1.msra.mxu0 0.0
      %651 = vmatprep.subr.mxu0 0.0
      %652 = vmatpush1.msra.mxu0 0.0
      %653 = vmatprep.subr.mxu0 0.0
      %654 = vmatpush1.msra.mxu0 0.0
      %655 = vmatprep.subr.mxu0 0.0
      %656 = vmatpush1.msra.mxu0 0.0
      %657 = vmatprep.subr.mxu0 0.0
      %658 = vmatpush1.msra.mxu0 0.0
      %659 = vmatprep.subr.mxu0 0.0
      %660 = vmatpush1.msra.mxu0 0.0
      %661 = vmatprep.subr.mxu0 0.0
      %662 = vmatpush1.msra.mxu0 0.0
      %663 = vmatprep.subr.mxu0 0.0
      %664 = vmatpush1.msra.mxu0 0.0
      %665 = vmatprep.subr.mxu0 0.0
      %666 = vmatpush1.msra.mxu0 0.0
      %667 = vmatprep.subr.mxu0 0.0
      %668 = vmatpush1.msra.mxu0 0.0
      %669 = vmatprep.subr.mxu0 0.0
      %670 = vmatpush1.msra.mxu0 0.0
      %671 = vmatprep.subr.mxu0 0.0
      %672 = vmatpush1.msra.mxu0 0.0
      %673 = vmatprep.subr.mxu0 0.0
      %674 = vmatpush1.msra.mxu0 0.0
      %675 = vmatprep.subr.mxu0 0.0
      %676 = vmatpush1.msra.mxu0 0.0
      %677 = vmatprep.subr.mxu0 0.0
      %678 = vmatpush1.msra.mxu0 0.0
      %679 = vmatprep.subr.mxu0 0.0
      %680 = vmatpush1.msra.mxu0 0.0
      %681 = vmatprep.subr.mxu0 0.0
      %682 = vmatpush1.msra.mxu0 0.0
      %683 = vmatprep.subr.mxu0 0.0
      %684 = vmatpush1.msra.mxu0 0.0
      %685 = vmatprep.subr.mxu0 0.0
      %686 = vmatpush1.msra.mxu0 0.0
      %687 = vmatprep.subr.mxu0 0.0
      %688 = vmatpush1.msra.mxu0 0.0
      %689 = vmatprep.subr.mxu0 0.0
      %690 = vmatpush1.msra.mxu0 0.0
      %691 = vmatprep.subr.mxu0 0.0
      %692 = vmatpush1.msra.mxu0 0.0
      %693 = vmatprep.mubr.f32.mxu0 0.0
      %694 = vmatmul.mubr.f32.gmra.mrb[0].mxu0 %v547
      %v695 = vpop.f32.mrb[0].mxu0
      %v696 = vadd.f32 %v543, %v695
      %v697 = vpop.f32.mrb[0].mxu0
      %698 = vdwg.mxu0
      %v700 = vcombine.high %v371, %v371
      %702 = vrot.lane.b32.xlu0 %v371, 127
      %v703 = vpop.permute.xlu0 %702
      %704 = vrot.lane.b32.xlu0 %v700, 127
      %v705 = vpop.permute.xlu0 %704
      %706 = vrot.lane.b32.xlu0 %v372, 127
      %v707 = vpop.permute.xlu0 %706
      %vm708 = vcmp.lt.s32.totalorder %v383, 127
      %v709 = vsel %vm708, %v705, %v707
      %v710 = vsel %vm708, %v703, %v705
      %v711 = vsel %vm708, %v707, %v703
      %s712 = scalar_lea.vmem %s1, 16
      %v713 = vld [vmem:[%s712] sm:$0xff]
      %v715 = vsel %vm394, %v713, 0
      %v718 = vsel %vm398, %v710, 0
      %v721 = vsel %vm398, %v709, 0
      %v724 = vsel %vm398, %v711, 0
      %726 = vmatprep.subr.mxu0 %v721
      %727 = vmatpush1.msra.mxu0 %v718
      %728 = vmatprep.subr.mxu0 0.0
      %729 = vmatpush1.msra.mxu0 0.0
      %730 = vmatprep.subr.mxu0 0.0
      %731 = vmatpush1.msra.mxu0 0.0
      %732 = vmatprep.subr.mxu0 0.0
      %733 = vmatpush1.msra.mxu0 0.0
      %734 = vmatprep.subr.mxu0 0.0
      %735 = vmatpush1.msra.mxu0 0.0
      %736 = vmatprep.subr.mxu0 0.0
      %737 = vmatpush1.msra.mxu0 0.0
      %738 = vmatprep.subr.mxu0 0.0
      %739 = vmatpush1.msra.mxu0 0.0
      %740 = vmatprep.subr.mxu0 0.0
      %741 = vmatpush1.msra.mxu0 0.0
      %742 = vmatprep.subr.mxu0 0.0
      %743 = vmatpush1.msra.mxu0 0.0
      %744 = vmatprep.subr.mxu0 0.0
      %745 = vmatpush1.msra.mxu0 0.0
      %746 = vmatprep.subr.mxu0 0.0
      %747 = vmatpush1.msra.mxu0 0.0
      %748 = vmatprep.subr.mxu0 0.0
      %749 = vmatpush1.msra.mxu0 0.0
      %750 = vmatprep.subr.mxu0 0.0
      %751 = vmatpush1.msra.mxu0 0.0
      %752 = vmatprep.subr.mxu0 0.0
      %753 = vmatpush1.msra.mxu0 0.0
      %754 = vmatprep.subr.mxu0 0.0
      %755 = vmatpush1.msra.mxu0 0.0
      %756 = vmatprep.subr.mxu0 0.0
      %757 = vmatpush1.msra.mxu0 0.0
      %758 = vmatprep.subr.mxu0 0.0
      %759 = vmatpush1.msra.mxu0 0.0
      %760 = vmatprep.subr.mxu0 0.0
      %761 = vmatpush1.msra.mxu0 0.0
      %762 = vmatprep.subr.mxu0 0.0
      %763 = vmatpush1.msra.mxu0 0.0
      %764 = vmatprep.subr.mxu0 0.0
      %765 = vmatpush1.msra.mxu0 0.0
      %766 = vmatprep.subr.mxu0 0.0
      %767 = vmatpush1.msra.mxu0 0.0
      %768 = vmatprep.subr.mxu0 0.0
      %769 = vmatpush1.msra.mxu0 0.0
      %770 = vmatprep.subr.mxu0 0.0
      %771 = vmatpush1.msra.mxu0 0.0
      %772 = vmatprep.subr.mxu0 0.0
      %773 = vmatpush1.msra.mxu0 0.0
      %774 = vmatprep.subr.mxu0 0.0
      %775 = vmatpush1.msra.mxu0 0.0
      %776 = vmatprep.subr.mxu0 0.0
      %777 = vmatpush1.msra.mxu0 0.0
      %778 = vmatprep.subr.mxu0 0.0
      %779 = vmatpush1.msra.mxu0 0.0
      %780 = vmatprep.subr.mxu0 0.0
      %781 = vmatpush1.msra.mxu0 0.0
      %782 = vmatprep.subr.mxu0 0.0
      %783 = vmatpush1.msra.mxu0 0.0
      %784 = vmatprep.subr.mxu0 0.0
      %785 = vmatpush1.msra.mxu0 0.0
      %786 = vmatprep.subr.mxu0 0.0
      %787 = vmatpush1.msra.mxu0 0.0
      %788 = vmatprep.subr.mxu0 0.0
      %789 = vmatpush1.msra.mxu0 0.0
      %790 = vmatprep.mubr.f32.mxu0 0.0
      %791 = vmatmul.mubr.f32.gmra.mrb[0].mxu0 %v715
      %v792 = vpop.f32.mrb[0].mxu0
      %v793 = vadd.f32 0.0, %v792
      %v794 = vpop.f32.mrb[0].mxu0
      %v795 = vadd.f32 0.0, %v794
      %796 = vdwg.mxu0
      %797 = vmatprep.subr.mxu0 0.0
      %798 = vmatpush1.msra.mxu0 %v724
      %799 = vmatprep.subr.mxu0 0.0
      %800 = vmatpush1.msra.mxu0 0.0
      %801 = vmatprep.subr.mxu0 0.0
      %802 = vmatpush1.msra.mxu0 0.0
      %803 = vmatprep.subr.mxu0 0.0
      %804 = vmatpush1.msra.mxu0 0.0
      %805 = vmatprep.subr.mxu0 0.0
      %806 = vmatpush1.msra.mxu0 0.0
      %807 = vmatprep.subr.mxu0 0.0
      %808 = vmatpush1.msra.mxu0 0.0
      %809 = vmatprep.subr.mxu0 0.0
      %810 = vmatpush1.msra.mxu0 0.0
      %811 = vmatprep.subr.mxu0 0.0
      %812 = vmatpush1.msra.mxu0 0.0
      %813 = vmatprep.subr.mxu0 0.0
      %814 = vmatpush1.msra.mxu0 0.0
      %815 = vmatprep.subr.mxu0 0.0
      %816 = vmatpush1.msra.mxu0 0.0
      %817 = vmatprep.subr.mxu0 0.0
      %818 = vmatpush1.msra.mxu0 0.0
      %819 = vmatprep.subr.mxu0 0.0
      %820 = vmatpush1.msra.mxu0 0.0
      %821 = vmatprep.subr.mxu0 0.0
      %822 = vmatpush1.msra.mxu0 0.0
      %823 = vmatprep.subr.mxu0 0.0
      %824 = vmatpush1.msra.mxu0 0.0
      %825 = vmatprep.subr.mxu0 0.0
      %826 = vmatpush1.msra.mxu0 0.0
      %827 = vmatprep.subr.mxu0 0.0
      %828 = vmatpush1.msra.mxu0 0.0
      %829 = vmatprep.subr.mxu0 0.0
      %830 = vmatpush1.msra.mxu0 0.0
      %831 = vmatprep.subr.mxu0 0.0
      %832 = vmatpush1.msra.mxu0 0.0
      %833 = vmatprep.subr.mxu0 0.0
      %834 = vmatpush1.msra.mxu0 0.0
      %835 = vmatprep.subr.mxu0 0.0
      %836 = vmatpush1.msra.mxu0 0.0
      %837 = vmatprep.subr.mxu0 0.0
      %838 = vmatpush1.msra.mxu0 0.0
      %839 = vmatprep.subr.mxu0 0.0
      %840 = vmatpush1.msra.mxu0 0.0
      %841 = vmatprep.subr.mxu0 0.0
      %842 = vmatpush1.msra.mxu0 0.0
      %843 = vmatprep.subr.mxu0 0.0
      %844 = vmatpush1.msra.mxu0 0.0
      %845 = vmatprep.subr.mxu0 0.0
      %846 = vmatpush1.msra.mxu0 0.0
      %847 = vmatprep.subr.mxu0 0.0
      %848 = vmatpush1.msra.mxu0 0.0
      %849 = vmatprep.subr.mxu0 0.0
      %850 = vmatpush1.msra.mxu0 0.0
      %851 = vmatprep.subr.mxu0 0.0
      %852 = vmatpush1.msra.mxu0 0.0
      %853 = vmatprep.subr.mxu0 0.0
      %854 = vmatpush1.msra.mxu0 0.0
      %855 = vmatprep.subr.mxu0 0.0
      %856 = vmatpush1.msra.mxu0 0.0
      %857 = vmatprep.subr.mxu0 0.0
      %858 = vmatpush1.msra.mxu0 0.0
      %859 = vmatprep.subr.mxu0 0.0
      %860 = vmatpush1.msra.mxu0 0.0
      %861 = vmatprep.mubr.f32.mxu0 0.0
      %862 = vmatmul.mubr.f32.gmra.mrb[0].mxu0 %v715
      %v863 = vpop.f32.mrb[0].mxu0
      %v864 = vadd.f32 0.0, %v863
      %v865 = vpop.f32.mrb[0].mxu0
      %866 = vdwg.mxu0
      %v867 = vadd.f32 %v625, %v793
      %v868 = vadd.f32 %v627, %v795
      %v869 = vadd.f32 %v696, %v864
      %870 = vrot.lane.b32.xlu0 %v353, 113
      %v871 = vpop.permute.xlu0 %870
      %872 = vrot.lane.b32.xlu0 %v374, 113
      %v873 = vpop.permute.xlu0 %872
      %874 = vrot.lane.b32.xlu0 %v354, 113
      %v875 = vpop.permute.xlu0 %874
      %vm876 = vcmp.lt.s32.totalorder %v383, 113
      %v877 = vsel %vm876, %v873, %v875
      %v878 = vsel %vm876, %v871, %v873
      %v879 = vsel %vm876, %v875, %v871
      %s880 = scalar_lea.vmem %s1, 24
      %v881 = vld [vmem:[%s880] sm:$0xff]
      %v883 = vsel %vm394, %v881, 0
      %v886 = vsel %vm398, %v878, 0
      %v889 = vsel %vm398, %v877, 0
      %v892 = vsel %vm398, %v879, 0
      %894 = vmatprep.subr.mxu0 %v889
      %895 = vmatpush1.msra.mxu0 %v886
      %896 = vmatprep.subr.mxu0 0.0
      %897 = vmatpush1.msra.mxu0 0.0
      %898 = vmatprep.subr.mxu0 0.0
      %899 = vmatpush1.msra.mxu0 0.0
      %900 = vmatprep.subr.mxu0 0.0
      %901 = vmatpush1.msra.mxu0 0.0
      %902 = vmatprep.subr.mxu0 0.0
      %903 = vmatpush1.msra.mxu0 0.0
      %904 = vmatprep.subr.mxu0 0.0
      %905 = vmatpush1.msra.mxu0 0.0
      %906 = vmatprep.subr.mxu0 0.0
      %907 = vmatpush1.msra.mxu0 0.0
      %908 = vmatprep.subr.mxu0 0.0
      %909 = vmatpush1.msra.mxu0 0.0
      %910 = vmatprep.subr.mxu0 0.0
      %911 = vmatpush1.msra.mxu0 0.0
      %912 = vmatprep.subr.mxu0 0.0
      %913 = vmatpush1.msra.mxu0 0.0
      %914 = vmatprep.subr.mxu0 0.0
      %915 = vmatpush1.msra.mxu0 0.0
      %916 = vmatprep.subr.mxu0 0.0
      %917 = vmatpush1.msra.mxu0 0.0
      %918 = vmatprep.subr.mxu0 0.0
      %919 = vmatpush1.msra.mxu0 0.0
      %920 = vmatprep.subr.mxu0 0.0
      %921 = vmatpush1.msra.mxu0 0.0
      %922 = vmatprep.subr.mxu0 0.0
      %923 = vmatpush1.msra.mxu0 0.0
      %924 = vmatprep.subr.mxu0 0.0
      %925 = vmatpush1.msra.mxu0 0.0
      %926 = vmatprep.subr.mxu0 0.0
      %927 = vmatpush1.msra.mxu0 0.0
      %928 = vmatprep.subr.mxu0 0.0
      %929 = vmatpush1.msra.mxu0 0.0
      %930 = vmatprep.subr.mxu0 0.0
      %931 = vmatpush1.msra.mxu0 0.0
      %932 = vmatprep.subr.mxu0 0.0
      %933 = vmatpush1.msra.mxu0 0.0
      %934 = vmatprep.subr.mxu0 0.0
      %935 = vmatpush1.msra.mxu0 0.0
      %936 = vmatprep.subr.mxu0 0.0
      %937 = vmatpush1.msra.mxu0 0.0
      %938 = vmatprep.subr.mxu0 0.0
      %939 = vmatpush1.msra.mxu0 0.0
      %940 = vmatprep.subr.mxu0 0.0
      %941 = vmatpush1.msra.mxu0 0.0
      %942 = vmatprep.subr.mxu0 0.0
      %943 = vmatpush1.msra.mxu0 0.0
      %944 = vmatprep.subr.mxu0 0.0
      %945 = vmatpush1.msra.mxu0 0.0
      %946 = vmatprep.subr.mxu0 0.0
      %947 = vmatpush1.msra.mxu0 0.0
      %948 = vmatprep.subr.mxu0 0.0
      %949 = vmatpush1.msra.mxu0 0.0
      %950 = vmatprep.subr.mxu0 0.0
      %951 = vmatpush1.msra.mxu0 0.0
      %952 = vmatprep.subr.mxu0 0.0
      %953 = vmatpush1.msra.mxu0 0.0
      %954 = vmatprep.subr.mxu0 0.0
      %955 = vmatpush1.msra.mxu0 0.0
      %956 = vmatprep.subr.mxu0 0.0
      %957 = vmatpush1.msra.mxu0 0.0
      %958 = vmatprep.mubr.f32.mxu0 0.0
      %959 = vmatmul.mubr.f32.gmra.mrb[0].mxu0 %v883
      %v960 = vpop.f32.mrb[0].mxu0
      %v961 = vadd.f32 0.0, %v960
      %v962 = vpop.f32.mrb[0].mxu0
      %v963 = vadd.f32 0.0, %v962
      %964 = vdwg.mxu0
      %965 = vmatprep.subr.mxu0 0.0
      %966 = vmatpush1.msra.mxu0 %v892
      %967 = vmatprep.subr.mxu0 0.0
      %968 = vmatpush1.msra.mxu0 0.0
      %969 = vmatprep.subr.mxu0 0.0
      %970 = vmatpush1.msra.mxu0 0.0
      %971 = vmatprep.subr.mxu0 0.0
      %972 = vmatpush1.msra.mxu0 0.0
      %973 = vmatprep.subr.mxu0 0.0
      %974 = vmatpush1.msra.mxu0 0.0
      %975 = vmatprep.subr.mxu0 0.0
      %976 = vmatpush1.msra.mxu0 0.0
      %977 = vmatprep.subr.mxu0 0.0
      %978 = vmatpush1.msra.mxu0 0.0
      %979 = vmatprep.subr.mxu0 0.0
      %980 = vmatpush1.msra.mxu0 0.0
      %981 = vmatprep.subr.mxu0 0.0
      %982 = vmatpush1.msra.mxu0 0.0
      %983 = vmatprep.subr.mxu0 0.0
      %984 = vmatpush1.msra.mxu0 0.0
      %985 = vmatprep.subr.mxu0 0.0
      %986 = vmatpush1.msra.mxu0 0.0
      %987 = vmatprep.subr.mxu0 0.0
      %988 = vmatpush1.msra.mxu0 0.0
      %989 = vmatprep.subr.mxu0 0.0
      %990 = vmatpush1.msra.mxu0 0.0
      %991 = vmatprep.subr.mxu0 0.0
      %992 = vmatpush1.msra.mxu0 0.0
      %993 = vmatprep.subr.mxu0 0.0
      %994 = vmatpush1.msra.mxu0 0.0
      %995 = vmatprep.subr.mxu0 0.0
      %996 = vmatpush1.msra.mxu0 0.0
      %997 = vmatprep.subr.mxu0 0.0
      %998 = vmatpush1.msra.mxu0 0.0
      %999 = vmatprep.subr.mxu0 0.0
      %1000 = vmatpush1.msra.mxu0 0.0
      %1001 = vmatprep.subr.mxu0 0.0
      %1002 = vmatpush1.msra.mxu0 0.0
      %1003 = vmatprep.subr.mxu0 0.0
      %1004 = vmatpush1.msra.mxu0 0.0
      %1005 = vmatprep.subr.mxu0 0.0
      %1006 = vmatpush1.msra.mxu0 0.0
      %1007 = vmatprep.subr.mxu0 0.0
      %1008 = vmatpush1.msra.mxu0 0.0
      %1009 = vmatprep.subr.mxu0 0.0
      %1010 = vmatpush1.msra.mxu0 0.0
      %1011 = vmatprep.subr.mxu0 0.0
      %1012 = vmatpush1.msra.mxu0 0.0
      %1013 = vmatprep.subr.mxu0 0.0
      %1014 = vmatpush1.msra.mxu0 0.0
      %1015 = vmatprep.subr.mxu0 0.0
      %1016 = vmatpush1.msra.mxu0 0.0
      %1017 = vmatprep.subr.mxu0 0.0
      %1018 = vmatpush1.msra.mxu0 0.0
      %1019 = vmatprep.subr.mxu0 0.0
      %1020 = vmatpush1.msra.mxu0 0.0
      %1021 = vmatprep.subr.mxu0 0.0
      %1022 = vmatpush1.msra.mxu0 0.0
      %1023 = vmatprep.subr.mxu0 0.0
      %1024 = vmatpush1.msra.mxu0 0.0
      %1025 = vmatprep.subr.mxu0 0.0
      %1026 = vmatpush1.msra.mxu0 0.0
      %1027 = vmatprep.subr.mxu0 0.0
      %1028 = vmatpush1.msra.mxu0 0.0
      %1029 = vmatprep.mubr.f32.mxu0 0.0
      %1030 = vmatmul.mubr.f32.gmra.mrb[0].mxu0 %v883
      %v1031 = vpop.f32.mrb[0].mxu0
      %v1032 = vadd.f32 0.0, %v1031
      %v1033 = vpop.f32.mrb[0].mxu0
      %1034 = vdwg.mxu0
      %v1035 = vadd.f32 %v867, %v961
      %v1036 = vadd.f32 %v868, %v963
      %v1037 = vadd.f32 %v869, %v1032
      %1039 = vrot.lane.b32.xlu0 %v332, 112
      %v1040 = vpop.permute.xlu0 %1039
      %1041 = vrot.lane.b32.xlu0 %v393, 112
      %v1042 = vpop.permute.xlu0 %1041
      %1043 = vrot.lane.b32.xlu0 %v333, 112
      %v1044 = vpop.permute.xlu0 %1043
      %vm1045 = vcmp.lt.s32.totalorder %v383, 112
      %v1046 = vsel %vm1045, %v1042, %v1044
      %v1047 = vsel %vm1045, %v1040, %v1042
      %v1048 = vsel %vm1045, %v1044, %v1040
      %s1049 = scalar_lea.vmem %s1, 32
      %v1050 = vld [vmem:[%s1049] sm:$0xff]
      %v1052 = vsel %vm394, %v1050, 0
      %v1055 = vsel %vm398, %v1047, 0
      %v1058 = vsel %vm398, %v1046, 0
      %v1061 = vsel %vm398, %v1048, 0
      %1063 = vmatprep.subr.mxu0 %v1058
      %1064 = vmatpush1.msra.mxu0 %v1055
      %1065 = vmatprep.subr.mxu0 0.0
      %1066 = vmatpush1.msra.mxu0 0.0
      %1067 = vmatprep.subr.mxu0 0.0
      %1068 = vmatpush1.msra.mxu0 0.0
      %1069 = vmatprep.subr.mxu0 0.0
      %1070 = vmatpush1.msra.mxu0 0.0
      %1071 = vmatprep.subr.mxu0 0.0
      %1072 = vmatpush1.msra.mxu0 0.0
      %1073 = vmatprep.subr.mxu0 0.0
      %1074 = vmatpush1.msra.mxu0 0.0
      %1075 = vmatprep.subr.mxu0 0.0
      %1076 = vmatpush1.msra.mxu0 0.0
      %1077 = vmatprep.subr.mxu0 0.0
      %1078 = vmatpush1.msra.mxu0 0.0
      %1079 = vmatprep.subr.mxu0 0.0
      %1080 = vmatpush1.msra.mxu0 0.0
      %1081 = vmatprep.subr.mxu0 0.0
      %1082 = vmatpush1.msra.mxu0 0.0
      %1083 = vmatprep.subr.mxu0 0.0
      %1084 = vmatpush1.msra.mxu0 0.0
      %1085 = vmatprep.subr.mxu0 0.0
      %1086 = vmatpush1.msra.mxu0 0.0
      %1087 = vmatprep.subr.mxu0 0.0
      %1088 = vmatpush1.msra.mxu0 0.0
      %1089 = vmatprep.subr.mxu0 0.0
      %1090 = vmatpush1.msra.mxu0 0.0
      %1091 = vmatprep.subr.mxu0 0.0
      %1092 = vmatpush1.msra.mxu0 0.0
      %1093 = vmatprep.subr.mxu0 0.0
      %1094 = vmatpush1.msra.mxu0 0.0
      %1095 = vmatprep.subr.mxu0 0.0
      %1096 = vmatpush1.msra.mxu0 0.0
      %1097 = vmatprep.subr.mxu0 0.0
      %1098 = vmatpush1.msra.mxu0 0.0
      %1099 = vmatprep.subr.mxu0 0.0
      %1100 = vmatpush1.msra.mxu0 0.0
      %1101 = vmatprep.subr.mxu0 0.0
      %1102 = vmatpush1.msra.mxu0 0.0
      %1103 = vmatprep.subr.mxu0 0.0
      %1104 = vmatpush1.msra.mxu0 0.0
      %1105 = vmatprep.subr.mxu0 0.0
      %1106 = vmatpush1.msra.mxu0 0.0
      %1107 = vmatprep.subr.mxu0 0.0
      %1108 = vmatpush1.msra.mxu0 0.0
      %1109 = vmatprep.subr.mxu0 0.0
      %1110 = vmatpush1.msra.mxu0 0.0
      %1111 = vmatprep.subr.mxu0 0.0
      %1112 = vmatpush1.msra.mxu0 0.0
      %1113 = vmatprep.subr.mxu0 0.0
      %1114 = vmatpush1.msra.mxu0 0.0
      %1115 = vmatprep.subr.mxu0 0.0
      %1116 = vmatpush1.msra.mxu0 0.0
      %1117 = vmatprep.subr.mxu0 0.0
      %1118 = vmatpush1.msra.mxu0 0.0
      %1119 = vmatprep.subr.mxu0 0.0
      %1120 = vmatpush1.msra.mxu0 0.0
      %1121 = vmatprep.subr.mxu0 0.0
      %1122 = vmatpush1.msra.mxu0 0.0
      %1123 = vmatprep.subr.mxu0 0.0
      %1124 = vmatpush1.msra.mxu0 0.0
      %1125 = vmatprep.subr.mxu0 0.0
      %1126 = vmatpush1.msra.mxu0 0.0
      %1127 = vmatprep.mubr.f32.mxu0 0.0
      %1128 = vmatmul.mubr.f32.gmra.mrb[0].mxu0 %v1052
      %v1129 = vpop.f32.mrb[0].mxu0
      %v1130 = vadd.f32 0.0, %v1129
      %v1131 = vpop.f32.mrb[0].mxu0
      %v1132 = vadd.f32 0.0, %v1131
      %1133 = vdwg.mxu0
      %1134 = vmatprep.subr.mxu0 0.0
      %1135 = vmatpush1.msra.mxu0 %v1061
      %1136 = vmatprep.subr.mxu0 0.0
      %1137 = vmatpush1.msra.mxu0 0.0
      %1138 = vmatprep.subr.mxu0 0.0
      %1139 = vmatpush1.msra.mxu0 0.0
      %1140 = vmatprep.subr.mxu0 0.0
      %1141 = vmatpush1.msra.mxu0 0.0
      %1142 = vmatprep.subr.mxu0 0.0
      %1143 = vmatpush1.msra.mxu0 0.0
      %1144 = vmatprep.subr.mxu0 0.0
      %1145 = vmatpush1.msra.mxu0 0.0
      %1146 = vmatprep.subr.mxu0 0.0
      %1147 = vmatpush1.msra.mxu0 0.0
      %1148 = vmatprep.subr.mxu0 0.0
      %1149 = vmatpush1.msra.mxu0 0.0
      %1150 = vmatprep.subr.mxu0 0.0
      %1151 = vmatpush1.msra.mxu0 0.0
      %1152 = vmatprep.subr.mxu0 0.0
      %1153 = vmatpush1.msra.mxu0 0.0
      %1154 = vmatprep.subr.mxu0 0.0
      %1155 = vmatpush1.msra.mxu0 0.0
      %1156 = vmatprep.subr.mxu0 0.0
      %1157 = vmatpush1.msra.mxu0 0.0
      %1158 = vmatprep.subr.mxu0 0.0
      %1159 = vmatpush1.msra.mxu0 0.0
      %1160 = vmatprep.subr.mxu0 0.0
      %1161 = vmatpush1.msra.mxu0 0.0
      %1162 = vmatprep.subr.mxu0 0.0
      %1163 = vmatpush1.msra.mxu0 0.0
      %1164 = vmatprep.subr.mxu0 0.0
      %1165 = vmatpush1.msra.mxu0 0.0
      %1166 = vmatprep.subr.mxu0 0.0
      %1167 = vmatpush1.msra.mxu0 0.0
      %1168 = vmatprep.subr.mxu0 0.0
      %1169 = vmatpush1.msra.mxu0 0.0
      %1170 = vmatprep.subr.mxu0 0.0
      %1171 = vmatpush1.msra.mxu0 0.0
      %1172 = vmatprep.subr.mxu0 0.0
      %1173 = vmatpush1.msra.mxu0 0.0
      %1174 = vmatprep.subr.mxu0 0.0
      %1175 = vmatpush1.msra.mxu0 0.0
      %1176 = vmatprep.subr.mxu0 0.0
      %1177 = vmatpush1.msra.mxu0 0.0
      %1178 = vmatprep.subr.mxu0 0.0
      %1179 = vmatpush1.msra.mxu0 0.0
      %1180 = vmatprep.subr.mxu0 0.0
      %1181 = vmatpush1.msra.mxu0 0.0
      %1182 = vmatprep.subr.mxu0 0.0
      %1183 = vmatpush1.msra.mxu0 0.0
      %1184 = vmatprep.subr.mxu0 0.0
      %1185 = vmatpush1.msra.mxu0 0.0
      %1186 = vmatprep.subr.mxu0 0.0
      %1187 = vmatpush1.msra.mxu0 0.0
      %1188 = vmatprep.subr.mxu0 0.0
      %1189 = vmatpush1.msra.mxu0 0.0
      %1190 = vmatprep.subr.mxu0 0.0
      %1191 = vmatpush1.msra.mxu0 0.0
      %1192 = vmatprep.subr.mxu0 0.0
      %1193 = vmatpush1.msra.mxu0 0.0
      %1194 = vmatprep.subr.mxu0 0.0
      %1195 = vmatpush1.msra.mxu0 0.0
      %1196 = vmatprep.subr.mxu0 0.0
      %1197 = vmatpush1.msra.mxu0 0.0
      %1198 = vmatprep.mubr.f32.mxu0 0.0
      %1199 = vmatmul.mubr.f32.gmra.mrb[0].mxu0 %v1052
      %v1200 = vpop.f32.mrb[0].mxu0
      %v1201 = vadd.f32 0.0, %v1200
      %v1202 = vpop.f32.mrb[0].mxu0
      %1203 = vdwg.mxu0
      %v1204 = vadd.f32 %v1035, %v1130
      %v1205 = vadd.f32 %v1036, %v1132
      %v1206 = vadd.f32 %v1037, %v1201
      %1207 = vrot.lane.b32.xlu0 %v371, 111
      %v1208 = vpop.permute.xlu0 %1207
      %1209 = vrot.lane.b32.xlu0 %v700, 111
      %v1210 = vpop.permute.xlu0 %1209
      %1211 = vrot.lane.b32.xlu0 %v372, 111
      %v1212 = vpop.permute.xlu0 %1211
      %vm1213 = vcmp.lt.s32.totalorder %v383, 111
      %v1214 = vsel %vm1213, %v1210, %v1212
      %v1215 = vsel %vm1213, %v1208, %v1210
      %v1216 = vsel %vm1213, %v1212, %v1208
      %s1217 = scalar_lea.vmem %s1, 40
      %v1218 = vld [vmem:[%s1217] sm:$0xff]
      %v1220 = vsel %vm394, %v1218, 0
      %v1223 = vsel %vm398, %v1215, 0
      %v1226 = vsel %vm398, %v1214, 0
      %v1229 = vsel %vm398, %v1216, 0
      %1231 = vmatprep.subr.mxu0 %v1226
      %1232 = vmatpush1.msra.mxu0 %v1223
      %1233 = vmatprep.subr.mxu0 0.0
      %1234 = vmatpush1.msra.mxu0 0.0
      %1235 = vmatprep.subr.mxu0 0.0
      %1236 = vmatpush1.msra.mxu0 0.0
      %1237 = vmatprep.subr.mxu0 0.0
      %1238 = vmatpush1.msra.mxu0 0.0
      %1239 = vmatprep.subr.mxu0 0.0
      %1240 = vmatpush1.msra.mxu0 0.0
      %1241 = vmatprep.subr.mxu0 0.0
      %1242 = vmatpush1.msra.mxu0 0.0
      %1243 = vmatprep.subr.mxu0 0.0
      %1244 = vmatpush1.msra.mxu0 0.0
      %1245 = vmatprep.subr.mxu0 0.0
      %1246 = vmatpush1.msra.mxu0 0.0
      %1247 = vmatprep.subr.mxu0 0.0
      %1248 = vmatpush1.msra.mxu0 0.0
      %1249 = vmatprep.subr.mxu0 0.0
      %1250 = vmatpush1.msra.mxu0 0.0
      %1251 = vmatprep.subr.mxu0 0.0
      %1252 = vmatpush1.msra.mxu0 0.0
      %1253 = vmatprep.subr.mxu0 0.0
      %1254 = vmatpush1.msra.mxu0 0.0
      %1255 = vmatprep.subr.mxu0 0.0
      %1256 = vmatpush1.msra.mxu0 0.0
      %1257 = vmatprep.subr.mxu0 0.0
      %1258 = vmatpush1.msra.mxu0 0.0
      %1259 = vmatprep.subr.mxu0 0.0
      %1260 = vmatpush1.msra.mxu0 0.0
      %1261 = vmatprep.subr.mxu0 0.0
      %1262 = vmatpush1.msra.mxu0 0.0
      %1263 = vmatprep.subr.mxu0 0.0
      %1264 = vmatpush1.msra.mxu0 0.0
      %1265 = vmatprep.subr.mxu0 0.0
      %1266 = vmatpush1.msra.mxu0 0.0
      %1267 = vmatprep.subr.mxu0 0.0
      %1268 = vmatpush1.msra.mxu0 0.0
      %1269 = vmatprep.subr.mxu0 0.0
      %1270 = vmatpush1.msra.mxu0 0.0
      %1271 = vmatprep.subr.mxu0 0.0
      %1272 = vmatpush1.msra.mxu0 0.0
      %1273 = vmatprep.subr.mxu0 0.0
      %1274 = vmatpush1.msra.mxu0 0.0
      %1275 = vmatprep.subr.mxu0 0.0
      %1276 = vmatpush1.msra.mxu0 0.0
      %1277 = vmatprep.subr.mxu0 0.0
      %1278 = vmatpush1.msra.mxu0 0.0
      %1279 = vmatprep.subr.mxu0 0.0
      %1280 = vmatpush1.msra.mxu0 0.0
      %1281 = vmatprep.subr.mxu0 0.0
      %1282 = vmatpush1.msra.mxu0 0.0
      %1283 = vmatprep.subr.mxu0 0.0
      %1284 = vmatpush1.msra.mxu0 0.0
      %1285 = vmatprep.subr.mxu0 0.0
      %1286 = vmatpush1.msra.mxu0 0.0
      %1287 = vmatprep.subr.mxu0 0.0
      %1288 = vmatpush1.msra.mxu0 0.0
      %1289 = vmatprep.subr.mxu0 0.0
      %1290 = vmatpush1.msra.mxu0 0.0
      %1291 = vmatprep.subr.mxu0 0.0
      %1292 = vmatpush1.msra.mxu0 0.0
      %1293 = vmatprep.subr.mxu0 0.0
      %1294 = vmatpush1.msra.mxu0 0.0
      %1295 = vmatprep.mubr.f32.mxu0 0.0
      %1296 = vmatmul.mubr.f32.gmra.mrb[0].mxu0 %v1220
      %v1297 = vpop.f32.mrb[0].mxu0
      %v1298 = vadd.f32 0.0, %v1297
      %v1299 = vpop.f32.mrb[0].mxu0
      %v1300 = vadd.f32 0.0, %v1299
      %1301 = vdwg.mxu0
      %1302 = vmatprep.subr.mxu0 0.0
      %1303 = vmatpush1.msra.mxu0 %v1229
      %1304 = vmatprep.subr.mxu0 0.0
      %1305 = vmatpush1.msra.mxu0 0.0
      %1306 = vmatprep.subr.mxu0 0.0
      %1307 = vmatpush1.msra.mxu0 0.0
      %1308 = vmatprep.subr.mxu0 0.0
      %1309 = vmatpush1.msra.mxu0 0.0
      %1310 = vmatprep.subr.mxu0 0.0
      %1311 = vmatpush1.msra.mxu0 0.0
      %1312 = vmatprep.subr.mxu0 0.0
      %1313 = vmatpush1.msra.mxu0 0.0
      %1314 = vmatprep.subr.mxu0 0.0
      %1315 = vmatpush1.msra.mxu0 0.0
      %1316 = vmatprep.subr.mxu0 0.0
      %1317 = vmatpush1.msra.mxu0 0.0
      %1318 = vmatprep.subr.mxu0 0.0
      %1319 = vmatpush1.msra.mxu0 0.0
      %1320 = vmatprep.subr.mxu0 0.0
      %1321 = vmatpush1.msra.mxu0 0.0
      %1322 = vmatprep.subr.mxu0 0.0
      %1323 = vmatpush1.msra.mxu0 0.0
      %1324 = vmatprep.subr.mxu0 0.0
      %1325 = vmatpush1.msra.mxu0 0.0
      %1326 = vmatprep.subr.mxu0 0.0
      %1327 = vmatpush1.msra.mxu0 0.0
      %1328 = vmatprep.subr.mxu0 0.0
      %1329 = vmatpush1.msra.mxu0 0.0
      %1330 = vmatprep.subr.mxu0 0.0
      %1331 = vmatpush1.msra.mxu0 0.0
      %1332 = vmatprep.subr.mxu0 0.0
      %1333 = vmatpush1.msra.mxu0 0.0
      %1334 = vmatprep.subr.mxu0 0.0
      %1335 = vmatpush1.msra.mxu0 0.0
      %1336 = vmatprep.subr.mxu0 0.0
      %1337 = vmatpush1.msra.mxu0 0.0
      %1338 = vmatprep.subr.mxu0 0.0
      %1339 = vmatpush1.msra.mxu0 0.0
      %1340 = vmatprep.subr.mxu0 0.0
      %1341 = vmatpush1.msra.mxu0 0.0
      %1342 = vmatprep.subr.mxu0 0.0
      %1343 = vmatpush1.msra.mxu0 0.0
      %1344 = vmatprep.subr.mxu0 0.0
      %1345 = vmatpush1.msra.mxu0 0.0
      %1346 = vmatprep.subr.mxu0 0.0
      %1347 = vmatpush1.msra.mxu0 0.0
      %1348 = vmatprep.subr.mxu0 0.0
      %1349 = vmatpush1.msra.mxu0 0.0
      %1350 = vmatprep.subr.mxu0 0.0
      %1351 = vmatpush1.msra.mxu0 0.0
      %1352 = vmatprep.subr.mxu0 0.0
      %1353 = vmatpush1.msra.mxu0 0.0
      %1354 = vmatprep.subr.mxu0 0.0
      %1355 = vmatpush1.msra.mxu0 0.0
      %1356 = vmatprep.subr.mxu0 0.0
      %1357 = vmatpush1.msra.mxu0 0.0
      %1358 = vmatprep.subr.mxu0 0.0
      %1359 = vmatpush1.msra.mxu0 0.0
      %1360 = vmatprep.subr.mxu0 0.0
      %1361 = vmatpush1.msra.mxu0 0.0
      %1362 = vmatprep.subr.mxu0 0.0
      %1363 = vmatpush1.msra.mxu0 0.0
      %1364 = vmatprep.subr.mxu0 0.0
      %1365 = vmatpush1.msra.mxu0 0.0
      %1366 = vmatprep.mubr.f32.mxu0 0.0
      %1367 = vmatmul.mubr.f32.gmra.mrb[0].mxu0 %v1220
      %v1368 = vpop.f32.mrb[0].mxu0
      %v1369 = vadd.f32 0.0, %v1368
      %v1370 = vpop.f32.mrb[0].mxu0
      %1371 = vdwg.mxu0
      %v1372 = vadd.f32 %v1204, %v1298
      %v1373 = vadd.f32 %v1205, %v1300
      %v1374 = vadd.f32 %v1206, %v1369
      %1375 = vrot.lane.b32.xlu0 %v353, 97
      %v1376 = vpop.permute.xlu0 %1375
      %1377 = vrot.lane.b32.xlu0 %v374, 97
      %v1378 = vpop.permute.xlu0 %1377
      %1379 = vrot.lane.b32.xlu0 %v354, 97
      %v1380 = vpop.permute.xlu0 %1379
      %vm1381 = vcmp.lt.s32.totalorder %v383, 97
      %v1382 = vsel %vm1381, %v1378, %v1380
      %v1383 = vsel %vm1381, %v1376, %v1378
      %v1384 = vsel %vm1381, %v1380, %v1376
      %s1385 = scalar_lea.vmem %s1, 48
      %v1386 = vld [vmem:[%s1385] sm:$0xff]
      %v1388 = vsel %vm394, %v1386, 0
      %v1391 = vsel %vm398, %v1383, 0
      %v1394 = vsel %vm398, %v1382, 0
      %v1397 = vsel %vm398, %v1384, 0
      %1399 = vmatprep.subr.mxu0 %v1394
      %1400 = vmatpush1.msra.mxu0 %v1391
      %1401 = vmatprep.subr.mxu0 0.0
      %1402 = vmatpush1.msra.mxu0 0.0
      %1403 = vmatprep.subr.mxu0 0.0
      %1404 = vmatpush1.msra.mxu0 0.0
      %1405 = vmatprep.subr.mxu0 0.0
      %1406 = vmatpush1.msra.mxu0 0.0
      %1407 = vmatprep.subr.mxu0 0.0
      %1408 = vmatpush1.msra.mxu0 0.0
      %1409 = vmatprep.subr.mxu0 0.0
      %1410 = vmatpush1.msra.mxu0 0.0
      %1411 = vmatprep.subr.mxu0 0.0
      %1412 = vmatpush1.msra.mxu0 0.0
      %1413 = vmatprep.subr.mxu0 0.0
      %1414 = vmatpush1.msra.mxu0 0.0
      %1415 = vmatprep.subr.mxu0 0.0
      %1416 = vmatpush1.msra.mxu0 0.0
      %1417 = vmatprep.subr.mxu0 0.0
      %1418 = vmatpush1.msra.mxu0 0.0
      %1419 = vmatprep.subr.mxu0 0.0
      %1420 = vmatpush1.msra.mxu0 0.0
      %1421 = vmatprep.subr.mxu0 0.0
      %1422 = vmatpush1.msra.mxu0 0.0
      %1423 = vmatprep.subr.mxu0 0.0
      %1424 = vmatpush1.msra.mxu0 0.0
      %1425 = vmatprep.subr.mxu0 0.0
      %1426 = vmatpush1.msra.mxu0 0.0
      %1427 = vmatprep.subr.mxu0 0.0
      %1428 = vmatpush1.msra.mxu0 0.0
      %1429 = vmatprep.subr.mxu0 0.0
      %1430 = vmatpush1.msra.mxu0 0.0
      %1431 = vmatprep.subr.mxu0 0.0
      %1432 = vmatpush1.msra.mxu0 0.0
      %1433 = vmatprep.subr.mxu0 0.0
      %1434 = vmatpush1.msra.mxu0 0.0
      %1435 = vmatprep.subr.mxu0 0.0
      %1436 = vmatpush1.msra.mxu0 0.0
      %1437 = vmatprep.subr.mxu0 0.0
      %1438 = vmatpush1.msra.mxu0 0.0
      %1439 = vmatprep.subr.mxu0 0.0
      %1440 = vmatpush1.msra.mxu0 0.0
      %1441 = vmatprep.subr.mxu0 0.0
      %1442 = vmatpush1.msra.mxu0 0.0
      %1443 = vmatprep.subr.mxu0 0.0
      %1444 = vmatpush1.msra.mxu0 0.0
      %1445 = vmatprep.subr.mxu0 0.0
      %1446 = vmatpush1.msra.mxu0 0.0
      %1447 = vmatprep.subr.mxu0 0.0
      %1448 = vmatpush1.msra.mxu0 0.0
      %1449 = vmatprep.subr.mxu0 0.0
      %1450 = vmatpush1.msra.mxu0 0.0
      %1451 = vmatprep.subr.mxu0 0.0
      %1452 = vmatpush1.msra.mxu0 0.0
      %1453 = vmatprep.subr.mxu0 0.0
      %1454 = vmatpush1.msra.mxu0 0.0
      %1455 = vmatprep.subr.mxu0 0.0
      %1456 = vmatpush1.msra.mxu0 0.0
      %1457 = vmatprep.subr.mxu0 0.0
      %1458 = vmatpush1.msra.mxu0 0.0
      %1459 = vmatprep.subr.mxu0 0.0
      %1460 = vmatpush1.msra.mxu0 0.0
      %1461 = vmatprep.subr.mxu0 0.0
      %1462 = vmatpush1.msra.mxu0 0.0
      %1463 = vmatprep.mubr.f32.mxu0 0.0
      %1464 = vmatmul.mubr.f32.gmra.mrb[0].mxu0 %v1388
      %v1465 = vpop.f32.mrb[0].mxu0
      %v1466 = vadd.f32 0.0, %v1465
      %v1467 = vpop.f32.mrb[0].mxu0
      %v1468 = vadd.f32 0.0, %v1467
      %1469 = vdwg.mxu0
      %1470 = vmatprep.subr.mxu0 0.0
      %1471 = vmatpush1.msra.mxu0 %v1397
      %1472 = vmatprep.subr.mxu0 0.0
      %1473 = vmatpush1.msra.mxu0 0.0
      %1474 = vmatprep.subr.mxu0 0.0
      %1475 = vmatpush1.msra.mxu0 0.0
      %1476 = vmatprep.subr.mxu0 0.0
      %1477 = vmatpush1.msra.mxu0 0.0
      %1478 = vmatprep.subr.mxu0 0.0
      %1479 = vmatpush1.msra.mxu0 0.0
      %1480 = vmatprep.subr.mxu0 0.0
      %1481 = vmatpush1.msra.mxu0 0.0
      %1482 = vmatprep.subr.mxu0 0.0
      %1483 = vmatpush1.msra.mxu0 0.0
      %1484 = vmatprep.subr.mxu0 0.0
      %1485 = vmatpush1.msra.mxu0 0.0
      %1486 = vmatprep.subr.mxu0 0.0
      %1487 = vmatpush1.msra.mxu0 0.0
      %1488 = vmatprep.subr.mxu0 0.0
      %1489 = vmatpush1.msra.mxu0 0.0
      %1490 = vmatprep.subr.mxu0 0.0
      %1491 = vmatpush1.msra.mxu0 0.0
      %1492 = vmatprep.subr.mxu0 0.0
      %1493 = vmatpush1.msra.mxu0 0.0
      %1494 = vmatprep.subr.mxu0 0.0
      %1495 = vmatpush1.msra.mxu0 0.0
      %1496 = vmatprep.subr.mxu0 0.0
      %1497 = vmatpush1.msra.mxu0 0.0
      %1498 = vmatprep.subr.mxu0 0.0
      %1499 = vmatpush1.msra.mxu0 0.0
      %1500 = vmatprep.subr.mxu0 0.0
      %1501 = vmatpush1.msra.mxu0 0.0
      %1502 = vmatprep.subr.mxu0 0.0
      %1503 = vmatpush1.msra.mxu0 0.0
      %1504 = vmatprep.subr.mxu0 0.0
      %1505 = vmatpush1.msra.mxu0 0.0
      %1506 = vmatprep.subr.mxu0 0.0
      %1507 = vmatpush1.msra.mxu0 0.0
      %1508 = vmatprep.subr.mxu0 0.0
      %1509 = vmatpush1.msra.mxu0 0.0
      %1510 = vmatprep.subr.mxu0 0.0
      %1511 = vmatpush1.msra.mxu0 0.0
      %1512 = vmatprep.subr.mxu0 0.0
      %1513 = vmatpush1.msra.mxu0 0.0
      %1514 = vmatprep.subr.mxu0 0.0
      %1515 = vmatpush1.msra.mxu0 0.0
      %1516 = vmatprep.subr.mxu0 0.0
      %1517 = vmatpush1.msra.mxu0 0.0
      %1518 = vmatprep.subr.mxu0 0.0
      %1519 = vmatpush1.msra.mxu0 0.0
      %1520 = vmatprep.subr.mxu0 0.0
      %1521 = vmatpush1.msra.mxu0 0.0
      %1522 = vmatprep.subr.mxu0 0.0
      %1523 = vmatpush1.msra.mxu0 0.0
      %1524 = vmatprep.subr.mxu0 0.0
      %1525 = vmatpush1.msra.mxu0 0.0
      %1526 = vmatprep.subr.mxu0 0.0
      %1527 = vmatpush1.msra.mxu0 0.0
      %1528 = vmatprep.subr.mxu0 0.0
      %1529 = vmatpush1.msra.mxu0 0.0
      %1530 = vmatprep.subr.mxu0 0.0
      %1531 = vmatpush1.msra.mxu0 0.0
      %1532 = vmatprep.subr.mxu0 0.0
      %1533 = vmatpush1.msra.mxu0 0.0
      %1534 = vmatprep.mubr.f32.mxu0 0.0
      %1535 = vmatmul.mubr.f32.gmra.mrb[0].mxu0 %v1388
      %v1536 = vpop.f32.mrb[0].mxu0
      %v1537 = vadd.f32 0.0, %v1536
      %v1538 = vpop.f32.mrb[0].mxu0
      %1539 = vdwg.mxu0
      %v1540 = vadd.f32 %v1372, %v1466
      %v1541 = vadd.f32 %v1373, %v1468
      %v1542 = vadd.f32 %v1374, %v1537
      %1543 = vrot.lane.b32.xlu0 %v332, 96
      %v1544 = vpop.permute.xlu0 %1543
      %1545 = vrot.lane.b32.xlu0 %v393, 96
      %v1546 = vpop.permute.xlu0 %1545
      %1547 = vrot.lane.b32.xlu0 %v333, 96
      %v1548 = vpop.permute.xlu0 %1547
      %vm1549 = vcmp.lt.s32.totalorder %v383, 96
      %v1550 = vsel %vm1549, %v1546, %v1548
      %v1551 = vsel %vm1549, %v1544, %v1546
      %v1552 = vsel %vm1549, %v1548, %v1544
      %s1553 = scalar_lea.vmem %s1, 56
      %v1554 = vld [vmem:[%s1553] sm:$0xff]
      %v1556 = vsel %vm394, %v1554, 0
      %v1559 = vsel %vm398, %v1551, 0
      %v1562 = vsel %vm398, %v1550, 0
      %v1565 = vsel %vm398, %v1552, 0
      %1567 = vmatprep.subr.mxu0 %v1562
      %1568 = vmatpush1.msra.mxu0 %v1559
      %1569 = vmatprep.subr.mxu0 0.0
      %1570 = vmatpush1.msra.mxu0 0.0
      %1571 = vmatprep.subr.mxu0 0.0
      %1572 = vmatpush1.msra.mxu0 0.0
      %1573 = vmatprep.subr.mxu0 0.0
      %1574 = vmatpush1.msra.mxu0 0.0
      %1575 = vmatprep.subr.mxu0 0.0
      %1576 = vmatpush1.msra.mxu0 0.0
      %1577 = vmatprep.subr.mxu0 0.0
      %1578 = vmatpush1.msra.mxu0 0.0
      %1579 = vmatprep.subr.mxu0 0.0
      %1580 = vmatpush1.msra.mxu0 0.0
      %1581 = vmatprep.subr.mxu0 0.0
      %1582 = vmatpush1.msra.mxu0 0.0
      %1583 = vmatprep.subr.mxu0 0.0
      %1584 = vmatpush1.msra.mxu0 0.0
      %1585 = vmatprep.subr.mxu0 0.0
      %1586 = vmatpush1.msra.mxu0 0.0
      %1587 = vmatprep.subr.mxu0 0.0
      %1588 = vmatpush1.msra.mxu0 0.0
      %1589 = vmatprep.subr.mxu0 0.0
      %1590 = vmatpush1.msra.mxu0 0.0
      %1591 = vmatprep.subr.mxu0 0.0
      %1592 = vmatpush1.msra.mxu0 0.0
      %1593 = vmatprep.subr.mxu0 0.0
      %1594 = vmatpush1.msra.mxu0 0.0
      %1595 = vmatprep.subr.mxu0 0.0
      %1596 = vmatpush1.msra.mxu0 0.0
      %1597 = vmatprep.subr.mxu0 0.0
      %1598 = vmatpush1.msra.mxu0 0.0
      %1599 = vmatprep.subr.mxu0 0.0
      %1600 = vmatpush1.msra.mxu0 0.0
      %1601 = vmatprep.subr.mxu0 0.0
      %1602 = vmatpush1.msra.mxu0 0.0
      %1603 = vmatprep.subr.mxu0 0.0
      %1604 = vmatpush1.msra.mxu0 0.0
      %1605 = vmatprep.subr.mxu0 0.0
      %1606 = vmatpush1.msra.mxu0 0.0
      %1607 = vmatprep.subr.mxu0 0.0
      %1608 = vmatpush1.msra.mxu0 0.0
      %1609 = vmatprep.subr.mxu0 0.0
      %1610 = vmatpush1.msra.mxu0 0.0
      %1611 = vmatprep.subr.mxu0 0.0
      %1612 = vmatpush1.msra.mxu0 0.0
      %1613 = vmatprep.subr.mxu0 0.0
      %1614 = vmatpush1.msra.mxu0 0.0
      %1615 = vmatprep.subr.mxu0 0.0
      %1616 = vmatpush1.msra.mxu0 0.0
      %1617 = vmatprep.subr.mxu0 0.0
      %1618 = vmatpush1.msra.mxu0 0.0
      %1619 = vmatprep.subr.mxu0 0.0
      %1620 = vmatpush1.msra.mxu0 0.0
      %1621 = vmatprep.subr.mxu0 0.0
      %1622 = vmatpush1.msra.mxu0 0.0
      %1623 = vmatprep.subr.mxu0 0.0
      %1624 = vmatpush1.msra.mxu0 0.0
      %1625 = vmatprep.subr.mxu0 0.0
      %1626 = vmatpush1.msra.mxu0 0.0
      %1627 = vmatprep.subr.mxu0 0.0
      %1628 = vmatpush1.msra.mxu0 0.0
      %1629 = vmatprep.subr.mxu0 0.0
      %1630 = vmatpush1.msra.mxu0 0.0
      %1631 = vmatprep.mubr.f32.mxu0 0.0
      %1632 = vmatmul.mubr.f32.gmra.mrb[0].mxu0 %v1556
      %v1633 = vpop.f32.mrb[0].mxu0
      %v1634 = vadd.f32 0.0, %v1633
      %v1635 = vpop.f32.mrb[0].mxu0
      %v1636 = vadd.f32 0.0, %v1635
      %1637 = vdwg.mxu0
      %1638 = vmatprep.subr.mxu0 0.0
      %1639 = vmatpush1.msra.mxu0 %v1565
      %1640 = vmatprep.subr.mxu0 0.0
      %1641 = vmatpush1.msra.mxu0 0.0
      %1642 = vmatprep.subr.mxu0 0.0
      %1643 = vmatpush1.msra.mxu0 0.0
      %1644 = vmatprep.subr.mxu0 0.0
      %1645 = vmatpush1.msra.mxu0 0.0
      %1646 = vmatprep.subr.mxu0 0.0
      %1647 = vmatpush1.msra.mxu0 0.0
      %1648 = vmatprep.subr.mxu0 0.0
      %1649 = vmatpush1.msra.mxu0 0.0
      %1650 = vmatprep.subr.mxu0 0.0
      %1651 = vmatpush1.msra.mxu0 0.0
      %1652 = vmatprep.subr.mxu0 0.0
      %1653 = vmatpush1.msra.mxu0 0.0
      %1654 = vmatprep.subr.mxu0 0.0
      %1655 = vmatpush1.msra.mxu0 0.0
      %1656 = vmatprep.subr.mxu0 0.0
      %1657 = vmatpush1.msra.mxu0 0.0
      %1658 = vmatprep.subr.mxu0 0.0
      %1659 = vmatpush1.msra.mxu0 0.0
      %1660 = vmatprep.subr.mxu0 0.0
      %1661 = vmatpush1.msra.mxu0 0.0
      %1662 = vmatprep.subr.mxu0 0.0
      %1663 = vmatpush1.msra.mxu0 0.0
      %1664 = vmatprep.subr.mxu0 0.0
      %1665 = vmatpush1.msra.mxu0 0.0
      %1666 = vmatprep.subr.mxu0 0.0
      %1667 = vmatpush1.msra.mxu0 0.0
      %1668 = vmatprep.subr.mxu0 0.0
      %1669 = vmatpush1.msra.mxu0 0.0
      %1670 = vmatprep.subr.mxu0 0.0
      %1671 = vmatpush1.msra.mxu0 0.0
      %1672 = vmatprep.subr.mxu0 0.0
      %1673 = vmatpush1.msra.mxu0 0.0
      %1674 = vmatprep.subr.mxu0 0.0
      %1675 = vmatpush1.msra.mxu0 0.0
      %1676 = vmatprep.subr.mxu0 0.0
      %1677 = vmatpush1.msra.mxu0 0.0
      %1678 = vmatprep.subr.mxu0 0.0
      %1679 = vmatpush1.msra.mxu0 0.0
      %1680 = vmatprep.subr.mxu0 0.0
      %1681 = vmatpush1.msra.mxu0 0.0
      %1682 = vmatprep.subr.mxu0 0.0
      %1683 = vmatpush1.msra.mxu0 0.0
      %1684 = vmatprep.subr.mxu0 0.0
      %1685 = vmatpush1.msra.mxu0 0.0
      %1686 = vmatprep.subr.mxu0 0.0
      %1687 = vmatpush1.msra.mxu0 0.0
      %1688 = vmatprep.subr.mxu0 0.0
      %1689 = vmatpush1.msra.mxu0 0.0
      %1690 = vmatprep.subr.mxu0 0.0
      %1691 = vmatpush1.msra.mxu0 0.0
      %1692 = vmatprep.subr.mxu0 0.0
      %1693 = vmatpush1.msra.mxu0 0.0
      %1694 = vmatprep.subr.mxu0 0.0
      %1695 = vmatpush1.msra.mxu0 0.0
      %1696 = vmatprep.subr.mxu0 0.0
      %1697 = vmatpush1.msra.mxu0 0.0
      %1698 = vmatprep.subr.mxu0 0.0
      %1699 = vmatpush1.msra.mxu0 0.0
      %1700 = vmatprep.subr.mxu0 0.0
      %1701 = vmatpush1.msra.mxu0 0.0
      %1702 = vmatprep.mubr.f32.mxu0 0.0
      %1703 = vmatmul.mubr.f32.gmra.mrb[0].mxu0 %v1556
      %v1704 = vpop.f32.mrb[0].mxu0
      %v1705 = vadd.f32 0.0, %v1704
      %v1706 = vpop.f32.mrb[0].mxu0
      %1707 = vdwg.mxu0
      %v1708 = vadd.f32 %v1540, %v1634
      %v1709 = vadd.f32 %v1541, %v1636
      %v1710 = vadd.f32 %v1542, %v1705
      %1711 = vrot.lane.b32.xlu0 %v371, 95
      %v1712 = vpop.permute.xlu0 %1711
      %1713 = vrot.lane.b32.xlu0 %v700, 95
      %v1714 = vpop.permute.xlu0 %1713
      %1715 = vrot.lane.b32.xlu0 %v372, 95
      %v1716 = vpop.permute.xlu0 %1715
      %vm1717 = vcmp.lt.s32.totalorder %v383, 95
      %v1718 = vsel %vm1717, %v1714, %v1716
      %v1719 = vsel %vm1717, %v1712, %v1714
      %v1720 = vsel %vm1717, %v1716, %v1712
      %s1721 = scalar_lea.vmem %s1, 64
      %v1722 = vld [vmem:[%s1721] sm:$0xff]
      %v1724 = vsel %vm394, %v1722, 0
      %v1727 = vsel %vm398, %v1719, 0
      %v1730 = vsel %vm398, %v1718, 0
      %v1733 = vsel %vm398, %v1720, 0
      %1735 = vmatprep.subr.mxu0 %v1730
      %1736 = vmatpush1.msra.mxu0 %v1727
      %1737 = vmatprep.subr.mxu0 0.0
      %1738 = vmatpush1.msra.mxu0 0.0
      %1739 = vmatprep.subr.mxu0 0.0
      %1740 = vmatpush1.msra.mxu0 0.0
      %1741 = vmatprep.subr.mxu0 0.0
      %1742 = vmatpush1.msra.mxu0 0.0
      %1743 = vmatprep.subr.mxu0 0.0
      %1744 = vmatpush1.msra.mxu0 0.0
      %1745 = vmatprep.subr.mxu0 0.0
      %1746 = vmatpush1.msra.mxu0 0.0
      %1747 = vmatprep.subr.mxu0 0.0
      %1748 = vmatpush1.msra.mxu0 0.0
      %1749 = vmatprep.subr.mxu0 0.0
      %1750 = vmatpush1.msra.mxu0 0.0
      %1751 = vmatprep.subr.mxu0 0.0
      %1752 = vmatpush1.msra.mxu0 0.0
      %1753 = vmatprep.subr.mxu0 0.0
      %1754 = vmatpush1.msra.mxu0 0.0
      %1755 = vmatprep.subr.mxu0 0.0
      %1756 = vmatpush1.msra.mxu0 0.0
      %1757 = vmatprep.subr.mxu0 0.0
      %1758 = vmatpush1.msra.mxu0 0.0
      %1759 = vmatprep.subr.mxu0 0.0
      %1760 = vmatpush1.msra.mxu0 0.0
      %1761 = vmatprep.subr.mxu0 0.0
      %1762 = vmatpush1.msra.mxu0 0.0
      %1763 = vmatprep.subr.mxu0 0.0
      %1764 = vmatpush1.msra.mxu0 0.0
      %1765 = vmatprep.subr.mxu0 0.0
      %1766 = vmatpush1.msra.mxu0 0.0
      %1767 = vmatprep.subr.mxu0 0.0
      %1768 = vmatpush1.msra.mxu0 0.0
      %1769 = vmatprep.subr.mxu0 0.0
      %1770 = vmatpush1.msra.mxu0 0.0
      %1771 = vmatprep.subr.mxu0 0.0
      %1772 = vmatpush1.msra.mxu0 0.0
      %1773 = vmatprep.subr.mxu0 0.0
      %1774 = vmatpush1.msra.mxu0 0.0
      %1775 = vmatprep.subr.mxu0 0.0
      %1776 = vmatpush1.msra.mxu0 0.0
      %1777 = vmatprep.subr.mxu0 0.0
      %1778 = vmatpush1.msra.mxu0 0.0
      %1779 = vmatprep.subr.mxu0 0.0
      %1780 = vmatpush1.msra.mxu0 0.0
      %1781 = vmatprep.subr.mxu0 0.0
      %1782 = vmatpush1.msra.mxu0 0.0
      %1783 = vmatprep.subr.mxu0 0.0
      %1784 = vmatpush1.msra.mxu0 0.0
      %1785 = vmatprep.subr.mxu0 0.0
      %1786 = vmatpush1.msra.mxu0 0.0
      %1787 = vmatprep.subr.mxu0 0.0
      %1788 = vmatpush1.msra.mxu0 0.0
      %1789 = vmatprep.subr.mxu0 0.0
      %1790 = vmatpush1.msra.mxu0 0.0
      %1791 = vmatprep.subr.mxu0 0.0
      %1792 = vmatpush1.msra.mxu0 0.0
      %1793 = vmatprep.subr.mxu0 0.0
      %1794 = vmatpush1.msra.mxu0 0.0
      %1795 = vmatprep.subr.mxu0 0.0
      %1796 = vmatpush1.msra.mxu0 0.0
      %1797 = vmatprep.subr.mxu0 0.0
      %1798 = vmatpush1.msra.mxu0 0.0
      %1799 = vmatprep.mubr.f32.mxu0 0.0
      %1800 = vmatmul.mubr.f32.gmra.mrb[0].mxu0 %v1724
      %v1801 = vpop.f32.mrb[0].mxu0
      %v1802 = vadd.f32 0.0, %v1801
      %v1803 = vpop.f32.mrb[0].mxu0
      %v1804 = vadd.f32 0.0, %v1803
      %1805 = vdwg.mxu0
      %1806 = vmatprep.subr.mxu0 0.0
      %1807 = vmatpush1.msra.mxu0 %v1733
      %1808 = vmatprep.subr.mxu0 0.0
      %1809 = vmatpush1.msra.mxu0 0.0
      %1810 = vmatprep.subr.mxu0 0.0
      %1811 = vmatpush1.msra.mxu0 0.0
      %1812 = vmatprep.subr.mxu0 0.0
      %1813 = vmatpush1.msra.mxu0 0.0
      %1814 = vmatprep.subr.mxu0 0.0
      %1815 = vmatpush1.msra.mxu0 0.0
      %1816 = vmatprep.subr.mxu0 0.0
      %1817 = vmatpush1.msra.mxu0 0.0
      %1818 = vmatprep.subr.mxu0 0.0
      %1819 = vmatpush1.msra.mxu0 0.0
      %1820 = vmatprep.subr.mxu0 0.0
      %1821 = vmatpush1.msra.mxu0 0.0
      %1822 = vmatprep.subr.mxu0 0.0
      %1823 = vmatpush1.msra.mxu0 0.0
      %1824 = vmatprep.subr.mxu0 0.0
      %1825 = vmatpush1.msra.mxu0 0.0
      %1826 = vmatprep.subr.mxu0 0.0
      %1827 = vmatpush1.msra.mxu0 0.0
      %1828 = vmatprep.subr.mxu0 0.0
      %1829 = vmatpush1.msra.mxu0 0.0
      %1830 = vmatprep.subr.mxu0 0.0
      %1831 = vmatpush1.msra.mxu0 0.0
      %1832 = vmatprep.subr.mxu0 0.0
      %1833 = vmatpush1.msra.mxu0 0.0
      %1834 = vmatprep.subr.mxu0 0.0
      %1835 = vmatpush1.msra.mxu0 0.0
      %1836 = vmatprep.subr.mxu0 0.0
      %1837 = vmatpush1.msra.mxu0 0.0
      %1838 = vmatprep.subr.mxu0 0.0
      %1839 = vmatpush1.msra.mxu0 0.0
      %1840 = vmatprep.subr.mxu0 0.0
      %1841 = vmatpush1.msra.mxu0 0.0
      %1842 = vmatprep.subr.mxu0 0.0
      %1843 = vmatpush1.msra.mxu0 0.0
      %1844 = vmatprep.subr.mxu0 0.0
      %1845 = vmatpush1.msra.mxu0 0.0
      %1846 = vmatprep.subr.mxu0 0.0
      %1847 = vmatpush1.msra.mxu0 0.0
      %1848 = vmatprep.subr.mxu0 0.0
      %1849 = vmatpush1.msra.mxu0 0.0
      %1850 = vmatprep.subr.mxu0 0.0
      %1851 = vmatpush1.msra.mxu0 0.0
      %1852 = vmatprep.subr.mxu0 0.0
      %1853 = vmatpush1.msra.mxu0 0.0
      %1854 = vmatprep.subr.mxu0 0.0
      %1855 = vmatpush1.msra.mxu0 0.0
      %1856 = vmatprep.subr.mxu0 0.0
      %1857 = vmatpush1.msra.mxu0 0.0
      %1858 = vmatprep.subr.mxu0 0.0
      %1859 = vmatpush1.msra.mxu0 0.0
      %1860 = vmatprep.subr.mxu0 0.0
      %1861 = vmatpush1.msra.mxu0 0.0
      %1862 = vmatprep.subr.mxu0 0.0
      %1863 = vmatpush1.msra.mxu0 0.0
      %1864 = vmatprep.subr.mxu0 0.0
      %1865 = vmatpush1.msra.mxu0 0.0
      %1866 = vmatprep.subr.mxu0 0.0
      %1867 = vmatpush1.msra.mxu0 0.0
      %1868 = vmatprep.subr.mxu0 0.0
      %1869 = vmatpush1.msra.mxu0 0.0
      %1870 = vmatprep.mubr.f32.mxu0 0.0
      %1871 = vmatmul.mubr.f32.gmra.mrb[0].mxu0 %v1724
      %v1872 = vpop.f32.mrb[0].mxu0
      %v1873 = vadd.f32 0.0, %v1872
      %v1874 = vpop.f32.mrb[0].mxu0
      %1875 = vdwg.mxu0
      %v1876 = vadd.f32 %v1708, %v1802
      %v1877 = vadd.f32 %v1709, %v1804
      %v1878 = vadd.f32 %v1710, %v1873
      %v1879 = vld [vmem:[%s2] sm:$0xff]
      %1881 = vset.pattern.permute.xlu0 0
      %1882 = vperm.xlu0 %1881, %v1879
      %v1883 = vpop.permute.xlu0 %1882
      %v1885 = vadd.f32 %v1876, %v1883
      %v1886 = vadd.f32 %v1877, %v1883
      %v1887 = vadd.f32 %v1878, %v1883
      %v1888 = vmax.f32 %v1885, 0.0
      %v1889 = vmax.f32 %v1886, 0.0
      %v1890 = vmax.f32 %v1887, 0.0
      %1891 = vrot.lane.b32.xlu0 %v1888, 16
      %v1892 = vpop.permute.xlu0 %1891
      %1893 = vrot.lane.b32.xlu0 %v1889, 16
      %v1894 = vpop.permute.xlu0 %1893
      %1895 = vrot.lane.b32.xlu0 %v1890, 16
      %v1896 = vpop.permute.xlu0 %1895
      %vm1897 = vcmp.lt.s32.totalorder %v383, 16
      %v1898 = vsel %vm1897, %v1894, %v1896
      %v1899 = vsel %vm1897, %v1892, %v1894
      %v1900 = vsel %vm1897, %v1896, %v1892
      %v1902 = vlaneseq
      %v1903 = vshrl.u32 %v1902, 7
      %v1904 = vsub.s32 0, %v1903
      %v1905 = vrot.slane %v336, %v1904
      %v1906 = vlaneseq
      %v1907 = vshrl.u32 %v1906, 7
      %v1908 = vsub.s32 1, %v1907
      %v1909 = vrot.slane %v336, %v1908
      %v1910 = vlaneseq
      %v1911 = vshrl.u32 %v1910, 7
      %v1912 = vsub.s32 2, %v1911
      %v1913 = vrot.slane %v336, %v1912
      %v1917 = vmul.f32 %v1900, %v1905
      %v1918 = vmul.f32 %v1899, %v1909
      %v1919 = vmul.f32 %v1898, %v1913
      %v1922 = vmul.f32 %v1917, %v341
      %v1923 = vmul.f32 %v1918, %v345
      %v1924 = vmul.f32 %v1919, %v349
      %v1927 = vmul.f32 %v1917, %v359
      %v1928 = vmul.f32 %v1918, %v363
      %v1929 = vmul.f32 %v1919, %v367
      %1930 = vrot.lane.b32.xlu0 %v1922, 1
      %v1931 = vpop.permute.xlu0 %1930
      %1932 = vrot.lane.b32.xlu0 %v1923, 1
      %v1933 = vpop.permute.xlu0 %1932
      %1934 = vrot.lane.b32.xlu0 %v1924, 1
      %v1935 = vpop.permute.xlu0 %1934
      %v1936 = vsel %vm384, %v1933, %v1935
      %v1937 = vsel %vm384, %v1931, %v1933
      %v1938 = vsel %vm384, %v1935, %v1931
      %v1939 = vld [vmem:[%s3] sm:$0xff]
      %s1940 = scalar_lea.vmem %s3, 8
      %v1941 = vld [vmem:[%s1940] sm:$0xff]
      %vm1942 = vcmask 64512
      %v1944 = vsel %vm1942, %v1941, 0
      %1946 = vmatprep.subr.mxu0 %v1918
      %1947 = vmatpush1.msra.mxu0 %v1917
      %1948 = vmatprep.subr.mxu0 0.0
      %1949 = vmatpush1.msra.mxu0 0.0
      %1950 = vmatprep.subr.mxu0 0.0
      %1951 = vmatpush1.msra.mxu0 0.0
      %1952 = vmatprep.subr.mxu0 0.0
      %1953 = vmatpush1.msra.mxu0 0.0
      %1954 = vmatprep.subr.mxu0 0.0
      %1955 = vmatpush1.msra.mxu0 0.0
      %1956 = vmatprep.subr.mxu0 0.0
      %1957 = vmatpush1.msra.mxu0 0.0
      %1958 = vmatprep.subr.mxu0 0.0
      %1959 = vmatpush1.msra.mxu0 0.0
      %1960 = vmatprep.subr.mxu0 0.0
      %1961 = vmatpush1.msra.mxu0 0.0
      %1962 = vmatprep.subr.mxu0 0.0
      %1963 = vmatpush1.msra.mxu0 0.0
      %1964 = vmatprep.subr.mxu0 0.0
      %1965 = vmatpush1.msra.mxu0 0.0
      %1966 = vmatprep.subr.mxu0 0.0
      %1967 = vmatpush1.msra.mxu0 0.0
      %1968 = vmatprep.subr.mxu0 0.0
      %1969 = vmatpush1.msra.mxu0 0.0
      %1970 = vmatprep.subr.mxu0 0.0
      %1971 = vmatpush1.msra.mxu0 0.0
      %1972 = vmatprep.subr.mxu0 0.0
      %1973 = vmatpush1.msra.mxu0 0.0
      %1974 = vmatprep.subr.mxu0 0.0
      %1975 = vmatpush1.msra.mxu0 0.0
      %1976 = vmatprep.subr.mxu0 0.0
      %1977 = vmatpush1.msra.mxu0 0.0
      %1978 = vmatprep.subr.mxu0 0.0
      %1979 = vmatpush1.msra.mxu0 0.0
      %1980 = vmatprep.subr.mxu0 0.0
      %1981 = vmatpush1.msra.mxu0 0.0
      %1982 = vmatprep.subr.mxu0 0.0
      %1983 = vmatpush1.msra.mxu0 0.0
      %1984 = vmatprep.subr.mxu0 0.0
      %1985 = vmatpush1.msra.mxu0 0.0
      %1986 = vmatprep.subr.mxu0 0.0
      %1987 = vmatpush1.msra.mxu0 0.0
      %1988 = vmatprep.subr.mxu0 0.0
      %1989 = vmatpush1.msra.mxu0 0.0
      %1990 = vmatprep.subr.mxu0 0.0
      %1991 = vmatpush1.msra.mxu0 0.0
      %1992 = vmatprep.subr.mxu0 0.0
      %1993 = vmatpush1.msra.mxu0 0.0
      %1994 = vmatprep.subr.mxu0 0.0
      %1995 = vmatpush1.msra.mxu0 0.0
      %1996 = vmatprep.subr.mxu0 0.0
      %1997 = vmatpush1.msra.mxu0 0.0
      %1998 = vmatprep.subr.mxu0 0.0
      %1999 = vmatpush1.msra.mxu0 0.0
      %2000 = vmatprep.subr.mxu0 0.0
      %2001 = vmatpush1.msra.mxu0 0.0
      %2002 = vmatprep.subr.mxu0 0.0
      %2003 = vmatpush1.msra.mxu0 0.0
      %2004 = vmatprep.subr.mxu0 0.0
      %2005 = vmatpush1.msra.mxu0 0.0
      %2006 = vmatprep.subr.mxu0 0.0
      %2007 = vmatpush1.msra.mxu0 0.0
      %2008 = vmatprep.subr.mxu0 0.0
      %2009 = vmatpush1.msra.mxu0 0.0
      %2010 = vmatprep.mubr.f32.mxu0 0.0
      %2011 = vmatmul.mubr.f32.gmra.mrb[0].mxu0 %v1944
      %v2012 = vpop.f32.mrb[0].mxu0
      %v2013 = vadd.f32 0.0, %v2012
      %v2014 = vpop.f32.mrb[0].mxu0
      %v2015 = vadd.f32 0.0, %v2014
      %2016 = vdwg.mxu0
      %2017 = vmatprep.subr.mxu0 0.0
      %2018 = vmatpush1.msra.mxu0 %v1919
      %2019 = vmatprep.subr.mxu0 0.0
      %2020 = vmatpush1.msra.mxu0 0.0
      %2021 = vmatprep.subr.mxu0 0.0
      %2022 = vmatpush1.msra.mxu0 0.0
      %2023 = vmatprep.subr.mxu0 0.0
      %2024 = vmatpush1.msra.mxu0 0.0
      %2025 = vmatprep.subr.mxu0 0.0
      %2026 = vmatpush1.msra.mxu0 0.0
      %2027 = vmatprep.subr.mxu0 0.0
      %2028 = vmatpush1.msra.mxu0 0.0
      %2029 = vmatprep.subr.mxu0 0.0
      %2030 = vmatpush1.msra.mxu0 0.0
      %2031 = vmatprep.subr.mxu0 0.0
      %2032 = vmatpush1.msra.mxu0 0.0
      %2033 = vmatprep.subr.mxu0 0.0
      %2034 = vmatpush1.msra.mxu0 0.0
      %2035 = vmatprep.subr.mxu0 0.0
      %2036 = vmatpush1.msra.mxu0 0.0
      %2037 = vmatprep.subr.mxu0 0.0
      %2038 = vmatpush1.msra.mxu0 0.0
      %2039 = vmatprep.subr.mxu0 0.0
      %2040 = vmatpush1.msra.mxu0 0.0
      %2041 = vmatprep.subr.mxu0 0.0
      %2042 = vmatpush1.msra.mxu0 0.0
      %2043 = vmatprep.subr.mxu0 0.0
      %2044 = vmatpush1.msra.mxu0 0.0
      %2045 = vmatprep.subr.mxu0 0.0
      %2046 = vmatpush1.msra.mxu0 0.0
      %2047 = vmatprep.subr.mxu0 0.0
      %2048 = vmatpush1.msra.mxu0 0.0
      %2049 = vmatprep.subr.mxu0 0.0
      %2050 = vmatpush1.msra.mxu0 0.0
      %2051 = vmatprep.subr.mxu0 0.0
      %2052 = vmatpush1.msra.mxu0 0.0
      %2053 = vmatprep.subr.mxu0 0.0
      %2054 = vmatpush1.msra.mxu0 0.0
      %2055 = vmatprep.subr.mxu0 0.0
      %2056 = vmatpush1.msra.mxu0 0.0
      %2057 = vmatprep.subr.mxu0 0.0
      %2058 = vmatpush1.msra.mxu0 0.0
      %2059 = vmatprep.subr.mxu0 0.0
      %2060 = vmatpush1.msra.mxu0 0.0
      %2061 = vmatprep.subr.mxu0 0.0
      %2062 = vmatpush1.msra.mxu0 0.0
      %2063 = vmatprep.subr.mxu0 0.0
      %2064 = vmatpush1.msra.mxu0 0.0
      %2065 = vmatprep.subr.mxu0 0.0
      %2066 = vmatpush1.msra.mxu0 0.0
      %2067 = vmatprep.subr.mxu0 0.0
      %2068 = vmatpush1.msra.mxu0 0.0
      %2069 = vmatprep.subr.mxu0 0.0
      %2070 = vmatpush1.msra.mxu0 0.0
      %2071 = vmatprep.subr.mxu0 0.0
      %2072 = vmatpush1.msra.mxu0 0.0
      %2073 = vmatprep.subr.mxu0 0.0
      %2074 = vmatpush1.msra.mxu0 0.0
      %2075 = vmatprep.subr.mxu0 0.0
      %2076 = vmatpush1.msra.mxu0 0.0
      %2077 = vmatprep.subr.mxu0 0.0
      %2078 = vmatpush1.msra.mxu0 0.0
      %2079 = vmatprep.subr.mxu0 0.0
      %2080 = vmatpush1.msra.mxu0 0.0
      %2081 = vmatprep.mubr.f32.mxu0 0.0
      %2082 = vmatmul.mubr.f32.gmra.mrb[0].mxu0 %v1944
      %v2083 = vpop.f32.mrb[0].mxu0
      %v2084 = vadd.f32 0.0, %v2083
      %v2085 = vpop.f32.mrb[0].mxu0
      %2086 = vdwg.mxu0
      %v2088 = vsel %vm1942, %v1939, 0
      %2090 = vmatprep.subr.mxu0 %v1937
      %2091 = vmatpush1.msra.mxu0 %v1938
      %2092 = vmatprep.subr.mxu0 0.0
      %2093 = vmatpush1.msra.mxu0 0.0
      %2094 = vmatprep.subr.mxu0 0.0
      %2095 = vmatpush1.msra.mxu0 0.0
      %2096 = vmatprep.subr.mxu0 0.0
      %2097 = vmatpush1.msra.mxu0 0.0
      %2098 = vmatprep.subr.mxu0 0.0
      %2099 = vmatpush1.msra.mxu0 0.0
      %2100 = vmatprep.subr.mxu0 0.0
      %2101 = vmatpush1.msra.mxu0 0.0
      %2102 = vmatprep.subr.mxu0 0.0
      %2103 = vmatpush1.msra.mxu0 0.0
      %2104 = vmatprep.subr.mxu0 0.0
      %2105 = vmatpush1.msra.mxu0 0.0
      %2106 = vmatprep.subr.mxu0 0.0
      %2107 = vmatpush1.msra.mxu0 0.0
      %2108 = vmatprep.subr.mxu0 0.0
      %2109 = vmatpush1.msra.mxu0 0.0
      %2110 = vmatprep.subr.mxu0 0.0
      %2111 = vmatpush1.msra.mxu0 0.0
      %2112 = vmatprep.subr.mxu0 0.0
      %2113 = vmatpush1.msra.mxu0 0.0
      %2114 = vmatprep.subr.mxu0 0.0
      %2115 = vmatpush1.msra.mxu0 0.0
      %2116 = vmatprep.subr.mxu0 0.0
      %2117 = vmatpush1.msra.mxu0 0.0
      %2118 = vmatprep.subr.mxu0 0.0
      %2119 = vmatpush1.msra.mxu0 0.0
      %2120 = vmatprep.subr.mxu0 0.0
      %2121 = vmatpush1.msra.mxu0 0.0
      %2122 = vmatprep.subr.mxu0 0.0
      %2123 = vmatpush1.msra.mxu0 0.0
      %2124 = vmatprep.subr.mxu0 0.0
      %2125 = vmatpush1.msra.mxu0 0.0
      %2126 = vmatprep.subr.mxu0 0.0
      %2127 = vmatpush1.msra.mxu0 0.0
      %2128 = vmatprep.subr.mxu0 0.0
      %2129 = vmatpush1.msra.mxu0 0.0
      %2130 = vmatprep.subr.mxu0 0.0
      %2131 = vmatpush1.msra.mxu0 0.0
      %2132 = vmatprep.subr.mxu0 0.0
      %2133 = vmatpush1.msra.mxu0 0.0
      %2134 = vmatprep.subr.mxu0 0.0
      %2135 = vmatpush1.msra.mxu0 0.0
      %2136 = vmatprep.subr.mxu0 0.0
      %2137 = vmatpush1.msra.mxu0 0.0
      %2138 = vmatprep.subr.mxu0 0.0
      %2139 = vmatpush1.msra.mxu0 0.0
      %2140 = vmatprep.subr.mxu0 0.0
      %2141 = vmatpush1.msra.mxu0 0.0
      %2142 = vmatprep.subr.mxu0 0.0
      %2143 = vmatpush1.msra.mxu0 0.0
      %2144 = vmatprep.subr.mxu0 0.0
      %2145 = vmatpush1.msra.mxu0 0.0
      %2146 = vmatprep.subr.mxu0 0.0
      %2147 = vmatpush1.msra.mxu0 0.0
      %2148 = vmatprep.subr.mxu0 0.0
      %2149 = vmatpush1.msra.mxu0 0.0
      %2150 = vmatprep.subr.mxu0 0.0
      %2151 = vmatpush1.msra.mxu0 0.0
      %2152 = vmatprep.subr.mxu0 0.0
      %2153 = vmatpush1.msra.mxu0 0.0
      %2154 = vmatprep.mubr.f32.mxu0 0.0
      %2155 = vmatmul.mubr.f32.gmra.mrb[0].mxu0 %v2088
      %v2156 = vpop.f32.mrb[0].mxu0
      %v2157 = vadd.f32 %v2013, %v2156
      %v2158 = vpop.f32.mrb[0].mxu0
      %v2159 = vadd.f32 %v2015, %v2158
      %2160 = vdwg.mxu0
      %2161 = vmatprep.subr.mxu0 0.0
      %2162 = vmatpush1.msra.mxu0 %v1936
      %2163 = vmatprep.subr.mxu0 0.0
      %2164 = vmatpush1.msra.mxu0 0.0
      %2165 = vmatprep.subr.mxu0 0.0
      %2166 = vmatpush1.msra.mxu0 0.0
      %2167 = vmatprep.subr.mxu0 0.0
      %2168 = vmatpush1.msra.mxu0 0.0
      %2169 = vmatprep.subr.mxu0 0.0
      %2170 = vmatpush1.msra.mxu0 0.0
      %2171 = vmatprep.subr.mxu0 0.0
      %2172 = vmatpush1.msra.mxu0 0.0
      %2173 = vmatprep.subr.mxu0 0.0
      %2174 = vmatpush1.msra.mxu0 0.0
      %2175 = vmatprep.subr.mxu0 0.0
      %2176 = vmatpush1.msra.mxu0 0.0
      %2177 = vmatprep.subr.mxu0 0.0
      %2178 = vmatpush1.msra.mxu0 0.0
      %2179 = vmatprep.subr.mxu0 0.0
      %2180 = vmatpush1.msra.mxu0 0.0
      %2181 = vmatprep.subr.mxu0 0.0
      %2182 = vmatpush1.msra.mxu0 0.0
      %2183 = vmatprep.subr.mxu0 0.0
      %2184 = vmatpush1.msra.mxu0 0.0
      %2185 = vmatprep.subr.mxu0 0.0
      %2186 = vmatpush1.msra.mxu0 0.0
      %2187 = vmatprep.subr.mxu0 0.0
      %2188 = vmatpush1.msra.mxu0 0.0
      %2189 = vmatprep.subr.mxu0 0.0
      %2190 = vmatpush1.msra.mxu0 0.0
      %2191 = vmatprep.subr.mxu0 0.0
      %2192 = vmatpush1.msra.mxu0 0.0
      %2193 = vmatprep.subr.mxu0 0.0
      %2194 = vmatpush1.msra.mxu0 0.0
      %2195 = vmatprep.subr.mxu0 0.0
      %2196 = vmatpush1.msra.mxu0 0.0
      %2197 = vmatprep.subr.mxu0 0.0
      %2198 = vmatpush1.msra.mxu0 0.0
      %2199 = vmatprep.subr.mxu0 0.0
      %2200 = vmatpush1.msra.mxu0 0.0
      %2201 = vmatprep.subr.mxu0 0.0
      %2202 = vmatpush1.msra.mxu0 0.0
      %2203 = vmatprep.subr.mxu0 0.0
      %2204 = vmatpush1.msra.mxu0 0.0
      %2205 = vmatprep.subr.mxu0 0.0
      %2206 = vmatpush1.msra.mxu0 0.0
      %2207 = vmatprep.subr.mxu0 0.0
      %2208 = vmatpush1.msra.mxu0 0.0
      %2209 = vmatprep.subr.mxu0 0.0
      %2210 = vmatpush1.msra.mxu0 0.0
      %2211 = vmatprep.subr.mxu0 0.0
      %2212 = vmatpush1.msra.mxu0 0.0
      %2213 = vmatprep.subr.mxu0 0.0
      %2214 = vmatpush1.msra.mxu0 0.0
      %2215 = vmatprep.subr.mxu0 0.0
      %2216 = vmatpush1.msra.mxu0 0.0
      %2217 = vmatprep.subr.mxu0 0.0
      %2218 = vmatpush1.msra.mxu0 0.0
      %2219 = vmatprep.subr.mxu0 0.0
      %2220 = vmatpush1.msra.mxu0 0.0
      %2221 = vmatprep.subr.mxu0 0.0
      %2222 = vmatpush1.msra.mxu0 0.0
      %2223 = vmatprep.subr.mxu0 0.0
      %2224 = vmatpush1.msra.mxu0 0.0
      %2225 = vmatprep.mubr.f32.mxu0 0.0
      %2226 = vmatmul.mubr.f32.gmra.mrb[0].mxu0 %v2088
      %v2227 = vpop.f32.mrb[0].mxu0
      %v2228 = vadd.f32 %v2084, %v2227
      %v2229 = vpop.f32.mrb[0].mxu0
      %2230 = vdwg.mxu0
      %2231 = vrot.lane.b32.xlu0 %v1927, 127
      %v2232 = vpop.permute.xlu0 %2231
      %2233 = vrot.lane.b32.xlu0 %v1928, 127
      %v2234 = vpop.permute.xlu0 %2233
      %2235 = vrot.lane.b32.xlu0 %v1929, 127
      %v2236 = vpop.permute.xlu0 %2235
      %v2237 = vsel %vm708, %v2234, %v2236
      %v2238 = vsel %vm708, %v2232, %v2234
      %v2239 = vsel %vm708, %v2236, %v2232
      %s2240 = scalar_lea.vmem %s3, 16
      %v2241 = vld [vmem:[%s2240] sm:$0xff]
      %v2243 = vsel %vm1942, %v2241, 0
      %2245 = vmatprep.subr.mxu0 %v2237
      %2246 = vmatpush1.msra.mxu0 %v2238
      %2247 = vmatprep.subr.mxu0 0.0
      %2248 = vmatpush1.msra.mxu0 0.0
      %2249 = vmatprep.subr.mxu0 0.0
      %2250 = vmatpush1.msra.mxu0 0.0
      %2251 = vmatprep.subr.mxu0 0.0
      %2252 = vmatpush1.msra.mxu0 0.0
      %2253 = vmatprep.subr.mxu0 0.0
      %2254 = vmatpush1.msra.mxu0 0.0
      %2255 = vmatprep.subr.mxu0 0.0
      %2256 = vmatpush1.msra.mxu0 0.0
      %2257 = vmatprep.subr.mxu0 0.0
      %2258 = vmatpush1.msra.mxu0 0.0
      %2259 = vmatprep.subr.mxu0 0.0
      %2260 = vmatpush1.msra.mxu0 0.0
      %2261 = vmatprep.subr.mxu0 0.0
      %2262 = vmatpush1.msra.mxu0 0.0
      %2263 = vmatprep.subr.mxu0 0.0
      %2264 = vmatpush1.msra.mxu0 0.0
      %2265 = vmatprep.subr.mxu0 0.0
      %2266 = vmatpush1.msra.mxu0 0.0
      %2267 = vmatprep.subr.mxu0 0.0
      %2268 = vmatpush1.msra.mxu0 0.0
      %2269 = vmatprep.subr.mxu0 0.0
      %2270 = vmatpush1.msra.mxu0 0.0
      %2271 = vmatprep.subr.mxu0 0.0
      %2272 = vmatpush1.msra.mxu0 0.0
      %2273 = vmatprep.subr.mxu0 0.0
      %2274 = vmatpush1.msra.mxu0 0.0
      %2275 = vmatprep.subr.mxu0 0.0
      %2276 = vmatpush1.msra.mxu0 0.0
      %2277 = vmatprep.subr.mxu0 0.0
      %2278 = vmatpush1.msra.mxu0 0.0
      %2279 = vmatprep.subr.mxu0 0.0
      %2280 = vmatpush1.msra.mxu0 0.0
      %2281 = vmatprep.subr.mxu0 0.0
      %2282 = vmatpush1.msra.mxu0 0.0
      %2283 = vmatprep.subr.mxu0 0.0
      %2284 = vmatpush1.msra.mxu0 0.0
      %2285 = vmatprep.subr.mxu0 0.0
      %2286 = vmatpush1.msra.mxu0 0.0
      %2287 = vmatprep.subr.mxu0 0.0
      %2288 = vmatpush1.msra.mxu0 0.0
      %2289 = vmatprep.subr.mxu0 0.0
      %2290 = vmatpush1.msra.mxu0 0.0
      %2291 = vmatprep.subr.mxu0 0.0
      %2292 = vmatpush1.msra.mxu0 0.0
      %2293 = vmatprep.subr.mxu0 0.0
      %2294 = vmatpush1.msra.mxu0 0.0
      %2295 = vmatprep.subr.mxu0 0.0
      %2296 = vmatpush1.msra.mxu0 0.0
      %2297 = vmatprep.subr.mxu0 0.0
      %2298 = vmatpush1.msra.mxu0 0.0
      %2299 = vmatprep.subr.mxu0 0.0
      %2300 = vmatpush1.msra.mxu0 0.0
      %2301 = vmatprep.subr.mxu0 0.0
      %2302 = vmatpush1.msra.mxu0 0.0
      %2303 = vmatprep.subr.mxu0 0.0
      %2304 = vmatpush1.msra.mxu0 0.0
      %2305 = vmatprep.subr.mxu0 0.0
      %2306 = vmatpush1.msra.mxu0 0.0
      %2307 = vmatprep.subr.mxu0 0.0
      %2308 = vmatpush1.msra.mxu0 0.0
      %2309 = vmatprep.mubr.f32.mxu0 0.0
      %2310 = vmatmul.mubr.f32.gmra.mrb[0].mxu0 %v2243
      %v2311 = vpop.f32.mrb[0].mxu0
      %v2312 = vadd.f32 0.0, %v2311
      %v2313 = vpop.f32.mrb[0].mxu0
      %v2314 = vadd.f32 0.0, %v2313
      %2315 = vdwg.mxu0
      %2316 = vmatprep.subr.mxu0 0.0
      %2317 = vmatpush1.msra.mxu0 %v2239
      %2318 = vmatprep.subr.mxu0 0.0
      %2319 = vmatpush1.msra.mxu0 0.0
      %2320 = vmatprep.subr.mxu0 0.0
      %2321 = vmatpush1.msra.mxu0 0.0
      %2322 = vmatprep.subr.mxu0 0.0
      %2323 = vmatpush1.msra.mxu0 0.0
      %2324 = vmatprep.subr.mxu0 0.0
      %2325 = vmatpush1.msra.mxu0 0.0
      %2326 = vmatprep.subr.mxu0 0.0
      %2327 = vmatpush1.msra.mxu0 0.0
      %2328 = vmatprep.subr.mxu0 0.0
      %2329 = vmatpush1.msra.mxu0 0.0
      %2330 = vmatprep.subr.mxu0 0.0
      %2331 = vmatpush1.msra.mxu0 0.0
      %2332 = vmatprep.subr.mxu0 0.0
      %2333 = vmatpush1.msra.mxu0 0.0
      %2334 = vmatprep.subr.mxu0 0.0
      %2335 = vmatpush1.msra.mxu0 0.0
      %2336 = vmatprep.subr.mxu0 0.0
      %2337 = vmatpush1.msra.mxu0 0.0
      %2338 = vmatprep.subr.mxu0 0.0
      %2339 = vmatpush1.msra.mxu0 0.0
      %2340 = vmatprep.subr.mxu0 0.0
      %2341 = vmatpush1.msra.mxu0 0.0
      %2342 = vmatprep.subr.mxu0 0.0
      %2343 = vmatpush1.msra.mxu0 0.0
      %2344 = vmatprep.subr.mxu0 0.0
      %2345 = vmatpush1.msra.mxu0 0.0
      %2346 = vmatprep.subr.mxu0 0.0
      %2347 = vmatpush1.msra.mxu0 0.0
      %2348 = vmatprep.subr.mxu0 0.0
      %2349 = vmatpush1.msra.mxu0 0.0
      %2350 = vmatprep.subr.mxu0 0.0
      %2351 = vmatpush1.msra.mxu0 0.0
      %2352 = vmatprep.subr.mxu0 0.0
      %2353 = vmatpush1.msra.mxu0 0.0
      %2354 = vmatprep.subr.mxu0 0.0
      %2355 = vmatpush1.msra.mxu0 0.0
      %2356 = vmatprep.subr.mxu0 0.0
      %2357 = vmatpush1.msra.mxu0 0.0
      %2358 = vmatprep.subr.mxu0 0.0
      %2359 = vmatpush1.msra.mxu0 0.0
      %2360 = vmatprep.subr.mxu0 0.0
      %2361 = vmatpush1.msra.mxu0 0.0
      %2362 = vmatprep.subr.mxu0 0.0
      %2363 = vmatpush1.msra.mxu0 0.0
      %2364 = vmatprep.subr.mxu0 0.0
      %2365 = vmatpush1.msra.mxu0 0.0
      %2366 = vmatprep.subr.mxu0 0.0
      %2367 = vmatpush1.msra.mxu0 0.0
      %2368 = vmatprep.subr.mxu0 0.0
      %2369 = vmatpush1.msra.mxu0 0.0
      %2370 = vmatprep.subr.mxu0 0.0
      %2371 = vmatpush1.msra.mxu0 0.0
      %2372 = vmatprep.subr.mxu0 0.0
      %2373 = vmatpush1.msra.mxu0 0.0
      %2374 = vmatprep.subr.mxu0 0.0
      %2375 = vmatpush1.msra.mxu0 0.0
      %2376 = vmatprep.subr.mxu0 0.0
      %2377 = vmatpush1.msra.mxu0 0.0
      %2378 = vmatprep.subr.mxu0 0.0
      %2379 = vmatpush1.msra.mxu0 0.0
      %2380 = vmatprep.mubr.f32.mxu0 0.0
      %2381 = vmatmul.mubr.f32.gmra.mrb[0].mxu0 %v2243
      %v2382 = vpop.f32.mrb[0].mxu0
      %v2383 = vadd.f32 0.0, %v2382
      %v2384 = vpop.f32.mrb[0].mxu0
      %2385 = vdwg.mxu0
      %v2386 = vadd.f32 %v2157, %v2312
      %v2387 = vadd.f32 %v2159, %v2314
      %v2388 = vadd.f32 %v2228, %v2383
      %2389 = vrot.lane.b32.xlu0 %v1922, 113
      %v2390 = vpop.permute.xlu0 %2389
      %2391 = vrot.lane.b32.xlu0 %v1923, 113
      %v2392 = vpop.permute.xlu0 %2391
      %2393 = vrot.lane.b32.xlu0 %v1924, 113
      %v2394 = vpop.permute.xlu0 %2393
      %v2395 = vsel %vm876, %v2392, %v2394
      %v2396 = vsel %vm876, %v2390, %v2392
      %v2397 = vsel %vm876, %v2394, %v2390
      %s2398 = scalar_lea.vmem %s3, 24
      %v2399 = vld [vmem:[%s2398] sm:$0xff]
      %v2401 = vsel %vm1942, %v2399, 0
      %2403 = vmatprep.subr.mxu0 %v2395
      %2404 = vmatpush1.msra.mxu0 %v2396
      %2405 = vmatprep.subr.mxu0 0.0
      %2406 = vmatpush1.msra.mxu0 0.0
      %2407 = vmatprep.subr.mxu0 0.0
      %2408 = vmatpush1.msra.mxu0 0.0
      %2409 = vmatprep.subr.mxu0 0.0
      %2410 = vmatpush1.msra.mxu0 0.0
      %2411 = vmatprep.subr.mxu0 0.0
      %2412 = vmatpush1.msra.mxu0 0.0
      %2413 = vmatprep.subr.mxu0 0.0
      %2414 = vmatpush1.msra.mxu0 0.0
      %2415 = vmatprep.subr.mxu0 0.0
      %2416 = vmatpush1.msra.mxu0 0.0
      %2417 = vmatprep.subr.mxu0 0.0
      %2418 = vmatpush1.msra.mxu0 0.0
      %2419 = vmatprep.subr.mxu0 0.0
      %2420 = vmatpush1.msra.mxu0 0.0
      %2421 = vmatprep.subr.mxu0 0.0
      %2422 = vmatpush1.msra.mxu0 0.0
      %2423 = vmatprep.subr.mxu0 0.0
      %2424 = vmatpush1.msra.mxu0 0.0
      %2425 = vmatprep.subr.mxu0 0.0
      %2426 = vmatpush1.msra.mxu0 0.0
      %2427 = vmatprep.subr.mxu0 0.0
      %2428 = vmatpush1.msra.mxu0 0.0
      %2429 = vmatprep.subr.mxu0 0.0
      %2430 = vmatpush1.msra.mxu0 0.0
      %2431 = vmatprep.subr.mxu0 0.0
      %2432 = vmatpush1.msra.mxu0 0.0
      %2433 = vmatprep.subr.mxu0 0.0
      %2434 = vmatpush1.msra.mxu0 0.0
      %2435 = vmatprep.subr.mxu0 0.0
      %2436 = vmatpush1.msra.mxu0 0.0
      %2437 = vmatprep.subr.mxu0 0.0
      %2438 = vmatpush1.msra.mxu0 0.0
      %2439 = vmatprep.subr.mxu0 0.0
      %2440 = vmatpush1.msra.mxu0 0.0
      %2441 = vmatprep.subr.mxu0 0.0
      %2442 = vmatpush1.msra.mxu0 0.0
      %2443 = vmatprep.subr.mxu0 0.0
      %2444 = vmatpush1.msra.mxu0 0.0
      %2445 = vmatprep.subr.mxu0 0.0
      %2446 = vmatpush1.msra.mxu0 0.0
      %2447 = vmatprep.subr.mxu0 0.0
      %2448 = vmatpush1.msra.mxu0 0.0
      %2449 = vmatprep.subr.mxu0 0.0
      %2450 = vmatpush1.msra.mxu0 0.0
      %2451 = vmatprep.subr.mxu0 0.0
      %2452 = vmatpush1.msra.mxu0 0.0
      %2453 = vmatprep.subr.mxu0 0.0
      %2454 = vmatpush1.msra.mxu0 0.0
      %2455 = vmatprep.subr.mxu0 0.0
      %2456 = vmatpush1.msra.mxu0 0.0
      %2457 = vmatprep.subr.mxu0 0.0
      %2458 = vmatpush1.msra.mxu0 0.0
      %2459 = vmatprep.subr.mxu0 0.0
      %2460 = vmatpush1.msra.mxu0 0.0
      %2461 = vmatprep.subr.mxu0 0.0
      %2462 = vmatpush1.msra.mxu0 0.0
      %2463 = vmatprep.subr.mxu0 0.0
      %2464 = vmatpush1.msra.mxu0 0.0
      %2465 = vmatprep.subr.mxu0 0.0
      %2466 = vmatpush1.msra.mxu0 0.0
      %2467 = vmatprep.mubr.f32.mxu0 0.0
      %2468 = vmatmul.mubr.f32.gmra.mrb[0].mxu0 %v2401
      %v2469 = vpop.f32.mrb[0].mxu0
      %v2470 = vadd.f32 0.0, %v2469
      %v2471 = vpop.f32.mrb[0].mxu0
      %v2472 = vadd.f32 0.0, %v2471
      %2473 = vdwg.mxu0
      %2474 = vmatprep.subr.mxu0 0.0
      %2475 = vmatpush1.msra.mxu0 %v2397
      %2476 = vmatprep.subr.mxu0 0.0
      %2477 = vmatpush1.msra.mxu0 0.0
      %2478 = vmatprep.subr.mxu0 0.0
      %2479 = vmatpush1.msra.mxu0 0.0
      %2480 = vmatprep.subr.mxu0 0.0
      %2481 = vmatpush1.msra.mxu0 0.0
      %2482 = vmatprep.subr.mxu0 0.0
      %2483 = vmatpush1.msra.mxu0 0.0
      %2484 = vmatprep.subr.mxu0 0.0
      %2485 = vmatpush1.msra.mxu0 0.0
      %2486 = vmatprep.subr.mxu0 0.0
      %2487 = vmatpush1.msra.mxu0 0.0
      %2488 = vmatprep.subr.mxu0 0.0
      %2489 = vmatpush1.msra.mxu0 0.0
      %2490 = vmatprep.subr.mxu0 0.0
      %2491 = vmatpush1.msra.mxu0 0.0
      %2492 = vmatprep.subr.mxu0 0.0
      %2493 = vmatpush1.msra.mxu0 0.0
      %2494 = vmatprep.subr.mxu0 0.0
      %2495 = vmatpush1.msra.mxu0 0.0
      %2496 = vmatprep.subr.mxu0 0.0
      %2497 = vmatpush1.msra.mxu0 0.0
      %2498 = vmatprep.subr.mxu0 0.0
      %2499 = vmatpush1.msra.mxu0 0.0
      %2500 = vmatprep.subr.mxu0 0.0
      %2501 = vmatpush1.msra.mxu0 0.0
      %2502 = vmatprep.subr.mxu0 0.0
      %2503 = vmatpush1.msra.mxu0 0.0
      %2504 = vmatprep.subr.mxu0 0.0
      %2505 = vmatpush1.msra.mxu0 0.0
      %2506 = vmatprep.subr.mxu0 0.0
      %2507 = vmatpush1.msra.mxu0 0.0
      %2508 = vmatprep.subr.mxu0 0.0
      %2509 = vmatpush1.msra.mxu0 0.0
      %2510 = vmatprep.subr.mxu0 0.0
      %2511 = vmatpush1.msra.mxu0 0.0
      %2512 = vmatprep.subr.mxu0 0.0
      %2513 = vmatpush1.msra.mxu0 0.0
      %2514 = vmatprep.subr.mxu0 0.0
      %2515 = vmatpush1.msra.mxu0 0.0
      %2516 = vmatprep.subr.mxu0 0.0
      %2517 = vmatpush1.msra.mxu0 0.0
      %2518 = vmatprep.subr.mxu0 0.0
      %2519 = vmatpush1.msra.mxu0 0.0
      %2520 = vmatprep.subr.mxu0 0.0
      %2521 = vmatpush1.msra.mxu0 0.0
      %2522 = vmatprep.subr.mxu0 0.0
      %2523 = vmatpush1.msra.mxu0 0.0
      %2524 = vmatprep.subr.mxu0 0.0
      %2525 = vmatpush1.msra.mxu0 0.0
      %2526 = vmatprep.subr.mxu0 0.0
      %2527 = vmatpush1.msra.mxu0 0.0
      %2528 = vmatprep.subr.mxu0 0.0
      %2529 = vmatpush1.msra.mxu0 0.0
      %2530 = vmatprep.subr.mxu0 0.0
      %2531 = vmatpush1.msra.mxu0 0.0
      %2532 = vmatprep.subr.mxu0 0.0
      %2533 = vmatpush1.msra.mxu0 0.0
      %2534 = vmatprep.subr.mxu0 0.0
      %2535 = vmatpush1.msra.mxu0 0.0
      %2536 = vmatprep.subr.mxu0 0.0
      %2537 = vmatpush1.msra.mxu0 0.0
      %2538 = vmatprep.mubr.f32.mxu0 0.0
      %2539 = vmatmul.mubr.f32.gmra.mrb[0].mxu0 %v2401
      %v2540 = vpop.f32.mrb[0].mxu0
      %v2541 = vadd.f32 0.0, %v2540
      %v2542 = vpop.f32.mrb[0].mxu0
      %2543 = vdwg.mxu0
      %v2544 = vadd.f32 %v2386, %v2470
      %v2545 = vadd.f32 %v2387, %v2472
      %v2546 = vadd.f32 %v2388, %v2541
      %2547 = vrot.lane.b32.xlu0 %v1917, 112
      %v2548 = vpop.permute.xlu0 %2547
      %2549 = vrot.lane.b32.xlu0 %v1918, 112
      %v2550 = vpop.permute.xlu0 %2549
      %2551 = vrot.lane.b32.xlu0 %v1919, 112
      %v2552 = vpop.permute.xlu0 %2551
      %v2553 = vsel %vm1045, %v2550, %v2552
      %v2554 = vsel %vm1045, %v2548, %v2550
      %v2555 = vsel %vm1045, %v2552, %v2548
      %s2556 = scalar_lea.vmem %s3, 32
      %v2557 = vld [vmem:[%s2556] sm:$0xff]
      %v2559 = vsel %vm1942, %v2557, 0
      %2561 = vmatprep.subr.mxu0 %v2553
      %2562 = vmatpush1.msra.mxu0 %v2554
      %2563 = vmatprep.subr.mxu0 0.0
      %2564 = vmatpush1.msra.mxu0 0.0
      %2565 = vmatprep.subr.mxu0 0.0
      %2566 = vmatpush1.msra.mxu0 0.0
      %2567 = vmatprep.subr.mxu0 0.0
      %2568 = vmatpush1.msra.mxu0 0.0
      %2569 = vmatprep.subr.mxu0 0.0
      %2570 = vmatpush1.msra.mxu0 0.0
      %2571 = vmatprep.subr.mxu0 0.0
      %2572 = vmatpush1.msra.mxu0 0.0
      %2573 = vmatprep.subr.mxu0 0.0
      %2574 = vmatpush1.msra.mxu0 0.0
      %2575 = vmatprep.subr.mxu0 0.0
      %2576 = vmatpush1.msra.mxu0 0.0
      %2577 = vmatprep.subr.mxu0 0.0
      %2578 = vmatpush1.msra.mxu0 0.0
      %2579 = vmatprep.subr.mxu0 0.0
      %2580 = vmatpush1.msra.mxu0 0.0
      %2581 = vmatprep.subr.mxu0 0.0
      %2582 = vmatpush1.msra.mxu0 0.0
      %2583 = vmatprep.subr.mxu0 0.0
      %2584 = vmatpush1.msra.mxu0 0.0
      %2585 = vmatprep.subr.mxu0 0.0
      %2586 = vmatpush1.msra.mxu0 0.0
      %2587 = vmatprep.subr.mxu0 0.0
      %2588 = vmatpush1.msra.mxu0 0.0
      %2589 = vmatprep.subr.mxu0 0.0
      %2590 = vmatpush1.msra.mxu0 0.0
      %2591 = vmatprep.subr.mxu0 0.0
      %2592 = vmatpush1.msra.mxu0 0.0
      %2593 = vmatprep.subr.mxu0 0.0
      %2594 = vmatpush1.msra.mxu0 0.0
      %2595 = vmatprep.subr.mxu0 0.0
      %2596 = vmatpush1.msra.mxu0 0.0
      %2597 = vmatprep.subr.mxu0 0.0
      %2598 = vmatpush1.msra.mxu0 0.0
      %2599 = vmatprep.subr.mxu0 0.0
      %2600 = vmatpush1.msra.mxu0 0.0
      %2601 = vmatprep.subr.mxu0 0.0
      %2602 = vmatpush1.msra.mxu0 0.0
      %2603 = vmatprep.subr.mxu0 0.0
      %2604 = vmatpush1.msra.mxu0 0.0
      %2605 = vmatprep.subr.mxu0 0.0
      %2606 = vmatpush1.msra.mxu0 0.0
      %2607 = vmatprep.subr.mxu0 0.0
      %2608 = vmatpush1.msra.mxu0 0.0
      %2609 = vmatprep.subr.mxu0 0.0
      %2610 = vmatpush1.msra.mxu0 0.0
      %2611 = vmatprep.subr.mxu0 0.0
      %2612 = vmatpush1.msra.mxu0 0.0
      %2613 = vmatprep.subr.mxu0 0.0
      %2614 = vmatpush1.msra.mxu0 0.0
      %2615 = vmatprep.subr.mxu0 0.0
      %2616 = vmatpush1.msra.mxu0 0.0
      %2617 = vmatprep.subr.mxu0 0.0
      %2618 = vmatpush1.msra.mxu0 0.0
      %2619 = vmatprep.subr.mxu0 0.0
      %2620 = vmatpush1.msra.mxu0 0.0
      %2621 = vmatprep.subr.mxu0 0.0
      %2622 = vmatpush1.msra.mxu0 0.0
      %2623 = vmatprep.subr.mxu0 0.0
      %2624 = vmatpush1.msra.mxu0 0.0
      %2625 = vmatprep.mubr.f32.mxu0 0.0
      %2626 = vmatmul.mubr.f32.gmra.mrb[0].mxu0 %v2559
      %v2627 = vpop.f32.mrb[0].mxu0
      %v2628 = vadd.f32 0.0, %v2627
      %v2629 = vpop.f32.mrb[0].mxu0
      %v2630 = vadd.f32 0.0, %v2629
      %2631 = vdwg.mxu0
      %2632 = vmatprep.subr.mxu0 0.0
      %2633 = vmatpush1.msra.mxu0 %v2555
      %2634 = vmatprep.subr.mxu0 0.0
      %2635 = vmatpush1.msra.mxu0 0.0
      %2636 = vmatprep.subr.mxu0 0.0
      %2637 = vmatpush1.msra.mxu0 0.0
      %2638 = vmatprep.subr.mxu0 0.0
      %2639 = vmatpush1.msra.mxu0 0.0
      %2640 = vmatprep.subr.mxu0 0.0
      %2641 = vmatpush1.msra.mxu0 0.0
      %2642 = vmatprep.subr.mxu0 0.0
      %2643 = vmatpush1.msra.mxu0 0.0
      %2644 = vmatprep.subr.mxu0 0.0
      %2645 = vmatpush1.msra.mxu0 0.0
      %2646 = vmatprep.subr.mxu0 0.0
      %2647 = vmatpush1.msra.mxu0 0.0
      %2648 = vmatprep.subr.mxu0 0.0
      %2649 = vmatpush1.msra.mxu0 0.0
      %2650 = vmatprep.subr.mxu0 0.0
      %2651 = vmatpush1.msra.mxu0 0.0
      %2652 = vmatprep.subr.mxu0 0.0
      %2653 = vmatpush1.msra.mxu0 0.0
      %2654 = vmatprep.subr.mxu0 0.0
      %2655 = vmatpush1.msra.mxu0 0.0
      %2656 = vmatprep.subr.mxu0 0.0
      %2657 = vmatpush1.msra.mxu0 0.0
      %2658 = vmatprep.subr.mxu0 0.0
      %2659 = vmatpush1.msra.mxu0 0.0
      %2660 = vmatprep.subr.mxu0 0.0
      %2661 = vmatpush1.msra.mxu0 0.0
      %2662 = vmatprep.subr.mxu0 0.0
      %2663 = vmatpush1.msra.mxu0 0.0
      %2664 = vmatprep.subr.mxu0 0.0
      %2665 = vmatpush1.msra.mxu0 0.0
      %2666 = vmatprep.subr.mxu0 0.0
      %2667 = vmatpush1.msra.mxu0 0.0
      %2668 = vmatprep.subr.mxu0 0.0
      %2669 = vmatpush1.msra.mxu0 0.0
      %2670 = vmatprep.subr.mxu0 0.0
      %2671 = vmatpush1.msra.mxu0 0.0
      %2672 = vmatprep.subr.mxu0 0.0
      %2673 = vmatpush1.msra.mxu0 0.0
      %2674 = vmatprep.subr.mxu0 0.0
      %2675 = vmatpush1.msra.mxu0 0.0
      %2676 = vmatprep.subr.mxu0 0.0
      %2677 = vmatpush1.msra.mxu0 0.0
      %2678 = vmatprep.subr.mxu0 0.0
      %2679 = vmatpush1.msra.mxu0 0.0
      %2680 = vmatprep.subr.mxu0 0.0
      %2681 = vmatpush1.msra.mxu0 0.0
      %2682 = vmatprep.subr.mxu0 0.0
      %2683 = vmatpush1.msra.mxu0 0.0
      %2684 = vmatprep.subr.mxu0 0.0
      %2685 = vmatpush1.msra.mxu0 0.0
      %2686 = vmatprep.subr.mxu0 0.0
      %2687 = vmatpush1.msra.mxu0 0.0
      %2688 = vmatprep.subr.mxu0 0.0
      %2689 = vmatpush1.msra.mxu0 0.0
      %2690 = vmatprep.subr.mxu0 0.0
      %2691 = vmatpush1.msra.mxu0 0.0
      %2692 = vmatprep.subr.mxu0 0.0
      %2693 = vmatpush1.msra.mxu0 0.0
      %2694 = vmatprep.subr.mxu0 0.0
      %2695 = vmatpush1.msra.mxu0 0.0
      %2696 = vmatprep.mubr.f32.mxu0 0.0
      %2697 = vmatmul.mubr.f32.gmra.mrb[0].mxu0 %v2559
      %v2698 = vpop.f32.mrb[0].mxu0
      %v2699 = vadd.f32 0.0, %v2698
      %v2700 = vpop.f32.mrb[0].mxu0
      %2701 = vdwg.mxu0
      %v2702 = vadd.f32 %v2544, %v2628
      %v2703 = vadd.f32 %v2545, %v2630
      %v2704 = vadd.f32 %v2546, %v2699
      %2705 = vrot.lane.b32.xlu0 %v1927, 111
      %v2706 = vpop.permute.xlu0 %2705
      %2707 = vrot.lane.b32.xlu0 %v1928, 111
      %v2708 = vpop.permute.xlu0 %2707
      %2709 = vrot.lane.b32.xlu0 %v1929, 111
      %v2710 = vpop.permute.xlu0 %2709
      %v2711 = vsel %vm1213, %v2708, %v2710
      %v2712 = vsel %vm1213, %v2706, %v2708
      %v2713 = vsel %vm1213, %v2710, %v2706
      %s2714 = scalar_lea.vmem %s3, 40
      %v2715 = vld [vmem:[%s2714] sm:$0xff]
      %v2717 = vsel %vm1942, %v2715, 0
      %2719 = vmatprep.subr.mxu0 %v2711
      %2720 = vmatpush1.msra.mxu0 %v2712
      %2721 = vmatprep.subr.mxu0 0.0
      %2722 = vmatpush1.msra.mxu0 0.0
      %2723 = vmatprep.subr.mxu0 0.0
      %2724 = vmatpush1.msra.mxu0 0.0
      %2725 = vmatprep.subr.mxu0 0.0
      %2726 = vmatpush1.msra.mxu0 0.0
      %2727 = vmatprep.subr.mxu0 0.0
      %2728 = vmatpush1.msra.mxu0 0.0
      %2729 = vmatprep.subr.mxu0 0.0
      %2730 = vmatpush1.msra.mxu0 0.0
      %2731 = vmatprep.subr.mxu0 0.0
      %2732 = vmatpush1.msra.mxu0 0.0
      %2733 = vmatprep.subr.mxu0 0.0
      %2734 = vmatpush1.msra.mxu0 0.0
      %2735 = vmatprep.subr.mxu0 0.0
      %2736 = vmatpush1.msra.mxu0 0.0
      %2737 = vmatprep.subr.mxu0 0.0
      %2738 = vmatpush1.msra.mxu0 0.0
      %2739 = vmatprep.subr.mxu0 0.0
      %2740 = vmatpush1.msra.mxu0 0.0
      %2741 = vmatprep.subr.mxu0 0.0
      %2742 = vmatpush1.msra.mxu0 0.0
      %2743 = vmatprep.subr.mxu0 0.0
      %2744 = vmatpush1.msra.mxu0 0.0
      %2745 = vmatprep.subr.mxu0 0.0
      %2746 = vmatpush1.msra.mxu0 0.0
      %2747 = vmatprep.subr.mxu0 0.0
      %2748 = vmatpush1.msra.mxu0 0.0
      %2749 = vmatprep.subr.mxu0 0.0
      %2750 = vmatpush1.msra.mxu0 0.0
      %2751 = vmatprep.subr.mxu0 0.0
      %2752 = vmatpush1.msra.mxu0 0.0
      %2753 = vmatprep.subr.mxu0 0.0
      %2754 = vmatpush1.msra.mxu0 0.0
      %2755 = vmatprep.subr.mxu0 0.0
      %2756 = vmatpush1.msra.mxu0 0.0
      %2757 = vmatprep.subr.mxu0 0.0
      %2758 = vmatpush1.msra.mxu0 0.0
      %2759 = vmatprep.subr.mxu0 0.0
      %2760 = vmatpush1.msra.mxu0 0.0
      %2761 = vmatprep.subr.mxu0 0.0
      %2762 = vmatpush1.msra.mxu0 0.0
      %2763 = vmatprep.subr.mxu0 0.0
      %2764 = vmatpush1.msra.mxu0 0.0
      %2765 = vmatprep.subr.mxu0 0.0
      %2766 = vmatpush1.msra.mxu0 0.0
      %2767 = vmatprep.subr.mxu0 0.0
      %2768 = vmatpush1.msra.mxu0 0.0
      %2769 = vmatprep.subr.mxu0 0.0
      %2770 = vmatpush1.msra.mxu0 0.0
      %2771 = vmatprep.subr.mxu0 0.0
      %2772 = vmatpush1.msra.mxu0 0.0
      %2773 = vmatprep.subr.mxu0 0.0
      %2774 = vmatpush1.msra.mxu0 0.0
      %2775 = vmatprep.subr.mxu0 0.0
      %2776 = vmatpush1.msra.mxu0 0.0
      %2777 = vmatprep.subr.mxu0 0.0
      %2778 = vmatpush1.msra.mxu0 0.0
      %2779 = vmatprep.subr.mxu0 0.0
      %2780 = vmatpush1.msra.mxu0 0.0
      %2781 = vmatprep.subr.mxu0 0.0
      %2782 = vmatpush1.msra.mxu0 0.0
      %2783 = vmatprep.mubr.f32.mxu0 0.0
      %2784 = vmatmul.mubr.f32.gmra.mrb[0].mxu0 %v2717
      %v2785 = vpop.f32.mrb[0].mxu0
      %v2786 = vadd.f32 0.0, %v2785
      %v2787 = vpop.f32.mrb[0].mxu0
      %v2788 = vadd.f32 0.0, %v2787
      %2789 = vdwg.mxu0
      %2790 = vmatprep.subr.mxu0 0.0
      %2791 = vmatpush1.msra.mxu0 %v2713
      %2792 = vmatprep.subr.mxu0 0.0
      %2793 = vmatpush1.msra.mxu0 0.0
      %2794 = vmatprep.subr.mxu0 0.0
      %2795 = vmatpush1.msra.mxu0 0.0
      %2796 = vmatprep.subr.mxu0 0.0
      %2797 = vmatpush1.msra.mxu0 0.0
      %2798 = vmatprep.subr.mxu0 0.0
      %2799 = vmatpush1.msra.mxu0 0.0
      %2800 = vmatprep.subr.mxu0 0.0
      %2801 = vmatpush1.msra.mxu0 0.0
      %2802 = vmatprep.subr.mxu0 0.0
      %2803 = vmatpush1.msra.mxu0 0.0
      %2804 = vmatprep.subr.mxu0 0.0
      %2805 = vmatpush1.msra.mxu0 0.0
      %2806 = vmatprep.subr.mxu0 0.0
      %2807 = vmatpush1.msra.mxu0 0.0
      %2808 = vmatprep.subr.mxu0 0.0
      %2809 = vmatpush1.msra.mxu0 0.0
      %2810 = vmatprep.subr.mxu0 0.0
      %2811 = vmatpush1.msra.mxu0 0.0
      %2812 = vmatprep.subr.mxu0 0.0
      %2813 = vmatpush1.msra.mxu0 0.0
      %2814 = vmatprep.subr.mxu0 0.0
      %2815 = vmatpush1.msra.mxu0 0.0
      %2816 = vmatprep.subr.mxu0 0.0
      %2817 = vmatpush1.msra.mxu0 0.0
      %2818 = vmatprep.subr.mxu0 0.0
      %2819 = vmatpush1.msra.mxu0 0.0
      %2820 = vmatprep.subr.mxu0 0.0
      %2821 = vmatpush1.msra.mxu0 0.0
      %2822 = vmatprep.subr.mxu0 0.0
      %2823 = vmatpush1.msra.mxu0 0.0
      %2824 = vmatprep.subr.mxu0 0.0
      %2825 = vmatpush1.msra.mxu0 0.0
      %2826 = vmatprep.subr.mxu0 0.0
      %2827 = vmatpush1.msra.mxu0 0.0
      %2828 = vmatprep.subr.mxu0 0.0
      %2829 = vmatpush1.msra.mxu0 0.0
      %2830 = vmatprep.subr.mxu0 0.0
      %2831 = vmatpush1.msra.mxu0 0.0
      %2832 = vmatprep.subr.mxu0 0.0
      %2833 = vmatpush1.msra.mxu0 0.0
      %2834 = vmatprep.subr.mxu0 0.0
      %2835 = vmatpush1.msra.mxu0 0.0
      %2836 = vmatprep.subr.mxu0 0.0
      %2837 = vmatpush1.msra.mxu0 0.0
      %2838 = vmatprep.subr.mxu0 0.0
      %2839 = vmatpush1.msra.mxu0 0.0
      %2840 = vmatprep.subr.mxu0 0.0
      %2841 = vmatpush1.msra.mxu0 0.0
      %2842 = vmatprep.subr.mxu0 0.0
      %2843 = vmatpush1.msra.mxu0 0.0
      %2844 = vmatprep.subr.mxu0 0.0
      %2845 = vmatpush1.msra.mxu0 0.0
      %2846 = vmatprep.subr.mxu0 0.0
      %2847 = vmatpush1.msra.mxu0 0.0
      %2848 = vmatprep.subr.mxu0 0.0
      %2849 = vmatpush1.msra.mxu0 0.0
      %2850 = vmatprep.subr.mxu0 0.0
      %2851 = vmatpush1.msra.mxu0 0.0
      %2852 = vmatprep.subr.mxu0 0.0
      %2853 = vmatpush1.msra.mxu0 0.0
      %2854 = vmatprep.mubr.f32.mxu0 0.0
      %2855 = vmatmul.mubr.f32.gmra.mrb[0].mxu0 %v2717
      %v2856 = vpop.f32.mrb[0].mxu0
      %v2857 = vadd.f32 0.0, %v2856
      %v2858 = vpop.f32.mrb[0].mxu0
      %2859 = vdwg.mxu0
      %v2860 = vadd.f32 %v2702, %v2786
      %v2861 = vadd.f32 %v2703, %v2788
      %v2862 = vadd.f32 %v2704, %v2857
      %2863 = vrot.lane.b32.xlu0 %v1922, 97
      %v2864 = vpop.permute.xlu0 %2863
      %2865 = vrot.lane.b32.xlu0 %v1923, 97
      %v2866 = vpop.permute.xlu0 %2865
      %2867 = vrot.lane.b32.xlu0 %v1924, 97
      %v2868 = vpop.permute.xlu0 %2867
      %v2869 = vsel %vm1381, %v2866, %v2868
      %v2870 = vsel %vm1381, %v2864, %v2866
      %v2871 = vsel %vm1381, %v2868, %v2864
      %s2872 = scalar_lea.vmem %s3, 48
      %v2873 = vld [vmem:[%s2872] sm:$0xff]
      %v2875 = vsel %vm1942, %v2873, 0
      %2877 = vmatprep.subr.mxu0 %v2869
      %2878 = vmatpush1.msra.mxu0 %v2870
      %2879 = vmatprep.subr.mxu0 0.0
      %2880 = vmatpush1.msra.mxu0 0.0
      %2881 = vmatprep.subr.mxu0 0.0
      %2882 = vmatpush1.msra.mxu0 0.0
      %2883 = vmatprep.subr.mxu0 0.0
      %2884 = vmatpush1.msra.mxu0 0.0
      %2885 = vmatprep.subr.mxu0 0.0
      %2886 = vmatpush1.msra.mxu0 0.0
      %2887 = vmatprep.subr.mxu0 0.0
      %2888 = vmatpush1.msra.mxu0 0.0
      %2889 = vmatprep.subr.mxu0 0.0
      %2890 = vmatpush1.msra.mxu0 0.0
      %2891 = vmatprep.subr.mxu0 0.0
      %2892 = vmatpush1.msra.mxu0 0.0
      %2893 = vmatprep.subr.mxu0 0.0
      %2894 = vmatpush1.msra.mxu0 0.0
      %2895 = vmatprep.subr.mxu0 0.0
      %2896 = vmatpush1.msra.mxu0 0.0
      %2897 = vmatprep.subr.mxu0 0.0
      %2898 = vmatpush1.msra.mxu0 0.0
      %2899 = vmatprep.subr.mxu0 0.0
      %2900 = vmatpush1.msra.mxu0 0.0
      %2901 = vmatprep.subr.mxu0 0.0
      %2902 = vmatpush1.msra.mxu0 0.0
      %2903 = vmatprep.subr.mxu0 0.0
      %2904 = vmatpush1.msra.mxu0 0.0
      %2905 = vmatprep.subr.mxu0 0.0
      %2906 = vmatpush1.msra.mxu0 0.0
      %2907 = vmatprep.subr.mxu0 0.0
      %2908 = vmatpush1.msra.mxu0 0.0
      %2909 = vmatprep.subr.mxu0 0.0
      %2910 = vmatpush1.msra.mxu0 0.0
      %2911 = vmatprep.subr.mxu0 0.0
      %2912 = vmatpush1.msra.mxu0 0.0
      %2913 = vmatprep.subr.mxu0 0.0
      %2914 = vmatpush1.msra.mxu0 0.0
      %2915 = vmatprep.subr.mxu0 0.0
      %2916 = vmatpush1.msra.mxu0 0.0
      %2917 = vmatprep.subr.mxu0 0.0
      %2918 = vmatpush1.msra.mxu0 0.0
      %2919 = vmatprep.subr.mxu0 0.0
      %2920 = vmatpush1.msra.mxu0 0.0
      %2921 = vmatprep.subr.mxu0 0.0
      %2922 = vmatpush1.msra.mxu0 0.0
      %2923 = vmatprep.subr.mxu0 0.0
      %2924 = vmatpush1.msra.mxu0 0.0
      %2925 = vmatprep.subr.mxu0 0.0
      %2926 = vmatpush1.msra.mxu0 0.0
      %2927 = vmatprep.subr.mxu0 0.0
      %2928 = vmatpush1.msra.mxu0 0.0
      %2929 = vmatprep.subr.mxu0 0.0
      %2930 = vmatpush1.msra.mxu0 0.0
      %2931 = vmatprep.subr.mxu0 0.0
      %2932 = vmatpush1.msra.mxu0 0.0
      %2933 = vmatprep.subr.mxu0 0.0
      %2934 = vmatpush1.msra.mxu0 0.0
      %2935 = vmatprep.subr.mxu0 0.0
      %2936 = vmatpush1.msra.mxu0 0.0
      %2937 = vmatprep.subr.mxu0 0.0
      %2938 = vmatpush1.msra.mxu0 0.0
      %2939 = vmatprep.subr.mxu0 0.0
      %2940 = vmatpush1.msra.mxu0 0.0
      %2941 = vmatprep.mubr.f32.mxu0 0.0
      %2942 = vmatmul.mubr.f32.gmra.mrb[0].mxu0 %v2875
      %v2943 = vpop.f32.mrb[0].mxu0
      %v2944 = vadd.f32 0.0, %v2943
      %v2945 = vpop.f32.mrb[0].mxu0
      %v2946 = vadd.f32 0.0, %v2945
      %2947 = vdwg.mxu0
      %2948 = vmatprep.subr.mxu0 0.0
      %2949 = vmatpush1.msra.mxu0 %v2871
      %2950 = vmatprep.subr.mxu0 0.0
      %2951 = vmatpush1.msra.mxu0 0.0
      %2952 = vmatprep.subr.mxu0 0.0
      %2953 = vmatpush1.msra.mxu0 0.0
      %2954 = vmatprep.subr.mxu0 0.0
      %2955 = vmatpush1.msra.mxu0 0.0
      %2956 = vmatprep.subr.mxu0 0.0
      %2957 = vmatpush1.msra.mxu0 0.0
      %2958 = vmatprep.subr.mxu0 0.0
      %2959 = vmatpush1.msra.mxu0 0.0
      %2960 = vmatprep.subr.mxu0 0.0
      %2961 = vmatpush1.msra.mxu0 0.0
      %2962 = vmatprep.subr.mxu0 0.0
      %2963 = vmatpush1.msra.mxu0 0.0
      %2964 = vmatprep.subr.mxu0 0.0
      %2965 = vmatpush1.msra.mxu0 0.0
      %2966 = vmatprep.subr.mxu0 0.0
      %2967 = vmatpush1.msra.mxu0 0.0
      %2968 = vmatprep.subr.mxu0 0.0
      %2969 = vmatpush1.msra.mxu0 0.0
      %2970 = vmatprep.subr.mxu0 0.0
      %2971 = vmatpush1.msra.mxu0 0.0
      %2972 = vmatprep.subr.mxu0 0.0
      %2973 = vmatpush1.msra.mxu0 0.0
      %2974 = vmatprep.subr.mxu0 0.0
      %2975 = vmatpush1.msra.mxu0 0.0
      %2976 = vmatprep.subr.mxu0 0.0
      %2977 = vmatpush1.msra.mxu0 0.0
      %2978 = vmatprep.subr.mxu0 0.0
      %2979 = vmatpush1.msra.mxu0 0.0
      %2980 = vmatprep.subr.mxu0 0.0
      %2981 = vmatpush1.msra.mxu0 0.0
      %2982 = vmatprep.subr.mxu0 0.0
      %2983 = vmatpush1.msra.mxu0 0.0
      %2984 = vmatprep.subr.mxu0 0.0
      %2985 = vmatpush1.msra.mxu0 0.0
      %2986 = vmatprep.subr.mxu0 0.0
      %2987 = vmatpush1.msra.mxu0 0.0
      %2988 = vmatprep.subr.mxu0 0.0
      %2989 = vmatpush1.msra.mxu0 0.0
      %2990 = vmatprep.subr.mxu0 0.0
      %2991 = vmatpush1.msra.mxu0 0.0
      %2992 = vmatprep.subr.mxu0 0.0
      %2993 = vmatpush1.msra.mxu0 0.0
      %2994 = vmatprep.subr.mxu0 0.0
      %2995 = vmatpush1.msra.mxu0 0.0
      %2996 = vmatprep.subr.mxu0 0.0
      %2997 = vmatpush1.msra.mxu0 0.0
      %2998 = vmatprep.subr.mxu0 0.0
      %2999 = vmatpush1.msra.mxu0 0.0
      %3000 = vmatprep.subr.mxu0 0.0
      %3001 = vmatpush1.msra.mxu0 0.0
      %3002 = vmatprep.subr.mxu0 0.0
      %3003 = vmatpush1.msra.mxu0 0.0
      %3004 = vmatprep.subr.mxu0 0.0
      %3005 = vmatpush1.msra.mxu0 0.0
      %3006 = vmatprep.subr.mxu0 0.0
      %3007 = vmatpush1.msra.mxu0 0.0
      %3008 = vmatprep.subr.mxu0 0.0
      %3009 = vmatpush1.msra.mxu0 0.0
      %3010 = vmatprep.subr.mxu0 0.0
      %3011 = vmatpush1.msra.mxu0 0.0
      %3012 = vmatprep.mubr.f32.mxu0 0.0
      %3013 = vmatmul.mubr.f32.gmra.mrb[0].mxu0 %v2875
      %v3014 = vpop.f32.mrb[0].mxu0
      %v3015 = vadd.f32 0.0, %v3014
      %v3016 = vpop.f32.mrb[0].mxu0
      %3017 = vdwg.mxu0
      %v3018 = vadd.f32 %v2860, %v2944
      %v3019 = vadd.f32 %v2861, %v2946
      %v3020 = vadd.f32 %v2862, %v3015
      %3021 = vrot.lane.b32.xlu0 %v1917, 96
      %v3022 = vpop.permute.xlu0 %3021
      %3023 = vrot.lane.b32.xlu0 %v1918, 96
      %v3024 = vpop.permute.xlu0 %3023
      %3025 = vrot.lane.b32.xlu0 %v1919, 96
      %v3026 = vpop.permute.xlu0 %3025
      %v3027 = vsel %vm1549, %v3024, %v3026
      %v3028 = vsel %vm1549, %v3022, %v3024
      %v3029 = vsel %vm1549, %v3026, %v3022
      %s3030 = scalar_lea.vmem %s3, 56
      %v3031 = vld [vmem:[%s3030] sm:$0xff]
      %v3033 = vsel %vm1942, %v3031, 0
      %3035 = vmatprep.subr.mxu0 %v3027
      %3036 = vmatpush1.msra.mxu0 %v3028
      %3037 = vmatprep.subr.mxu0 0.0
      %3038 = vmatpush1.msra.mxu0 0.0
      %3039 = vmatprep.subr.mxu0 0.0
      %3040 = vmatpush1.msra.mxu0 0.0
      %3041 = vmatprep.subr.mxu0 0.0
      %3042 = vmatpush1.msra.mxu0 0.0
      %3043 = vmatprep.subr.mxu0 0.0
      %3044 = vmatpush1.msra.mxu0 0.0
      %3045 = vmatprep.subr.mxu0 0.0
      %3046 = vmatpush1.msra.mxu0 0.0
      %3047 = vmatprep.subr.mxu0 0.0
      %3048 = vmatpush1.msra.mxu0 0.0
      %3049 = vmatprep.subr.mxu0 0.0
      %3050 = vmatpush1.msra.mxu0 0.0
      %3051 = vmatprep.subr.mxu0 0.0
      %3052 = vmatpush1.msra.mxu0 0.0
      %3053 = vmatprep.subr.mxu0 0.0
      %3054 = vmatpush1.msra.mxu0 0.0
      %3055 = vmatprep.subr.mxu0 0.0
      %3056 = vmatpush1.msra.mxu0 0.0
      %3057 = vmatprep.subr.mxu0 0.0
      %3058 = vmatpush1.msra.mxu0 0.0
      %3059 = vmatprep.subr.mxu0 0.0
      %3060 = vmatpush1.msra.mxu0 0.0
      %3061 = vmatprep.subr.mxu0 0.0
      %3062 = vmatpush1.msra.mxu0 0.0
      %3063 = vmatprep.subr.mxu0 0.0
      %3064 = vmatpush1.msra.mxu0 0.0
      %3065 = vmatprep.subr.mxu0 0.0
      %3066 = vmatpush1.msra.mxu0 0.0
      %3067 = vmatprep.subr.mxu0 0.0
      %3068 = vmatpush1.msra.mxu0 0.0
      %3069 = vmatprep.subr.mxu0 0.0
      %3070 = vmatpush1.msra.mxu0 0.0
      %3071 = vmatprep.subr.mxu0 0.0
      %3072 = vmatpush1.msra.mxu0 0.0
      %3073 = vmatprep.subr.mxu0 0.0
      %3074 = vmatpush1.msra.mxu0 0.0
      %3075 = vmatprep.subr.mxu0 0.0
      %3076 = vmatpush1.msra.mxu0 0.0
      %3077 = vmatprep.subr.mxu0 0.0
      %3078 = vmatpush1.msra.mxu0 0.0
      %3079 = vmatprep.subr.mxu0 0.0
      %3080 = vmatpush1.msra.mxu0 0.0
      %3081 = vmatprep.subr.mxu0 0.0
      %3082 = vmatpush1.msra.mxu0 0.0
      %3083 = vmatprep.subr.mxu0 0.0
      %3084 = vmatpush1.msra.mxu0 0.0
      %3085 = vmatprep.subr.mxu0 0.0
      %3086 = vmatpush1.msra.mxu0 0.0
      %3087 = vmatprep.subr.mxu0 0.0
      %3088 = vmatpush1.msra.mxu0 0.0
      %3089 = vmatprep.subr.mxu0 0.0
      %3090 = vmatpush1.msra.mxu0 0.0
      %3091 = vmatprep.subr.mxu0 0.0
      %3092 = vmatpush1.msra.mxu0 0.0
      %3093 = vmatprep.subr.mxu0 0.0
      %3094 = vmatpush1.msra.mxu0 0.0
      %3095 = vmatprep.subr.mxu0 0.0
      %3096 = vmatpush1.msra.mxu0 0.0
      %3097 = vmatprep.subr.mxu0 0.0
      %3098 = vmatpush1.msra.mxu0 0.0
      %3099 = vmatprep.mubr.f32.mxu0 0.0
      %3100 = vmatmul.mubr.f32.gmra.mrb[0].mxu0 %v3033
      %v3101 = vpop.f32.mrb[0].mxu0
      %v3102 = vadd.f32 0.0, %v3101
      %v3103 = vpop.f32.mrb[0].mxu0
      %v3104 = vadd.f32 0.0, %v3103
      %3105 = vdwg.mxu0
      %3106 = vmatprep.subr.mxu0 0.0
      %3107 = vmatpush1.msra.mxu0 %v3029
      %3108 = vmatprep.subr.mxu0 0.0
      %3109 = vmatpush1.msra.mxu0 0.0
      %3110 = vmatprep.subr.mxu0 0.0
      %3111 = vmatpush1.msra.mxu0 0.0
      %3112 = vmatprep.subr.mxu0 0.0
      %3113 = vmatpush1.msra.mxu0 0.0
      %3114 = vmatprep.subr.mxu0 0.0
      %3115 = vmatpush1.msra.mxu0 0.0
      %3116 = vmatprep.subr.mxu0 0.0
      %3117 = vmatpush1.msra.mxu0 0.0
      %3118 = vmatprep.subr.mxu0 0.0
      %3119 = vmatpush1.msra.mxu0 0.0
      %3120 = vmatprep.subr.mxu0 0.0
      %3121 = vmatpush1.msra.mxu0 0.0
      %3122 = vmatprep.subr.mxu0 0.0
      %3123 = vmatpush1.msra.mxu0 0.0
      %3124 = vmatprep.subr.mxu0 0.0
      %3125 = vmatpush1.msra.mxu0 0.0
      %3126 = vmatprep.subr.mxu0 0.0
      %3127 = vmatpush1.msra.mxu0 0.0
      %3128 = vmatprep.subr.mxu0 0.0
      %3129 = vmatpush1.msra.mxu0 0.0
      %3130 = vmatprep.subr.mxu0 0.0
      %3131 = vmatpush1.msra.mxu0 0.0
      %3132 = vmatprep.subr.mxu0 0.0
      %3133 = vmatpush1.msra.mxu0 0.0
      %3134 = vmatprep.subr.mxu0 0.0
      %3135 = vmatpush1.msra.mxu0 0.0
      %3136 = vmatprep.subr.mxu0 0.0
      %3137 = vmatpush1.msra.mxu0 0.0
      %3138 = vmatprep.subr.mxu0 0.0
      %3139 = vmatpush1.msra.mxu0 0.0
      %3140 = vmatprep.subr.mxu0 0.0
      %3141 = vmatpush1.msra.mxu0 0.0
      %3142 = vmatprep.subr.mxu0 0.0
      %3143 = vmatpush1.msra.mxu0 0.0
      %3144 = vmatprep.subr.mxu0 0.0
      %3145 = vmatpush1.msra.mxu0 0.0
      %3146 = vmatprep.subr.mxu0 0.0
      %3147 = vmatpush1.msra.mxu0 0.0
      %3148 = vmatprep.subr.mxu0 0.0
      %3149 = vmatpush1.msra.mxu0 0.0
      %3150 = vmatprep.subr.mxu0 0.0
      %3151 = vmatpush1.msra.mxu0 0.0
      %3152 = vmatprep.subr.mxu0 0.0
      %3153 = vmatpush1.msra.mxu0 0.0
      %3154 = vmatprep.subr.mxu0 0.0
      %3155 = vmatpush1.msra.mxu0 0.0
      %3156 = vmatprep.subr.mxu0 0.0
      %3157 = vmatpush1.msra.mxu0 0.0
      %3158 = vmatprep.subr.mxu0 0.0
      %3159 = vmatpush1.msra.mxu0 0.0
      %3160 = vmatprep.subr.mxu0 0.0
      %3161 = vmatpush1.msra.mxu0 0.0
      %3162 = vmatprep.subr.mxu0 0.0
      %3163 = vmatpush1.msra.mxu0 0.0
      %3164 = vmatprep.subr.mxu0 0.0
      %3165 = vmatpush1.msra.mxu0 0.0
      %3166 = vmatprep.subr.mxu0 0.0
      %3167 = vmatpush1.msra.mxu0 0.0
      %3168 = vmatprep.subr.mxu0 0.0
      %3169 = vmatpush1.msra.mxu0 0.0
      %3170 = vmatprep.mubr.f32.mxu0 0.0
      %3171 = vmatmul.mubr.f32.gmra.mrb[0].mxu0 %v3033
      %v3172 = vpop.f32.mrb[0].mxu0
      %v3173 = vadd.f32 0.0, %v3172
      %v3174 = vpop.f32.mrb[0].mxu0
      %3175 = vdwg.mxu0
      %v3176 = vadd.f32 %v3018, %v3102
      %v3177 = vadd.f32 %v3019, %v3104
      %v3178 = vadd.f32 %v3020, %v3173
      %3179 = vrot.lane.b32.xlu0 %v1927, 95
      %v3180 = vpop.permute.xlu0 %3179
      %3181 = vrot.lane.b32.xlu0 %v1928, 95
      %v3182 = vpop.permute.xlu0 %3181
      %3183 = vrot.lane.b32.xlu0 %v1929, 95
      %v3184 = vpop.permute.xlu0 %3183
      %v3185 = vsel %vm1717, %v3182, %v3184
      %v3186 = vsel %vm1717, %v3180, %v3182
      %v3187 = vsel %vm1717, %v3184, %v3180
      %s3188 = scalar_lea.vmem %s3, 64
      %v3189 = vld [vmem:[%s3188] sm:$0xff]
      %v3191 = vsel %vm1942, %v3189, 0
      %3193 = vmatprep.subr.mxu0 %v3185
      %3194 = vmatpush1.msra.mxu0 %v3186
      %3195 = vmatprep.subr.mxu0 0.0
      %3196 = vmatpush1.msra.mxu0 0.0
      %3197 = vmatprep.subr.mxu0 0.0
      %3198 = vmatpush1.msra.mxu0 0.0
      %3199 = vmatprep.subr.mxu0 0.0
      %3200 = vmatpush1.msra.mxu0 0.0
      %3201 = vmatprep.subr.mxu0 0.0
      %3202 = vmatpush1.msra.mxu0 0.0
      %3203 = vmatprep.subr.mxu0 0.0
      %3204 = vmatpush1.msra.mxu0 0.0
      %3205 = vmatprep.subr.mxu0 0.0
      %3206 = vmatpush1.msra.mxu0 0.0
      %3207 = vmatprep.subr.mxu0 0.0
      %3208 = vmatpush1.msra.mxu0 0.0
      %3209 = vmatprep.subr.mxu0 0.0
      %3210 = vmatpush1.msra.mxu0 0.0
      %3211 = vmatprep.subr.mxu0 0.0
      %3212 = vmatpush1.msra.mxu0 0.0
      %3213 = vmatprep.subr.mxu0 0.0
      %3214 = vmatpush1.msra.mxu0 0.0
      %3215 = vmatprep.subr.mxu0 0.0
      %3216 = vmatpush1.msra.mxu0 0.0
      %3217 = vmatprep.subr.mxu0 0.0
      %3218 = vmatpush1.msra.mxu0 0.0
      %3219 = vmatprep.subr.mxu0 0.0
      %3220 = vmatpush1.msra.mxu0 0.0
      %3221 = vmatprep.subr.mxu0 0.0
      %3222 = vmatpush1.msra.mxu0 0.0
      %3223 = vmatprep.subr.mxu0 0.0
      %3224 = vmatpush1.msra.mxu0 0.0
      %3225 = vmatprep.subr.mxu0 0.0
      %3226 = vmatpush1.msra.mxu0 0.0
      %3227 = vmatprep.subr.mxu0 0.0
      %3228 = vmatpush1.msra.mxu0 0.0
      %3229 = vmatprep.subr.mxu0 0.0
      %3230 = vmatpush1.msra.mxu0 0.0
      %3231 = vmatprep.subr.mxu0 0.0
      %3232 = vmatpush1.msra.mxu0 0.0
      %3233 = vmatprep.subr.mxu0 0.0
      %3234 = vmatpush1.msra.mxu0 0.0
      %3235 = vmatprep.subr.mxu0 0.0
      %3236 = vmatpush1.msra.mxu0 0.0
      %3237 = vmatprep.subr.mxu0 0.0
      %3238 = vmatpush1.msra.mxu0 0.0
      %3239 = vmatprep.subr.mxu0 0.0
      %3240 = vmatpush1.msra.mxu0 0.0
      %3241 = vmatprep.subr.mxu0 0.0
      %3242 = vmatpush1.msra.mxu0 0.0
      %3243 = vmatprep.subr.mxu0 0.0
      %3244 = vmatpush1.msra.mxu0 0.0
      %3245 = vmatprep.subr.mxu0 0.0
      %3246 = vmatpush1.msra.mxu0 0.0
      %3247 = vmatprep.subr.mxu0 0.0
      %3248 = vmatpush1.msra.mxu0 0.0
      %3249 = vmatprep.subr.mxu0 0.0
      %3250 = vmatpush1.msra.mxu0 0.0
      %3251 = vmatprep.subr.mxu0 0.0
      %3252 = vmatpush1.msra.mxu0 0.0
      %3253 = vmatprep.subr.mxu0 0.0
      %3254 = vmatpush1.msra.mxu0 0.0
      %3255 = vmatprep.subr.mxu0 0.0
      %3256 = vmatpush1.msra.mxu0 0.0
      %3257 = vmatprep.mubr.f32.mxu0 0.0
      %3258 = vmatmul.mubr.f32.gmra.mrb[0].mxu0 %v3191
      %v3259 = vpop.f32.mrb[0].mxu0
      %v3260 = vadd.f32 0.0, %v3259
      %v3261 = vpop.f32.mrb[0].mxu0
      %v3262 = vadd.f32 0.0, %v3261
      %3263 = vdwg.mxu0
      %3264 = vmatprep.subr.mxu0 0.0
      %3265 = vmatpush1.msra.mxu0 %v3187
      %3266 = vmatprep.subr.mxu0 0.0
      %3267 = vmatpush1.msra.mxu0 0.0
      %3268 = vmatprep.subr.mxu0 0.0
      %3269 = vmatpush1.msra.mxu0 0.0
      %3270 = vmatprep.subr.mxu0 0.0
      %3271 = vmatpush1.msra.mxu0 0.0
      %3272 = vmatprep.subr.mxu0 0.0
      %3273 = vmatpush1.msra.mxu0 0.0
      %3274 = vmatprep.subr.mxu0 0.0
      %3275 = vmatpush1.msra.mxu0 0.0
      %3276 = vmatprep.subr.mxu0 0.0
      %3277 = vmatpush1.msra.mxu0 0.0
      %3278 = vmatprep.subr.mxu0 0.0
      %3279 = vmatpush1.msra.mxu0 0.0
      %3280 = vmatprep.subr.mxu0 0.0
      %3281 = vmatpush1.msra.mxu0 0.0
      %3282 = vmatprep.subr.mxu0 0.0
      %3283 = vmatpush1.msra.mxu0 0.0
      %3284 = vmatprep.subr.mxu0 0.0
      %3285 = vmatpush1.msra.mxu0 0.0
      %3286 = vmatprep.subr.mxu0 0.0
      %3287 = vmatpush1.msra.mxu0 0.0
      %3288 = vmatprep.subr.mxu0 0.0
      %3289 = vmatpush1.msra.mxu0 0.0
      %3290 = vmatprep.subr.mxu0 0.0
      %3291 = vmatpush1.msra.mxu0 0.0
      %3292 = vmatprep.subr.mxu0 0.0
      %3293 = vmatpush1.msra.mxu0 0.0
      %3294 = vmatprep.subr.mxu0 0.0
      %3295 = vmatpush1.msra.mxu0 0.0
      %3296 = vmatprep.subr.mxu0 0.0
      %3297 = vmatpush1.msra.mxu0 0.0
      %3298 = vmatprep.subr.mxu0 0.0
      %3299 = vmatpush1.msra.mxu0 0.0
      %3300 = vmatprep.subr.mxu0 0.0
      %3301 = vmatpush1.msra.mxu0 0.0
      %3302 = vmatprep.subr.mxu0 0.0
      %3303 = vmatpush1.msra.mxu0 0.0
      %3304 = vmatprep.subr.mxu0 0.0
      %3305 = vmatpush1.msra.mxu0 0.0
      %3306 = vmatprep.subr.mxu0 0.0
      %3307 = vmatpush1.msra.mxu0 0.0
      %3308 = vmatprep.subr.mxu0 0.0
      %3309 = vmatpush1.msra.mxu0 0.0
      %3310 = vmatprep.subr.mxu0 0.0
      %3311 = vmatpush1.msra.mxu0 0.0
      %3312 = vmatprep.subr.mxu0 0.0
      %3313 = vmatpush1.msra.mxu0 0.0
      %3314 = vmatprep.subr.mxu0 0.0
      %3315 = vmatpush1.msra.mxu0 0.0
      %3316 = vmatprep.subr.mxu0 0.0
      %3317 = vmatpush1.msra.mxu0 0.0
      %3318 = vmatprep.subr.mxu0 0.0
      %3319 = vmatpush1.msra.mxu0 0.0
      %3320 = vmatprep.subr.mxu0 0.0
      %3321 = vmatpush1.msra.mxu0 0.0
      %3322 = vmatprep.subr.mxu0 0.0
      %3323 = vmatpush1.msra.mxu0 0.0
      %3324 = vmatprep.subr.mxu0 0.0
      %3325 = vmatpush1.msra.mxu0 0.0
      %3326 = vmatprep.subr.mxu0 0.0
      %3327 = vmatpush1.msra.mxu0 0.0
      %3328 = vmatprep.mubr.f32.mxu0 0.0
      %3329 = vmatmul.mubr.f32.gmra.mrb[0].mxu0 %v3191
      %v3330 = vpop.f32.mrb[0].mxu0
      %v3331 = vadd.f32 0.0, %v3330
      %v3332 = vpop.f32.mrb[0].mxu0
      %3333 = vdwg.mxu0
      %v3334 = vadd.f32 %v3176, %v3260
      %v3335 = vadd.f32 %v3177, %v3262
      %v3336 = vadd.f32 %v3178, %v3331
      %v3337 = vld [vmem:[%s4] sm:$0xff]
      %3339 = vset.pattern.permute.xlu0 0
      %3340 = vperm.xlu0 %3339, %v3337
      %v3341 = vpop.permute.xlu0 %3340
      %v3343 = vadd.f32 %v3334, %v3341
      %v3344 = vadd.f32 %v3335, %v3341
      %v3345 = vadd.f32 %v3336, %v3341
      %v3346 = vmax.f32 %v3343, 0.0
      %v3347 = vmax.f32 %v3344, 0.0
      %v3348 = vmax.f32 %v3345, 0.0
      %3349 = vrot.lane.b32.xlu0 %v3346, 127
      %v3350 = vpop.permute.xlu0 %3349
      %3351 = vrot.lane.b32.xlu0 %v3347, 127
      %v3352 = vpop.permute.xlu0 %3351
      %3353 = vrot.lane.b32.xlu0 %v3348, 127
      %v3354 = vpop.permute.xlu0 %3353
      %v3355 = vsel %vm708, %v3352, %v3354
      %v3356 = vsel %vm708, %v3350, %v3352
      %v3357 = vsel %vm708, %v3354, %v3350
      %v3358 = vmax.f32 %v3346, %v3356
      %v3359 = vmax.f32 %v3347, %v3355
      %v3360 = vmax.f32 %v3348, %v3357
      %3361 = vrot.lane.b32.xlu0 %v3358, 112
      %v3362 = vpop.permute.xlu0 %3361
      %3363 = vrot.lane.b32.xlu0 %v3359, 112
      %v3364 = vpop.permute.xlu0 %3363
      %3365 = vrot.lane.b32.xlu0 %v3360, 112
      %v3366 = vpop.permute.xlu0 %3365
      %v3367 = vsel %vm1045, %v3364, %v3366
      %v3368 = vsel %vm1045, %v3362, %v3364
      %v3369 = vsel %vm1045, %v3366, %v3362
      %v3370 = vmax.f32 %v3358, %v3368
      %v3371 = vmax.f32 %v3359, %v3367
      %v3372 = vmax.f32 %v3360, %v3369
      %v3373 = vld [vmem:[%s8] sm:$0xff]
      %v3374 = vld [vmem:[%s8 + $0x8] sm:$0xff]
      %v3375 = vld [vmem:[%s8 + $0x10] sm:$0xff]
      %v3376 = vld [vmem:[%s8 + $0x18] sm:$0xff]
      %v3377 = vld [vmem:[%s8 + $0x20] sm:$0xff]
      %v3378 = vld [vmem:[%s8 + $0x28] sm:$0xff]
      %v3379 = vld [vmem:[%s8 + $0x30] sm:$0xff]
      %v3380 = vld [vmem:[%s8 + $0x38] sm:$0xff]
      %v3381 = vld [vmem:[%s8 + $0x40] sm:$0xff]
      %v3382 = vld [vmem:[%s8 + $0x48] sm:$0xff]
      %v3383 = vld [vmem:[%s8 + $0x50] sm:$0xff]
      %v3384 = vld [vmem:[%s8 + $0x58] sm:$0xff]
      %v3385 = vld [vmem:[%s8 + $0x60] sm:$0xff]
      %v3386 = vld [vmem:[%s8 + $0x68] sm:$0xff]
      %v3387 = vld [vmem:[%s8 + $0x70] sm:$0xff]
      %v3388 = vld [vmem:[%s8 + $0x78] sm:$0xff]
      %v3389 = vld [vmem:[%s8 + $0x80] sm:$0xff]
      %v3390 = vld [vmem:[%s8 + $0x88] sm:$0xff]
      %v3391 = vld [vmem:[%s8 + $0x90] sm:$0xff]
      %v3392 = vld [vmem:[%s8 + $0x98] sm:$0xff]
      %v3393 = vld [vmem:[%s8 + $0xa0] sm:$0xff]
      %v3394 = vld [vmem:[%s8 + $0xa8] sm:$0xff]
      %v3395 = vld [vmem:[%s8 + $0xb0] sm:$0xff]
      %v3396 = vld [vmem:[%s8 + $0xb8] sm:$0xff]
      %v3397 = vld [vmem:[%s8 + $0xc0] sm:$0xff]
      %v3398 = vld [vmem:[%s8 + $0xc8] sm:$0xff]
      %v3399 = vld [vmem:[%s8 + $0xd0] sm:$0xff]
      %v3400 = vld [vmem:[%s8 + $0xd8] sm:$0xff]
      %v3401 = vld [vmem:[%s8 + $0xe0] sm:$0xff]
      %v3402 = vld [vmem:[%s8 + $0xe8] sm:$0xff]
      %v3403 = vld [vmem:[%s8 + $0xf0] sm:$0xff]
      %v3404 = vld [vmem:[%s8 + $0xf8] sm:$0xff]
      %v3405 = vld [vmem:[%s8 + $0x100] sm:$0xff]
      %v3406 = vld [vmem:[%s8 + $0x108] sm:$0xff]
      %v3407 = vld [vmem:[%s8 + $0x110] sm:$0xff]
      %v3408 = vld [vmem:[%s8 + $0x118] sm:$0xff]
      %v3409 = vld [vmem:[%s8 + $0x120] sm:$0xff]
      %v3410 = vld [vmem:[%s8 + $0x128] sm:$0xff]
      %v3411 = vld [vmem:[%s8 + $0x130] sm:$0xff]
      %v3412 = vld [vmem:[%s8 + $0x138] sm:$0xff]
      %v3413 = vld [vmem:[%s8 + $0x140] sm:$0xff]
      %v3414 = vld [vmem:[%s8 + $0x148] sm:$0xff]
      %v3415 = vld [vmem:[%s8 + $0x150] sm:$0xff]
      %v3416 = vld [vmem:[%s8 + $0x158] sm:$0xff]
      %v3417 = vld [vmem:[%s8 + $0x160] sm:$0xff]
      %v3418 = vld [vmem:[%s8 + $0x168] sm:$0xff]
      %v3419 = vld [vmem:[%s8 + $0x170] sm:$0xff]
      %v3420 = vld [vmem:[%s8 + $0x178] sm:$0xff]
      %3421 = vmatprep.subr.mxu0 0.0
      %3422 = vmatpush1.msra.mxu0 %v3373
      %3423 = vmatprep.subr.mxu0 0.0
      %3424 = vmatpush1.msra.mxu0 %v3374
      %3425 = vmatprep.subr.mxu0 0.0
      %3426 = vmatpush1.msra.mxu0 %v3375
      %3427 = vmatprep.subr.mxu0 0.0
      %3428 = vmatpush1.msra.mxu0 %v3376
      %3429 = vmatprep.subr.mxu0 0.0
      %3430 = vmatpush1.msra.mxu0 %v3377
      %3431 = vmatprep.subr.mxu0 0.0
      %3432 = vmatpush1.msra.mxu0 %v3378
      %3433 = vmatprep.subr.mxu0 0.0
      %3434 = vmatpush1.msra.mxu0 %v3379
      %3435 = vmatprep.subr.mxu0 0.0
      %3436 = vmatpush1.msra.mxu0 %v3380
      %3437 = vmatprep.subr.mxu0 0.0
      %3438 = vmatpush1.msra.mxu0 %v3381
      %3439 = vmatprep.subr.mxu0 0.0
      %3440 = vmatpush1.msra.mxu0 %v3382
      %3441 = vmatprep.subr.mxu0 0.0
      %3442 = vmatpush1.msra.mxu0 %v3383
      %3443 = vmatprep.subr.mxu0 0.0
      %3444 = vmatpush1.msra.mxu0 %v3384
      %3445 = vmatprep.subr.mxu0 0.0
      %3446 = vmatpush1.msra.mxu0 %v3385
      %3447 = vmatprep.subr.mxu0 0.0
      %3448 = vmatpush1.msra.mxu0 %v3386
      %3449 = vmatprep.subr.mxu0 0.0
      %3450 = vmatpush1.msra.mxu0 %v3387
      %3451 = vmatprep.subr.mxu0 0.0
      %3452 = vmatpush1.msra.mxu0 %v3388
      %3453 = vmatprep.subr.mxu0 0.0
      %3454 = vmatpush1.msra.mxu0 %v3389
      %3455 = vmatprep.subr.mxu0 0.0
      %3456 = vmatpush1.msra.mxu0 %v3390
      %3457 = vmatprep.subr.mxu0 0.0
      %3458 = vmatpush1.msra.mxu0 %v3391
      %3459 = vmatprep.subr.mxu0 0.0
      %3460 = vmatpush1.msra.mxu0 %v3392
      %3461 = vmatprep.subr.mxu0 0.0
      %3462 = vmatpush1.msra.mxu0 %v3393
      %3463 = vmatprep.subr.mxu0 0.0
      %3464 = vmatpush1.msra.mxu0 %v3394
      %3465 = vmatprep.subr.mxu0 0.0
      %3466 = vmatpush1.msra.mxu0 %v3395
      %3467 = vmatprep.subr.mxu0 0.0
      %3468 = vmatpush1.msra.mxu0 %v3396
      %3469 = vmatprep.subr.mxu0 0.0
      %3470 = vmatpush1.msra.mxu0 %v3397
      %3471 = vmatprep.subr.mxu0 0.0
      %3472 = vmatpush1.msra.mxu0 %v3398
      %3473 = vmatprep.subr.mxu0 0.0
      %3474 = vmatpush1.msra.mxu0 %v3399
      %3475 = vmatprep.subr.mxu0 0.0
      %3476 = vmatpush1.msra.mxu0 %v3400
      %3477 = vmatprep.subr.mxu0 0.0
      %3478 = vmatpush1.msra.mxu0 %v3401
      %3479 = vmatprep.subr.mxu0 0.0
      %3480 = vmatpush1.msra.mxu0 %v3402
      %3481 = vmatprep.subr.mxu0 0.0
      %3482 = vmatpush1.msra.mxu0 %v3403
      %3483 = vmatprep.subr.mxu0 0.0
      %3484 = vmatpush1.msra.mxu0 %v3404
      %3485 = vmatprep.mubr.f32.mxu0 %v3371
      %3486 = vmatmul.mubr.f32.gmra.mrb[0].mxu0 %v3370
      %v3487 = vpop.f32.mrb[0].mxu0
      %v3488 = vadd.f32 0.0, %v3487
      %v3489 = vpop.f32.mrb[0].mxu0
      %3490 = vdwg.mxu0
      %3491 = vmatprep.subr.mxu0 0.0
      %3492 = vmatpush1.msra.mxu0 %v3405
      %3493 = vmatprep.subr.mxu0 0.0
      %3494 = vmatpush1.msra.mxu0 %v3406
      %3495 = vmatprep.subr.mxu0 0.0
      %3496 = vmatpush1.msra.mxu0 %v3407
      %3497 = vmatprep.subr.mxu0 0.0
      %3498 = vmatpush1.msra.mxu0 %v3408
      %3499 = vmatprep.subr.mxu0 0.0
      %3500 = vmatpush1.msra.mxu0 %v3409
      %3501 = vmatprep.subr.mxu0 0.0
      %3502 = vmatpush1.msra.mxu0 %v3410
      %3503 = vmatprep.subr.mxu0 0.0
      %3504 = vmatpush1.msra.mxu0 %v3411
      %3505 = vmatprep.subr.mxu0 0.0
      %3506 = vmatpush1.msra.mxu0 %v3412
      %3507 = vmatprep.subr.mxu0 0.0
      %3508 = vmatpush1.msra.mxu0 %v3413
      %3509 = vmatprep.subr.mxu0 0.0
      %3510 = vmatpush1.msra.mxu0 %v3414
      %3511 = vmatprep.subr.mxu0 0.0
      %3512 = vmatpush1.msra.mxu0 %v3415
      %3513 = vmatprep.subr.mxu0 0.0
      %3514 = vmatpush1.msra.mxu0 %v3416
      %3515 = vmatprep.subr.mxu0 0.0
      %3516 = vmatpush1.msra.mxu0 %v3417
      %3517 = vmatprep.subr.mxu0 0.0
      %3518 = vmatpush1.msra.mxu0 %v3418
      %3519 = vmatprep.subr.mxu0 0.0
      %3520 = vmatpush1.msra.mxu0 %v3419
      %3521 = vmatprep.subr.mxu0 0.0
      %3522 = vmatpush1.msra.mxu0 %v3420
      %3523 = vmatprep.subr.mxu0 0.0
      %3524 = vmatpush1.msra.mxu0 0.0
      %3525 = vmatprep.subr.mxu0 0.0
      %3526 = vmatpush1.msra.mxu0 0.0
      %3527 = vmatprep.subr.mxu0 0.0
      %3528 = vmatpush1.msra.mxu0 0.0
      %3529 = vmatprep.subr.mxu0 0.0
      %3530 = vmatpush1.msra.mxu0 0.0
      %3531 = vmatprep.subr.mxu0 0.0
      %3532 = vmatpush1.msra.mxu0 0.0
      %3533 = vmatprep.subr.mxu0 0.0
      %3534 = vmatpush1.msra.mxu0 0.0
      %3535 = vmatprep.subr.mxu0 0.0
      %3536 = vmatpush1.msra.mxu0 0.0
      %3537 = vmatprep.subr.mxu0 0.0
      %3538 = vmatpush1.msra.mxu0 0.0
      %3539 = vmatprep.subr.mxu0 0.0
      %3540 = vmatpush1.msra.mxu0 0.0
      %3541 = vmatprep.subr.mxu0 0.0
      %3542 = vmatpush1.msra.mxu0 0.0
      %3543 = vmatprep.subr.mxu0 0.0
      %3544 = vmatpush1.msra.mxu0 0.0
      %3545 = vmatprep.subr.mxu0 0.0
      %3546 = vmatpush1.msra.mxu0 0.0
      %3547 = vmatprep.subr.mxu0 0.0
      %3548 = vmatpush1.msra.mxu0 0.0
      %3549 = vmatprep.subr.mxu0 0.0
      %3550 = vmatpush1.msra.mxu0 0.0
      %3551 = vmatprep.subr.mxu0 0.0
      %3552 = vmatpush1.msra.mxu0 0.0
      %3553 = vmatprep.subr.mxu0 0.0
      %3554 = vmatpush1.msra.mxu0 0.0
      %3555 = vmatprep.mubr.f32.mxu0 0.0
      %3556 = vmatmul.mubr.f32.gmra.mrb[0].mxu0 %v3372
      %v3557 = vpop.f32.mrb[0].mxu0
      %v3558 = vadd.f32 %v3488, %v3557
      %v3559 = vpop.f32.mrb[0].mxu0
      %3560 = vdwg.mxu0
      %vm3561 = vcmask 523264
      %3562 = vst.msk [vmem:[%s330] sm:$0xff] %vm3561, %v3558
      %p3563 = scmp.lt.s32.totalorder %s20, 1
      %s3564 = scalar_select %p3563, %s20, 1
      %s3565 = smul.addr %s3564, 8
      %s3566 = scalar_lea.vmem %s9, %s3565
      // Predicated region
      $region57: #{encoder_forward.1} parent=55 // pred_check
        %p3567 = pneg %p232
      $region58: #{encoder_forward.1} parent=55 // pred_check_branch
        %3569 = sbr.rel (%p3567) target = $region60
      $region59: #{encoder_forward.1} parent=55 // pred_region
        _
      $region60: #{encoder_forward.1} parent=55 // pred_fallthru
        _
    $region56: #{encoder_forward.1} parent=5 // pred_fallthru
      _
    %p3570 = scmp.le.s32.totalorder 2, %s15
    // Predicated region
    $region61: #{encoder_forward.1} parent=5 // pred_check
      %p3571 = pneg %p3570
    $region62: #{encoder_forward.1} parent=5 // pred_check_branch
      %3573 = sbr.rel (%p3571) target = $region64
    $region63: #{encoder_forward.1} parent=5 // pred_region
      %s3574 = ssub.s32 %s15, 2
      // Predicated region
      $region65: #{encoder_forward.1} parent=63 // pred_check
        %p3575 = pneg %p238
      $region66: #{encoder_forward.1} parent=63 // pred_check_branch
        %3577 = sbr.rel (%p3575) target = $region68
      $region67: #{encoder_forward.1} parent=63 // pred_region
        %p3578 = scmp.lt.s32.totalorder %s21, 1
        %s3579 = scalar_select %p3578, %s21, 1
        %s3580 = smul.addr %s3579, 8
        %s3581 = scalar_lea.vmem %s9, %s3580
      $region68: #{encoder_forward.1} parent=63 // pred_fallthru
        _
    $region64: #{encoder_forward.1} parent=5 // pred_fallthru
      _
  $region6: #{encoder_forward.1} parent=0 // loop_footer
    %s19 = sadd.s32 1, %s15
  $region7: #{encoder_forward.1} parent=0 // loop_footer_branch
    %14 = sbr.rel target = $region3
  $region8: #{encoder_forward.1} parent=0 // loop_exit
    _

</llo_original>
